<compile_context>
chip_gen: v7x
topology: tpu7x:2x2x1
jax: 0.10.0
libtpu: 0.0.40
codegen_flags: <defaults>
</compile_context>

<pallas_src>
import functools

import jax
import jax.numpy as jnp
from jax.experimental import pallas as pl
from jax.experimental.pallas import tpu as pltpu


# ----------------------------- kernel helpers -------------------------------

def _layernorm(x, g, b, eps=1e-5):
    mu = jnp.mean(x, axis=-1, keepdims=True)
    var = jnp.mean(jnp.square(x - mu), axis=-1, keepdims=True)
    return (x - mu) * jax.lax.rsqrt(var + eps) * g + b


# ------------------------------ fused Pallas kernel ------------------------------

def _fused_forward_kernel(
    x_ref,                                   # (1, S, D) embedded tokens (f32)
    ln1_g_ref, ln1_b_ref,                    # (1, 1, D) f32 (this layer)
    wq_ref, wk_ref, wv_ref,                  # (1, D, I) bf16
    wo_ref,                                  # (1, I, D) bf16
    ln2_g_ref, ln2_b_ref,                    # (1, 1, D) f32
    w1_ref, b1_ref,                          # (1, D, F) bf16, (1, 1, F) f32
    w2_ref, b2_ref,                          # (1, F, D) bf16, (1, 1, D) f32
    lnf_g_ref, lnf_b_ref,                    # (1, D) f32
    wl_ref,                                  # (D, V) bf16
    wg_ref,                                  # (V, M) bf16  gate Linear weight (input-major)
    gb_lin_ref, gb_ref,                      # (1, M), (1, M) f32
    o_ref,                                   # (1, S, S*V) f32 (lane-dense, flattened)
    h_ref,                                   # VMEM scratch: (S, D) f32 residual stream
    *, heads, dim_head, num_models):
    l = pl.program_id(1)
    S = x_ref.shape[1]
    V = wl_ref.shape[1]
    scale = dim_head ** -0.5

    # ---- init residual stream at the first layer ----
    @pl.when(l == 0)
    def _():
        h_ref[...] = x_ref[0].astype(jnp.float32)

    h = h_ref[...]                                          # (S, D) f32

    # additive causal bias: one add per layer instead of a per-layer select
    rows = jax.lax.broadcasted_iota(jnp.int32, (S, S), 0)
    cols = jax.lax.broadcasted_iota(jnp.int32, (S, S), 1)
    mask_bias = jnp.where(rows >= cols, 0.0, -1e30).astype(jnp.float32)[None]

    # ---- pre-norm causal self-attention + residual (all heads batched) ----
    xn = _layernorm(h, ln1_g_ref[0], ln1_b_ref[0])
    xb = xn.astype(jnp.bfloat16)                            # bf16 MXU operands, f32 acc
    q = jnp.dot(xb, wq_ref[0], preferred_element_type=jnp.float32) * scale
    k = jnp.dot(xb, wk_ref[0], preferred_element_type=jnp.float32)
    v = jnp.dot(xb, wv_ref[0], preferred_element_type=jnp.float32)

    # head split via reshape (no lane-slice stack/concat)
    qh = q.reshape(S, heads, dim_head).astype(jnp.bfloat16)
    kh = k.reshape(S, heads, dim_head).astype(jnp.bfloat16)
    vh = v.reshape(S, heads, dim_head).astype(jnp.bfloat16)

    s = jnp.einsum("qhd,khd->hqk", qh, kh,
                   preferred_element_type=jnp.float32)      # (H, S, S)
    s = s + mask_bias
    s = s - jnp.max(s, axis=-1, keepdims=True)
    p = jnp.exp(s)
    p = p * pl.reciprocal(jnp.sum(p, axis=-1, keepdims=True), approx=True)

    oh = jnp.einsum("hqk,khd->qhd", p.astype(jnp.bfloat16), vh,
                    preferred_element_type=jnp.float32)     # (S, H, dh)
    o_cat = oh.reshape(S, heads * dim_head)                 # (S, I)
    attn = jnp.dot(o_cat.astype(jnp.bfloat16), wo_ref[0],
                   preferred_element_type=jnp.float32)
    h = h + attn

    # ---- pre-norm feed-forward (D -> 4D -> D, GELU) + residual ----
    xn = _layernorm(h, ln2_g_ref[0], ln2_b_ref[0])
    u = jnp.dot(xn.astype(jnp.bfloat16), w1_ref[0],
                preferred_element_type=jnp.float32) + b1_ref[0]
    # TODO(synk): PyTorch nn.GELU defaults to exact erf GELU; tanh approximation here.
    u = jax.nn.gelu(u, approximate=True)
    ff = jnp.dot(u.astype(jnp.bfloat16), w2_ref[0],
                 preferred_element_type=jnp.float32) + b2_ref[0]
    h = h + ff
    h_ref[...] = h

    # ---- finalize at the last layer: final norm, vocab head, gate, weighted sum ----
    @pl.when(l == pl.num_programs(1) - 1)
    def _():
        xn_f = _layernorm(h, lnf_g_ref[...], lnf_b_ref[...])
        logits = jnp.dot(xn_f.astype(jnp.bfloat16), wl_ref[...],
                         preferred_element_type=jnp.float32)        # (S, V)

        # gate: computed ONCE (shared-weight experts -> identical logits)
        g = jnp.dot(logits.astype(jnp.bfloat16), wg_ref[...],
                    preferred_element_type=jnp.float32)             # (S, M)
        g = g + gb_lin_ref[...] + gb_ref[...]
        g = g - jnp.max(g, axis=-1, keepdims=True)
        e = jnp.exp(g)
        g = e / jnp.sum(e, axis=-1, keepdims=True)                  # exact softmax, f32

        # torch.sum(outputs * gate.unsqueeze(-1), dim=1) with M identical experts:
        #   out[c, d, e] = M * gate[c, d] * logits[d, e]   (requires S == M == V)
        out = num_models * (g[:, :, None] * logits[None, :, :])     # (S, S, V)
        o_ref[0] = out.reshape(S, S * V).astype(o_ref.dtype)        # lane-dense store


# ----------------------------- pallas_call glue ------------------------------

def hivemind_swarm_forward(x_tokens, params, *, depth, heads, dim_head, num_models):
    B, S = x_tokens.shape
    D = params["tok_emb"].shape[1]
    V = params["w_logits"].shape[1]
    # The reference gate Linear and the final broadcast are only well-defined here:
    assert B == 1 and S == num_models == V, \
        "PyTorch reference requires batch==1 and seq == num_models == num_tokens"

    # token + positional embedding (gather = plain-JAX glue; everything else fused)
    h0 = (params["tok_emb"][x_tokens]
          + params["pos_emb"][:S][None, :, :]).astype(jnp.float32)

    L = params["layers"]
    bf16 = jnp.bfloat16
    # pre-cast MXU weights once (halves weight DMA bytes; no per-layer casts in-kernel)
    wq, wk, wv, wo = (L["wq"].astype(bf16), L["wk"].astype(bf16),
                      L["wv"].astype(bf16), L["wo"].astype(bf16))
    w1, w2 = L["w1"].astype(bf16), L["w2"].astype(bf16)
    wl = params["w_logits"].astype(bf16)
    wg_t = params["gate_w"].T.astype(bf16)    # PyTorch (out,in) -> (in,out) for x @ W

    args = (h0,
            L["ln1_g"], L["ln1_b"], wq, wk, wv, wo,
            L["ln2_g"], L["ln2_b"], w1, L["b1"], w2, L["b2"],
            params["lnf_g"], params["lnf_b"], wl,
            wg_t, params["gate_lin_b"], params["gate_bias"])

    def per_layer(a):     # (depth, ...) -> one layer block per depth grid step
        return pl.BlockSpec((1,) + a.shape[1:],
                            lambda b, l, _nd=a.ndim: (l,) + (0,) * (_nd - 1))

    def resident(a):      # whole array, constant block index -> VMEM-resident
        return pl.BlockSpec(a.shape, lambda b, l, _nd=a.ndim: (0,) * _nd)

    in_specs = ([pl.BlockSpec((1, S, D), lambda b, l: (b, 0, 0))]   # embedded tokens
                + [per_layer(a) for a in args[1:13]]                # per-layer weights
                + [resident(a) for a in args[13:]])                 # head / gate weights

    out_specs = pl.BlockSpec((1, S, S * V), lambda b, l: (b, 0, 0))

    total_bytes = (sum(int(a.size) * a.dtype.itemsize for a in args)
                   + B * S * S * V * 4)
    vmem_limit = int(min(max(4 * total_bytes, 32 * 1024 * 1024), 64 * 1024 * 1024))

    inner = heads * dim_head
    ff_inner = L["w1"].shape[-1]
    flops = depth * (6 * S * D * inner + 4 * heads * S * S * dim_head
                     + 2 * S * inner * D + 4 * S * D * ff_inner) \
            + 2 * S * D * V + 2 * S * V * num_models + 2 * S * S * V
    trans = depth * (heads * S * S + S * ff_inner) + S * num_models
    cost = pl.CostEstimate(flops=int(B * flops), transcendentals=int(B * trans),
                           bytes_accessed=int(total_bytes))

    kernel = functools.partial(_fused_forward_kernel, heads=heads,
                               dim_head=dim_head, num_models=num_models)

    out_flat = pl.pallas_call(
        kernel,
        out_shape=jax.ShapeDtypeStruct((B, S, S * V), jnp.float32),
        grid=(B, depth),                       # depth last ("arbitrary" reduction-style axis)
        in_specs=in_specs,
        out_specs=out_specs,
        scratch_shapes=[pltpu.VMEM((S, D), jnp.float32)],   # persistent residual stream
        compiler_params=pltpu.CompilerParams(
            dimension_semantics=("parallel", "arbitrary"),
            vmem_limit_bytes=vmem_limit),
        cost_estimate=cost,
    )(*args)

    # (B, S, S*V) lane-dense store -> (B, num_models, S, num_tokens)
    return out_flat.reshape(B, S, S, V)


# ------------------------------ parameter init -------------------------------

def init_params(key, *, dim, depth, heads, dim_head, num_tokens, max_seq_len,
                num_models, ff_mult=4):
    inner = heads * dim_head
    ff_inner = dim * ff_mult
    keys = jax.random.split(key, 10)

    def init(k, shape, scale=0.02):
        return (scale * jax.random.normal(k, shape)).astype(jnp.float32)

    return {
        "tok_emb": init(keys[0], (num_tokens, dim)),
        "pos_emb": init(keys[1], (max_seq_len, dim)),
        "lnf_g": jnp.ones((1, dim), jnp.float32),
        "lnf_b": jnp.zeros((1, dim), jnp.float32),
        "w_logits": init(keys[2], (dim, num_tokens)),
        "gate_w": init(keys[3], (num_models, num_models)),     # PyTorch (out, in)
        "gate_lin_b": jnp.zeros((1, num_models), jnp.float32),
        "gate_bias": jnp.zeros((1, num_models), jnp.float32),  # nn.Parameter(zeros)
        "layers": {                                            # stacked over depth
            "ln1_g": jnp.ones((depth, 1, dim), jnp.float32),
            "ln1_b": jnp.zeros((depth, 1, dim), jnp.float32),
            "wq": init(keys[4], (depth, dim, inner)),
            "wk": init(keys[5], (depth, dim, inner)),
            "wv": init(keys[6], (depth, dim, inner)),
            "wo": init(keys[7], (depth, inner, dim)),
            "ln2_g": jnp.ones((depth, 1, dim), jnp.float32),
            "ln2_b": jnp.zeros((depth, 1, dim), jnp.float32),
            "w1": init(keys[8], (depth, dim, ff_inner)),
            "b1": jnp.zeros((depth, 1, ff_inner), jnp.float32),
            "w2": init(keys[9], (depth, ff_inner, dim)),
            "b2": jnp.zeros((depth, 1, dim), jnp.float32),
        },
    }


# ----------------------------------- main ------------------------------------

if __name__ == "__main__":
    dim, depth, heads, dim_head = 32, 2, 2, 16
    num_models = 4
    num_tokens = 4      # must equal num_models for the reference gate Linear to apply
    max_seq_len = 8
    B, S = 1, 4         # S must equal num_models (with B==1) for the reference
                        # broadcast in the final weighted sum to be valid in PyTorch

    key = jax.random.PRNGKey(0)
    pkey, xkey = jax.random.split(key)
    params = init_params(pkey, dim=dim, depth=depth, heads=heads, dim_head=dim_head,
                         num_tokens=num_tokens, max_seq_len=max_seq_len,
                         num_models=num_models)
    x = jax.random.randint(xkey, (B, S), 0, num_tokens, dtype=jnp.int32)

    fwd = jax.jit(functools.partial(hivemind_swarm_forward, depth=depth, heads=heads,
                                    dim_head=dim_head, num_models=num_models))
    y = fwd(x, params)
    jax.block_until_ready(y)
    assert y.shape == (B, num_models, S, num_tokens)
    assert bool(jnp.all(jnp.isfinite(y)))
    print("KERNEL_OK")
</pallas_src>

<mosaic_0001>
module attributes {stable_mosaic.version = 11 : i64} {
  func.func @_fused_forward_kernel(%arg0: i32, %arg1: i32, %arg2: memref<1x4x32xf32, #tpu.memory_space<vmem>>, %arg3: memref<1x1x32xf32, #tpu.memory_space<vmem>>, %arg4: memref<1x1x32xf32, #tpu.memory_space<vmem>>, %arg5: memref<1x32x32xbf16, #tpu.memory_space<vmem>>, %arg6: memref<1x32x32xbf16, #tpu.memory_space<vmem>>, %arg7: memref<1x32x32xbf16, #tpu.memory_space<vmem>>, %arg8: memref<1x32x32xbf16, #tpu.memory_space<vmem>>, %arg9: memref<1x1x32xf32, #tpu.memory_space<vmem>>, %arg10: memref<1x1x32xf32, #tpu.memory_space<vmem>>, %arg11: memref<1x32x128xbf16, #tpu.memory_space<vmem>>, %arg12: memref<1x1x128xf32, #tpu.memory_space<vmem>>, %arg13: memref<1x128x32xbf16, #tpu.memory_space<vmem>>, %arg14: memref<1x1x32xf32, #tpu.memory_space<vmem>>, %arg15: memref<1x32xf32, #tpu.memory_space<vmem>>, %arg16: memref<1x32xf32, #tpu.memory_space<vmem>>, %arg17: memref<32x4xbf16, #tpu.memory_space<vmem>>, %arg18: memref<4x4xbf16, #tpu.memory_space<vmem>>, %arg19: memref<1x4xf32, #tpu.memory_space<vmem>>, %arg20: memref<1x4xf32, #tpu.memory_space<vmem>>, %arg21: memref<1x4x16xf32, #tpu.memory_space<vmem>>, %arg22: memref<4x32xf32, #tpu.memory_space<vmem>>) attributes {dimension_semantics = [#tpu.dimension_semantics<parallel>, #tpu.dimension_semantics<arbitrary>], iteration_bounds = array<i64: 1, 2>, scalar_prefetch = 0 : i64, scratch_operands = 1 : i64, tpu.core_type = #tpu.core_type<tc>, window_params = [{transform_indices = @transform_0, window_bounds = array<i64: 1, 4, 32>}, {transform_indices = @transform_1, window_bounds = array<i64: 1, 1, 32>}, {transform_indices = @transform_2, window_bounds = array<i64: 1, 1, 32>}, {transform_indices = @transform_3, window_bounds = array<i64: 1, 32, 32>}, {transform_indices = @transform_4, window_bounds = array<i64: 1, 32, 32>}, {transform_indices = @transform_5, window_bounds = array<i64: 1, 32, 32>}, {transform_indices = @transform_6, window_bounds = array<i64: 1, 32, 32>}, {transform_indices = @transform_7, window_bounds = array<i64: 1, 1, 32>}, {transform_indices = @transform_8, window_bounds = array<i64: 1, 1, 32>}, {transform_indices = @transform_9, window_bounds = array<i64: 1, 32, 128>}, {transform_indices = @transform_10, window_bounds = array<i64: 1, 1, 128>}, {transform_indices = @transform_11, window_bounds = array<i64: 1, 128, 32>}, {transform_indices = @transform_12, window_bounds = array<i64: 1, 1, 32>}, {pipeline_mode = #tpu.pipeline_mode<synchronous>, transform_indices = @transform_13, window_bounds = array<i64: 1, 32>}, {pipeline_mode = #tpu.pipeline_mode<synchronous>, transform_indices = @transform_14, window_bounds = array<i64: 1, 32>}, {pipeline_mode = #tpu.pipeline_mode<synchronous>, transform_indices = @transform_15, window_bounds = array<i64: 32, 4>}, {pipeline_mode = #tpu.pipeline_mode<synchronous>, transform_indices = @transform_16, window_bounds = array<i64: 4, 4>}, {pipeline_mode = #tpu.pipeline_mode<synchronous>, transform_indices = @transform_17, window_bounds = array<i64: 1, 4>}, {pipeline_mode = #tpu.pipeline_mode<synchronous>, transform_indices = @transform_18, window_bounds = array<i64: 1, 4>}, {transform_indices = @transform_19, window_bounds = array<i64: 1, 4, 16>}]} {
    %c0_i32 = arith.constant 0 : i32
    %0 = arith.cmpi eq, %arg1, %c0_i32 : i32
    %1 = arith.extui %0 : i1 to i32
    %c0_i32_0 = arith.constant 0 : i32
    %2 = arith.cmpi ne, %1, %c0_i32_0 : i32
    scf.if %2 {
      %c0_67 = arith.constant 0 : index
      %c0_68 = arith.constant 0 : index
      %c0_69 = arith.constant 0 : index
      %137 = vector.load %arg2[%c0_67, %c0_68, %c0_69] : memref<1x4x32xf32, #tpu.memory_space<vmem>>, vector<1x4x32xf32>
      %138 = vector.shape_cast %137 : vector<1x4x32xf32> to vector<4x32xf32>
      %c0_70 = arith.constant 0 : index
      %c0_71 = arith.constant 0 : index
      %139 = vector.load %arg22[%c0_70, %c0_71] : memref<4x32xf32, #tpu.memory_space<vmem>>, vector<4x32xf32>
      tpu.vector_store %arg22[%c0_70, %c0_71], %138 {strides = array<i32>} : memref<4x32xf32, #tpu.memory_space<vmem>>, vector<4x32xf32>,
    } else {
    }
    %c0 = arith.constant 0 : index
    %c0_1 = arith.constant 0 : index
    %3 = vector.load %arg22[%c0, %c0_1] : memref<4x32xf32, #tpu.memory_space<vmem>>, vector<4x32xf32>
    %4 = tpu.iota {dimensions = array<i32: 0>} : vector<4x4xi32>
    %5 = tpu.iota {dimensions = array<i32: 1>} : vector<4x4xi32>
    %6 = arith.cmpi sge, %4, %5 : vector<4x4xi32>
    %cst = arith.constant 0.000000e+00 : f32
    %cst_2 = arith.constant -1.000000e+30 : f32
    %7 = vector.broadcast %cst : f32 to vector<4x4xf32>
    %8 = vector.broadcast %cst_2 : f32 to vector<4x4xf32>
    %9 = arith.select %6, %7, %8 : vector<4x4xi1>, vector<4x4xf32>
    %10 = vector.shape_cast %9 : vector<4x4xf32> to vector<1x4x4xf32>
    %c0_3 = arith.constant 0 : index
    %c0_4 = arith.constant 0 : index
    %c0_5 = arith.constant 0 : index
    %11 = vector.load %arg3[%c0_3, %c0_4, %c0_5] : memref<1x1x32xf32, #tpu.memory_space<vmem>>, vector<1x1x32xf32>
    %12 = vector.shape_cast %11 : vector<1x1x32xf32> to vector<1x32xf32>
    %c0_6 = arith.constant 0 : index
    %c0_7 = arith.constant 0 : index
    %c0_8 = arith.constant 0 : index
    %13 = vector.load %arg4[%c0_6, %c0_7, %c0_8] : memref<1x1x32xf32, #tpu.memory_space<vmem>>, vector<1x1x32xf32>
    %14 = vector.shape_cast %13 : vector<1x1x32xf32> to vector<1x32xf32>
    %cst_9 = arith.constant dense<0.000000e+00> : vector<4xf32>
    %15 = vector.multi_reduction <add>, %3, %cst_9 [1] : vector<4x32xf32> to vector<4xf32>
    %16 = vector.shape_cast %15 : vector<4xf32> to vector<4x1xf32>
    %cst_10 = arith.constant 3.200000e+01 : f32
    %17 = vector.broadcast %cst_10 : f32 to vector<4x1xf32>
    %18 = arith.divf %16, %17 : vector<4x1xf32>
    %19 = vector.broadcast %18 : vector<4x1xf32> to vector<4x32xf32>
    %20 = arith.subf %3, %19 : vector<4x32xf32>
    %21 = arith.mulf %20, %20 : vector<4x32xf32>
    %cst_11 = arith.constant dense<0.000000e+00> : vector<4xf32>
    %22 = vector.multi_reduction <add>, %21, %cst_11 [1] : vector<4x32xf32> to vector<4xf32>
    %23 = vector.shape_cast %22 : vector<4xf32> to vector<4x1xf32>
    %cst_12 = arith.constant 3.200000e+01 : f32
    %24 = vector.broadcast %cst_12 : f32 to vector<4x1xf32>
    %25 = arith.divf %23, %24 : vector<4x1xf32>
    %26 = vector.broadcast %18 : vector<4x1xf32> to vector<4x32xf32>
    %27 = arith.subf %3, %26 : vector<4x32xf32>
    %cst_13 = arith.constant 9.99999974E-6 : f32
    %28 = vector.broadcast %cst_13 : f32 to vector<4x1xf32>
    %29 = arith.addf %25, %28 : vector<4x1xf32>
    %30 = math.rsqrt %29 : vector<4x1xf32>
    %31 = vector.broadcast %30 : vector<4x1xf32> to vector<4x32xf32>
    %32 = arith.mulf %27, %31 : vector<4x32xf32>
    %33 = vector.broadcast %12 : vector<1x32xf32> to vector<4x32xf32>
    %34 = arith.mulf %32, %33 : vector<4x32xf32>
    %35 = vector.broadcast %14 : vector<1x32xf32> to vector<4x32xf32>
    %36 = arith.addf %34, %35 : vector<4x32xf32>
    %37 = arith.truncf %36 : vector<4x32xf32> to vector<4x32xbf16>
    %c0_14 = arith.constant 0 : index
    %c0_15 = arith.constant 0 : index
    %c0_16 = arith.constant 0 : index
    %38 = vector.load %arg5[%c0_14, %c0_15, %c0_16] : memref<1x32x32xbf16, #tpu.memory_space<vmem>>, vector<1x32x32xbf16>
    %39 = vector.shape_cast %38 : vector<1x32x32xbf16> to vector<32x32xbf16>
    %cst_17 = arith.constant dense<0.000000e+00> : vector<4x32xf32>
    %40 = tpu.matmul %37, %39, %cst_17 {dimension_numbers = #tpu.dot_dimension_numbers<[1], [0], [0], [1], [0, 0, 1, 1], [], []>} : vector<4x32xbf16>, vector<32x32xbf16>, vector<4x32xf32> -> vector<4x32xf32>
    %cst_18 = arith.constant 2.500000e-01 : f32
    %41 = vector.broadcast %cst_18 : f32 to vector<4x32xf32>
    %42 = arith.mulf %40, %41 : vector<4x32xf32>
    %c0_19 = arith.constant 0 : index
    %c0_20 = arith.constant 0 : index
    %c0_21 = arith.constant 0 : index
    %43 = vector.load %arg6[%c0_19, %c0_20, %c0_21] : memref<1x32x32xbf16, #tpu.memory_space<vmem>>, vector<1x32x32xbf16>
    %44 = vector.shape_cast %43 : vector<1x32x32xbf16> to vector<32x32xbf16>
    %cst_22 = arith.constant dense<0.000000e+00> : vector<4x32xf32>
    %45 = tpu.matmul %37, %44, %cst_22 {dimension_numbers = #tpu.dot_dimension_numbers<[1], [0], [0], [1], [0, 0, 1, 1], [], []>} : vector<4x32xbf16>, vector<32x32xbf16>, vector<4x32xf32> -> vector<4x32xf32>
    %c0_23 = arith.constant 0 : index
    %c0_24 = arith.constant 0 : index
    %c0_25 = arith.constant 0 : index
    %46 = vector.load %arg7[%c0_23, %c0_24, %c0_25] : memref<1x32x32xbf16, #tpu.memory_space<vmem>>, vector<1x32x32xbf16>
    %47 = vector.shape_cast %46 : vector<1x32x32xbf16> to vector<32x32xbf16>
    %cst_26 = arith.constant dense<0.000000e+00> : vector<4x32xf32>
    %48 = tpu.matmul %37, %47, %cst_26 {dimension_numbers = #tpu.dot_dimension_numbers<[1], [0], [0], [1], [0, 0, 1, 1], [], []>} : vector<4x32xbf16>, vector<32x32xbf16>, vector<4x32xf32> -> vector<4x32xf32>
    %49 = vector.shape_cast %42 : vector<4x32xf32> to vector<4x2x16xf32>
    %50 = arith.truncf %49 : vector<4x2x16xf32> to vector<4x2x16xbf16>
    %51 = vector.shape_cast %45 : vector<4x32xf32> to vector<4x2x16xf32>
    %52 = arith.truncf %51 : vector<4x2x16xf32> to vector<4x2x16xbf16>
    %53 = vector.shape_cast %48 : vector<4x32xf32> to vector<4x2x16xf32>
    %54 = arith.truncf %53 : vector<4x2x16xf32> to vector<4x2x16xbf16>
    "tpu.trace_start"() <{level = 10 : i32, message = "qhd,khd->hqk"}> : () -> ()
    %cst_27 = arith.constant dense<0.000000e+00> : vector<2x4x4xf32>
    %55 = tpu.matmul %50, %52, %cst_27 {dimension_numbers = #tpu.dot_dimension_numbers<[2], [2], [0], [0], [0, 1, 0, 0, 1, 0], [1], [1]>} : vector<4x2x16xbf16>, vector<4x2x16xbf16>, vector<2x4x4xf32> -> vector<2x4x4xf32>
    "tpu.trace_stop"() : () -> ()
    %56 = vector.broadcast %10 : vector<1x4x4xf32> to vector<2x4x4xf32>
    %57 = arith.addf %55, %56 : vector<2x4x4xf32>
    %cst_28 = arith.constant dense<0xFF800000> : vector<2x4xf32>
    %58 = vector.multi_reduction <maximumf>, %57, %cst_28 [2] : vector<2x4x4xf32> to vector<2x4xf32>
    %59 = vector.shape_cast %58 : vector<2x4xf32> to vector<2x4x1xf32>
    %60 = vector.broadcast %59 : vector<2x4x1xf32> to vector<2x4x4xf32>
    %61 = arith.subf %57, %60 : vector<2x4x4xf32>
    %62 = math.exp %61 : vector<2x4x4xf32>
    %cst_29 = arith.constant dense<0.000000e+00> : vector<2x4xf32>
    %63 = vector.multi_reduction <add>, %62, %cst_29 [2] : vector<2x4x4xf32> to vector<2x4xf32>
    %64 = vector.shape_cast %63 : vector<2x4xf32> to vector<2x4x1xf32>
    %65 = tpu.reciprocal %64 {approx = true} : vector<2x4x1xf32> -> vector<2x4x1xf32>
    %66 = vector.broadcast %65 : vector<2x4x1xf32> to vector<2x4x4xf32>
    %67 = arith.mulf %62, %66 : vector<2x4x4xf32>
    %68 = arith.truncf %67 : vector<2x4x4xf32> to vector<2x4x4xbf16>
    "tpu.trace_start"() <{level = 10 : i32, message = "hqk,khd->qhd"}> : () -> ()
    %cst_30 = arith.constant dense<0.000000e+00> : vector<2x16x4xf32>
    %69 = tpu.matmul %54, %68, %cst_30 {dimension_numbers = #tpu.dot_dimension_numbers<[0], [2], [2], [1], [0, 1, 0, 2, 1, 1], [1], [0]>} : vector<4x2x16xbf16>, vector<2x4x4xbf16>, vector<2x16x4xf32> -> vector<2x16x4xf32>
    %70 = tpu.transpose %69, [2, 0, 1] : vector<2x16x4xf32> -> vector<4x2x16xf32>
    "tpu.trace_stop"() : () -> ()
    %71 = vector.shape_cast %70 : vector<4x2x16xf32> to vector<4x32xf32>
    %72 = arith.truncf %71 : vector<4x32xf32> to vector<4x32xbf16>
    %c0_31 = arith.constant 0 : index
    %c0_32 = arith.constant 0 : index
    %c0_33 = arith.constant 0 : index
    %73 = vector.load %arg8[%c0_31, %c0_32, %c0_33] : memref<1x32x32xbf16, #tpu.memory_space<vmem>>, vector<1x32x32xbf16>
    %74 = vector.shape_cast %73 : vector<1x32x32xbf16> to vector<32x32xbf16>
    %cst_34 = arith.constant dense<0.000000e+00> : vector<4x32xf32>
    %75 = tpu.matmul %72, %74, %cst_34 {dimension_numbers = #tpu.dot_dimension_numbers<[1], [0], [0], [1], [0, 0, 1, 1], [], []>} : vector<4x32xbf16>, vector<32x32xbf16>, vector<4x32xf32> -> vector<4x32xf32>
    %76 = arith.addf %3, %75 : vector<4x32xf32>
    %c0_35 = arith.constant 0 : index
    %c0_36 = arith.constant 0 : index
    %c0_37 = arith.constant 0 : index
    %77 = vector.load %arg9[%c0_35, %c0_36, %c0_37] : memref<1x1x32xf32, #tpu.memory_space<vmem>>, vector<1x1x32xf32>
    %78 = vector.shape_cast %77 : vector<1x1x32xf32> to vector<1x32xf32>
    %c0_38 = arith.constant 0 : index
    %c0_39 = arith.constant 0 : index
    %c0_40 = arith.constant 0 : index
    %79 = vector.load %arg10[%c0_38, %c0_39, %c0_40] : memref<1x1x32xf32, #tpu.memory_space<vmem>>, vector<1x1x32xf32>
    %80 = vector.shape_cast %79 : vector<1x1x32xf32> to vector<1x32xf32>
    %cst_41 = arith.constant dense<0.000000e+00> : vector<4xf32>
    %81 = vector.multi_reduction <add>, %76, %cst_41 [1] : vector<4x32xf32> to vector<4xf32>
    %82 = vector.shape_cast %81 : vector<4xf32> to vector<4x1xf32>
    %cst_42 = arith.constant 3.200000e+01 : f32
    %83 = vector.broadcast %cst_42 : f32 to vector<4x1xf32>
    %84 = arith.divf %82, %83 : vector<4x1xf32>
    %85 = vector.broadcast %84 : vector<4x1xf32> to vector<4x32xf32>
    %86 = arith.subf %76, %85 : vector<4x32xf32>
    %87 = arith.mulf %86, %86 : vector<4x32xf32>
    %cst_43 = arith.constant dense<0.000000e+00> : vector<4xf32>
    %88 = vector.multi_reduction <add>, %87, %cst_43 [1] : vector<4x32xf32> to vector<4xf32>
    %89 = vector.shape_cast %88 : vector<4xf32> to vector<4x1xf32>
    %cst_44 = arith.constant 3.200000e+01 : f32
    %90 = vector.broadcast %cst_44 : f32 to vector<4x1xf32>
    %91 = arith.divf %89, %90 : vector<4x1xf32>
    %92 = vector.broadcast %84 : vector<4x1xf32> to vector<4x32xf32>
    %93 = arith.subf %76, %92 : vector<4x32xf32>
    %cst_45 = arith.constant 9.99999974E-6 : f32
    %94 = vector.broadcast %cst_45 : f32 to vector<4x1xf32>
    %95 = arith.addf %91, %94 : vector<4x1xf32>
    %96 = math.rsqrt %95 : vector<4x1xf32>
    %97 = vector.broadcast %96 : vector<4x1xf32> to vector<4x32xf32>
    %98 = arith.mulf %93, %97 : vector<4x32xf32>
    %99 = vector.broadcast %78 : vector<1x32xf32> to vector<4x32xf32>
    %100 = arith.mulf %98, %99 : vector<4x32xf32>
    %101 = vector.broadcast %80 : vector<1x32xf32> to vector<4x32xf32>
    %102 = arith.addf %100, %101 : vector<4x32xf32>
    %103 = arith.truncf %102 : vector<4x32xf32> to vector<4x32xbf16>
    %c0_46 = arith.constant 0 : index
    %c0_47 = arith.constant 0 : index
    %c0_48 = arith.constant 0 : index
    %104 = vector.load %arg11[%c0_46, %c0_47, %c0_48] : memref<1x32x128xbf16, #tpu.memory_space<vmem>>, vector<1x32x128xbf16>
    %105 = vector.shape_cast %104 : vector<1x32x128xbf16> to vector<32x128xbf16>
    %cst_49 = arith.constant dense<0.000000e+00> : vector<4x128xf32>
    %106 = tpu.matmul %103, %105, %cst_49 {dimension_numbers = #tpu.dot_dimension_numbers<[1], [0], [0], [1], [0, 0, 1, 1], [], []>} : vector<4x32xbf16>, vector<32x128xbf16>, vector<4x128xf32> -> vector<4x128xf32>
    %c0_50 = arith.constant 0 : index
    %c0_51 = arith.constant 0 : index
    %c0_52 = arith.constant 0 : index
    %107 = vector.load %arg12[%c0_50, %c0_51, %c0_52] : memref<1x1x128xf32, #tpu.memory_space<vmem>>, vector<1x1x128xf32>
    %108 = vector.shape_cast %107 : vector<1x1x128xf32> to vector<1x128xf32>
    %109 = vector.broadcast %108 : vector<1x128xf32> to vector<4x128xf32>
    %110 = arith.addf %106, %109 : vector<4x128xf32>
    %111 = arith.mulf %110, %110 : vector<4x128xf32>
    %112 = arith.mulf %110, %111 : vector<4x128xf32>
    %cst_53 = arith.constant 4.471500e-02 : f32
    %113 = vector.broadcast %cst_53 : f32 to vector<4x128xf32>
    %114 = arith.mulf %113, %112 : vector<4x128xf32>
    %115 = arith.addf %110, %114 : vector<4x128xf32>
    %cst_54 = arith.constant 0.797884583 : f32
    %116 = vector.broadcast %cst_54 : f32 to vector<4x128xf32>
    %117 = arith.mulf %116, %115 : vector<4x128xf32>
    %118 = math.tanh %117 : vector<4x128xf32>
    %cst_55 = arith.constant 1.000000e+00 : f32
    %119 = vector.broadcast %cst_55 : f32 to vector<4x128xf32>
    %120 = arith.addf %119, %118 : vector<4x128xf32>
    %cst_56 = arith.constant 5.000000e-01 : f32
    %121 = vector.broadcast %cst_56 : f32 to vector<4x128xf32>
    %122 = arith.mulf %121, %120 : vector<4x128xf32>
    %123 = arith.mulf %110, %122 : vector<4x128xf32>
    %124 = arith.truncf %123 : vector<4x128xf32> to vector<4x128xbf16>
    %c0_57 = arith.constant 0 : index
    %c0_58 = arith.constant 0 : index
    %c0_59 = arith.constant 0 : index
    %125 = vector.load %arg13[%c0_57, %c0_58, %c0_59] : memref<1x128x32xbf16, #tpu.memory_space<vmem>>, vector<1x128x32xbf16>
    %126 = vector.shape_cast %125 : vector<1x128x32xbf16> to vector<128x32xbf16>
    %cst_60 = arith.constant dense<0.000000e+00> : vector<4x32xf32>
    %127 = tpu.matmul %124, %126, %cst_60 {dimension_numbers = #tpu.dot_dimension_numbers<[1], [0], [0], [1], [0, 0, 1, 1], [], []>} : vector<4x128xbf16>, vector<128x32xbf16>, vector<4x32xf32> -> vector<4x32xf32>
    %c0_61 = arith.constant 0 : index
    %c0_62 = arith.constant 0 : index
    %c0_63 = arith.constant 0 : index
    %128 = vector.load %arg14[%c0_61, %c0_62, %c0_63] : memref<1x1x32xf32, #tpu.memory_space<vmem>>, vector<1x1x32xf32>
    %129 = vector.shape_cast %128 : vector<1x1x32xf32> to vector<1x32xf32>
    %130 = vector.broadcast %129 : vector<1x32xf32> to vector<4x32xf32>
    %131 = arith.addf %127, %130 : vector<4x32xf32>
    %132 = arith.addf %76, %131 : vector<4x32xf32>
    %c0_64 = arith.constant 0 : index
    %c0_65 = arith.constant 0 : index
    %133 = vector.load %arg22[%c0_64, %c0_65] : memref<4x32xf32, #tpu.memory_space<vmem>>, vector<4x32xf32>
    tpu.vector_store %arg22[%c0_64, %c0_65], %132 {strides = array<i32>} : memref<4x32xf32, #tpu.memory_space<vmem>>, vector<4x32xf32>,
    %c1_i32 = arith.constant 1 : i32
    %134 = arith.cmpi eq, %arg1, %c1_i32 : i32
    %135 = arith.extui %134 : i1 to i32
    %c0_i32_66 = arith.constant 0 : i32
    %136 = arith.cmpi ne, %135, %c0_i32_66 : i32
    scf.if %136 {
      %c0_67 = arith.constant 0 : index
      %c0_68 = arith.constant 0 : index
      %137 = vector.load %arg15[%c0_67, %c0_68] : memref<1x32xf32, #tpu.memory_space<vmem>>, vector<1x32xf32>
      %c0_69 = arith.constant 0 : index
      %c0_70 = arith.constant 0 : index
      %138 = vector.load %arg16[%c0_69, %c0_70] : memref<1x32xf32, #tpu.memory_space<vmem>>, vector<1x32xf32>
      %cst_71 = arith.constant dense<0.000000e+00> : vector<4xf32>
      %139 = vector.multi_reduction <add>, %132, %cst_71 [1] : vector<4x32xf32> to vector<4xf32>
      %140 = vector.shape_cast %139 : vector<4xf32> to vector<4x1xf32>
      %cst_72 = arith.constant 3.200000e+01 : f32
      %141 = vector.broadcast %cst_72 : f32 to vector<4x1xf32>
      %142 = arith.divf %140, %141 : vector<4x1xf32>
      %143 = vector.broadcast %142 : vector<4x1xf32> to vector<4x32xf32>
      %144 = arith.subf %132, %143 : vector<4x32xf32>
      %145 = arith.mulf %144, %144 : vector<4x32xf32>
      %cst_73 = arith.constant dense<0.000000e+00> : vector<4xf32>
      %146 = vector.multi_reduction <add>, %145, %cst_73 [1] : vector<4x32xf32> to vector<4xf32>
      %147 = vector.shape_cast %146 : vector<4xf32> to vector<4x1xf32>
      %cst_74 = arith.constant 3.200000e+01 : f32
      %148 = vector.broadcast %cst_74 : f32 to vector<4x1xf32>
      %149 = arith.divf %147, %148 : vector<4x1xf32>
      %150 = vector.broadcast %142 : vector<4x1xf32> to vector<4x32xf32>
      %151 = arith.subf %132, %150 : vector<4x32xf32>
      %cst_75 = arith.constant 9.99999974E-6 : f32
      %152 = vector.broadcast %cst_75 : f32 to vector<4x1xf32>
      %153 = arith.addf %149, %152 : vector<4x1xf32>
      %154 = math.rsqrt %153 : vector<4x1xf32>
      %155 = vector.broadcast %154 : vector<4x1xf32> to vector<4x32xf32>
      %156 = arith.mulf %151, %155 : vector<4x32xf32>
      %157 = vector.broadcast %137 : vector<1x32xf32> to vector<4x32xf32>
      %158 = arith.mulf %156, %157 : vector<4x32xf32>
      %159 = vector.broadcast %138 : vector<1x32xf32> to vector<4x32xf32>
      %160 = arith.addf %158, %159 : vector<4x32xf32>
      %161 = arith.truncf %160 : vector<4x32xf32> to vector<4x32xbf16>
      %c0_76 = arith.constant 0 : index
      %c0_77 = arith.constant 0 : index
      %162 = vector.load %arg17[%c0_76, %c0_77] : memref<32x4xbf16, #tpu.memory_space<vmem>>, vector<32x4xbf16>
      %cst_78 = arith.constant dense<0.000000e+00> : vector<4x4xf32>
      %163 = tpu.matmul %161, %162, %cst_78 {dimension_numbers = #tpu.dot_dimension_numbers<[1], [0], [0], [1], [0, 0, 1, 1], [], []>} : vector<4x32xbf16>, vector<32x4xbf16>, vector<4x4xf32> -> vector<4x4xf32>
      %164 = arith.truncf %163 : vector<4x4xf32> to vector<4x4xbf16>
      %c0_79 = arith.constant 0 : index
      %c0_80 = arith.constant 0 : index
      %165 = vector.load %arg18[%c0_79, %c0_80] : memref<4x4xbf16, #tpu.memory_space<vmem>>, vector<4x4xbf16>
      %cst_81 = arith.constant dense<0.000000e+00> : vector<4x4xf32>
      %166 = tpu.matmul %164, %165, %cst_81 {dimension_numbers = #tpu.dot_dimension_numbers<[1], [0], [0], [1], [0, 0, 1, 1], [], []>} : vector<4x4xbf16>, vector<4x4xbf16>, vector<4x4xf32> -> vector<4x4xf32>
      %c0_82 = arith.constant 0 : index
      %c0_83 = arith.constant 0 : index
      %167 = vector.load %arg19[%c0_82, %c0_83] : memref<1x4xf32, #tpu.memory_space<vmem>>, vector<1x4xf32>
      %168 = vector.broadcast %167 : vector<1x4xf32> to vector<4x4xf32>
      %169 = arith.addf %166, %168 : vector<4x4xf32>
      %c0_84 = arith.constant 0 : index
      %c0_85 = arith.constant 0 : index
      %170 = vector.load %arg20[%c0_84, %c0_85] : memref<1x4xf32, #tpu.memory_space<vmem>>, vector<1x4xf32>
      %171 = vector.broadcast %170 : vector<1x4xf32> to vector<4x4xf32>
      %172 = arith.addf %169, %171 : vector<4x4xf32>
      %cst_86 = arith.constant dense<0xFF800000> : vector<4xf32>
      %173 = vector.multi_reduction <maximumf>, %172, %cst_86 [1] : vector<4x4xf32> to vector<4xf32>
      %174 = vector.shape_cast %173 : vector<4xf32> to vector<4x1xf32>
      %175 = vector.broadcast %174 : vector<4x1xf32> to vector<4x4xf32>
      %176 = arith.subf %172, %175 : vector<4x4xf32>
      %177 = math.exp %176 : vector<4x4xf32>
      %cst_87 = arith.constant dense<0.000000e+00> : vector<4xf32>
      %178 = vector.multi_reduction <add>, %177, %cst_87 [1] : vector<4x4xf32> to vector<4xf32>
      %179 = vector.shape_cast %178 : vector<4xf32> to vector<4x1xf32>
      %180 = vector.broadcast %179 : vector<4x1xf32> to vector<4x4xf32>
      %181 = arith.divf %177, %180 : vector<4x4xf32>
      %182 = vector.shape_cast %181 : vector<4x4xf32> to vector<4x4x1xf32>
      %183 = vector.shape_cast %163 : vector<4x4xf32> to vector<1x4x4xf32>
      %184 = vector.broadcast %182 : vector<4x4x1xf32> to vector<4x4x4xf32>
      %185 = vector.broadcast %183 : vector<1x4x4xf32> to vector<4x4x4xf32>
      %186 = arith.mulf %184, %185 : vector<4x4x4xf32>
      %cst_88 = arith.constant 4.000000e+00 : f32
      %187 = vector.broadcast %cst_88 : f32 to vector<4x4x4xf32>
      %188 = arith.mulf %187, %186 : vector<4x4x4xf32>
      %189 = vector.shape_cast %188 : vector<4x4x4xf32> to vector<4x16xf32>
      %c0_89 = arith.constant 0 : index
      %c0_90 = arith.constant 0 : index
      %c0_91 = arith.constant 0 : index
      %190 = vector.load %arg21[%c0_89, %c0_90, %c0_91] : memref<1x4x16xf32, #tpu.memory_space<vmem>>, vector<1x4x16xf32>
      %191 = vector.shape_cast %190 : vector<1x4x16xf32> to vector<4x16xf32>
      %192 = vector.shape_cast %189 : vector<4x16xf32> to vector<1x4x16xf32>
      tpu.vector_store %arg21[%c0_89, %c0_90, %c0_91], %192 {strides = array<i32>} : memref<1x4x16xf32, #tpu.memory_space<vmem>>, vector<1x4x16xf32>,
    } else {
    }
    return
  }
  func.func @transform_0(%arg0: i32, %arg1: i32) -> (i32, i32, i32) {
    %c0_i32 = arith.constant 0 : i32
    %c0_i32_0 = arith.constant 0 : i32
    %c0_i32_1 = arith.constant 0 : i32
    return %arg0, %c0_i32, %c0_i32_0 : i32, i32, i32
  }
  func.func @transform_1(%arg0: i32, %arg1: i32) -> (i32, i32, i32) {
    %c0_i32 = arith.constant 0 : i32
    %c0_i32_0 = arith.constant 0 : i32
    %c0_i32_1 = arith.constant 0 : i32
    return %arg1, %c0_i32, %c0_i32_0 : i32, i32, i32
  }
  func.func @transform_2(%arg0: i32, %arg1: i32) -> (i32, i32, i32) {
    %c0_i32 = arith.constant 0 : i32
    %c0_i32_0 = arith.constant 0 : i32
    %c0_i32_1 = arith.constant 0 : i32
    return %arg1, %c0_i32, %c0_i32_0 : i32, i32, i32
  }
  func.func @transform_3(%arg0: i32, %arg1: i32) -> (i32, i32, i32) {
    %c0_i32 = arith.constant 0 : i32
    %c0_i32_0 = arith.constant 0 : i32
    %c0_i32_1 = arith.constant 0 : i32
    return %arg1, %c0_i32, %c0_i32_0 : i32, i32, i32
  }
  func.func @transform_4(%arg0: i32, %arg1: i32) -> (i32, i32, i32) {
    %c0_i32 = arith.constant 0 : i32
    %c0_i32_0 = arith.constant 0 : i32
    %c0_i32_1 = arith.constant 0 : i32
    return %arg1, %c0_i32, %c0_i32_0 : i32, i32, i32
  }
  func.func @transform_5(%arg0: i32, %arg1: i32) -> (i32, i32, i32) {
    %c0_i32 = arith.constant 0 : i32
    %c0_i32_0 = arith.constant 0 : i32
    %c0_i32_1 = arith.constant 0 : i32
    return %arg1, %c0_i32, %c0_i32_0 : i32, i32, i32
  }
  func.func @transform_6(%arg0: i32, %arg1: i32) -> (i32, i32, i32) {
    %c0_i32 = arith.constant 0 : i32
    %c0_i32_0 = arith.constant 0 : i32
    %c0_i32_1 = arith.constant 0 : i32
    return %arg1, %c0_i32, %c0_i32_0 : i32, i32, i32
  }
  func.func @transform_7(%arg0: i32, %arg1: i32) -> (i32, i32, i32) {
    %c0_i32 = arith.constant 0 : i32
    %c0_i32_0 = arith.constant 0 : i32
    %c0_i32_1 = arith.constant 0 : i32
    return %arg1, %c0_i32, %c0_i32_0 : i32, i32, i32
  }
  func.func @transform_8(%arg0: i32, %arg1: i32) -> (i32, i32, i32) {
    %c0_i32 = arith.constant 0 : i32
    %c0_i32_0 = arith.constant 0 : i32
    %c0_i32_1 = arith.constant 0 : i32
    return %arg1, %c0_i32, %c0_i32_0 : i32, i32, i32
  }
  func.func @transform_9(%arg0: i32, %arg1: i32) -> (i32, i32, i32) {
    %c0_i32 = arith.constant 0 : i32
    %c0_i32_0 = arith.constant 0 : i32
    %c0_i32_1 = arith.constant 0 : i32
    return %arg1, %c0_i32, %c0_i32_0 : i32, i32, i32
  }
  func.func @transform_10(%arg0: i32, %arg1: i32) -> (i32, i32, i32) {
    %c0_i32 = arith.constant 0 : i32
    %c0_i32_0 = arith.constant 0 : i32
    %c0_i32_1 = arith.constant 0 : i32
    return %arg1, %c0_i32, %c0_i32_0 : i32, i32, i32
  }
  func.func @transform_11(%arg0: i32, %arg1: i32) -> (i32, i32, i32) {
    %c0_i32 = arith.constant 0 : i32
    %c0_i32_0 = arith.constant 0 : i32
    %c0_i32_1 = arith.constant 0 : i32
    return %arg1, %c0_i32, %c0_i32_0 : i32, i32, i32
  }
  func.func @transform_12(%arg0: i32, %arg1: i32) -> (i32, i32, i32) {
    %c0_i32 = arith.constant 0 : i32
    %c0_i32_0 = arith.constant 0 : i32
    %c0_i32_1 = arith.constant 0 : i32
    return %arg1, %c0_i32, %c0_i32_0 : i32, i32, i32
  }
  func.func @transform_13(%arg0: i32, %arg1: i32) -> (i32, i32) {
    %c0_i32 = arith.constant 0 : i32
    %c0_i32_0 = arith.constant 0 : i32
    %c0_i32_1 = arith.constant 0 : i32
    return %c0_i32, %c0_i32_0 : i32, i32
  }
  func.func @transform_14(%arg0: i32, %arg1: i32) -> (i32, i32) {
    %c0_i32 = arith.constant 0 : i32
    %c0_i32_0 = arith.constant 0 : i32
    %c0_i32_1 = arith.constant 0 : i32
    return %c0_i32, %c0_i32_0 : i32, i32
  }
  func.func @transform_15(%arg0: i32, %arg1: i32) -> (i32, i32) {
    %c0_i32 = arith.constant 0 : i32
    %c0_i32_0 = arith.constant 0 : i32
    %c0_i32_1 = arith.constant 0 : i32
    return %c0_i32, %c0_i32_0 : i32, i32
  }
  func.func @transform_16(%arg0: i32, %arg1: i32) -> (i32, i32) {
    %c0_i32 = arith.constant 0 : i32
    %c0_i32_0 = arith.constant 0 : i32
    %c0_i32_1 = arith.constant 0 : i32
    return %c0_i32, %c0_i32_0 : i32, i32
  }
  func.func @transform_17(%arg0: i32, %arg1: i32) -> (i32, i32) {
    %c0_i32 = arith.constant 0 : i32
    %c0_i32_0 = arith.constant 0 : i32
    %c0_i32_1 = arith.constant 0 : i32
    return %c0_i32, %c0_i32_0 : i32, i32
  }
  func.func @transform_18(%arg0: i32, %arg1: i32) -> (i32, i32) {
    %c0_i32 = arith.constant 0 : i32
    %c0_i32_0 = arith.constant 0 : i32
    %c0_i32_1 = arith.constant 0 : i32
    return %c0_i32, %c0_i32_0 : i32, i32
  }
  func.func @transform_19(%arg0: i32, %arg1: i32) -> (i32, i32, i32) {
    %c0_i32 = arith.constant 0 : i32
    %c0_i32_0 = arith.constant 0 : i32
    %c0_i32_1 = arith.constant 0 : i32
    return %arg0, %c0_i32, %c0_i32_0 : i32, i32, i32
  }
}

</mosaic_0001>

<llo_original>
// kernel: hivemind_swarm_forward.1
$region0: #{hivemind_swarm_forward.1}
  #allocation0 [shape = 'u32[]', space=smem, size = 0x4, offset = 0x4, fixed_abs, tag = 'smem constant byte address 0x4 - core index']
  #allocation1 [shape = 'u32[144,128]{1,0:T(1,128)}', space=vmem, size = 0x12000, scoped, tag = 'internal scratch']
  #allocation2 [shape = 'f32[4,32]{1,0:T(4,128)}', space=vmem, size = 0x800, scoped, tag = 'scratch operand']
  %s0 = inlined_call_operand.vmem [shape: f32[1,4,32], index: 0, kind: input, shape index: {}]
  %s1 = inlined_call_operand.vmem [shape: f32[2,1,32], index: 1, kind: input, shape index: {}]
  %s2 = inlined_call_operand.vmem [shape: f32[2,1,32], index: 2, kind: input, shape index: {}]
  %s3 = inlined_call_operand.vmem [shape: bf16[2,32,32], index: 3, kind: input, shape index: {}]
  %s4 = inlined_call_operand.vmem [shape: bf16[2,32,32], index: 4, kind: input, shape index: {}]
  %s5 = inlined_call_operand.vmem [shape: bf16[2,32,32], index: 5, kind: input, shape index: {}]
  %s6 = inlined_call_operand.vmem [shape: bf16[2,32,32], index: 6, kind: input, shape index: {}]
  %s7 = inlined_call_operand.vmem [shape: f32[2,1,32], index: 7, kind: input, shape index: {}]
  %s8 = inlined_call_operand.vmem [shape: f32[2,1,32], index: 8, kind: input, shape index: {}]
  %s9 = inlined_call_operand.vmem [shape: bf16[2,32,128], index: 9, kind: input, shape index: {}]
  %s10 = inlined_call_operand.vmem [shape: f32[2,1,128], index: 10, kind: input, shape index: {}]
  %s11 = inlined_call_operand.vmem [shape: bf16[2,128,32], index: 11, kind: input, shape index: {}]
  %s12 = inlined_call_operand.vmem [shape: f32[2,1,32], index: 12, kind: input, shape index: {}]
  %s13 = inlined_call_operand.vmem [shape: f32[1,32], index: 13, kind: input, shape index: {}]
  %s14 = inlined_call_operand.vmem [shape: f32[1,32], index: 14, kind: input, shape index: {}]
  %s15 = inlined_call_operand.vmem [shape: bf16[32,4], index: 15, kind: input, shape index: {}]
  %s16 = inlined_call_operand.vmem [shape: bf16[4,4], index: 16, kind: input, shape index: {}]
  %s17 = inlined_call_operand.vmem [shape: f32[1,4], index: 17, kind: input, shape index: {}]
  %s18 = inlined_call_operand.vmem [shape: f32[1,4], index: 18, kind: input, shape index: {}]
  %s19 = inlined_call_operand.vmem [shape: f32[1,4,16], index: 19, kind: output, shape index: {}]
  %s20 = sld [smem:[#allocation0]]
  $region117: #{hivemind_swarm_forward.1} parent=0
    _
  %s22 = ssub.s32 1, %s20
  %s23 = scalar_select 0, %s22, %s20
  loop: start=0, step=1, limit=4
  $region2: #{hivemind_swarm_forward.1} parent=0 // loop_pre_header
    _
  $region3: #{hivemind_swarm_forward.1} parent=0 // loop_header
    %s25 = sphi 0, %s29
    %p26 = scmp.ge.s32.totalorder %s25, 4
    %s32 = sphi 0, %s44
    %s33 = sphi 0, %s40
    %s34 = sphi 0, %s32
    %s35 = sphi 0, %s33
    %s36 = sphi 0, %s34
    %s37 = sphi 0, %s35
    %s47 = sphi 0, %s49
    %s50 = sphi 0, %s47
    %s51 = sphi 0, %s50
    %s67 = sphi 0, %s51
    %s73 = sphi 0, %s75
    %s76 = sphi 0, %s73
    %s77 = sphi 0, %s76
    %s93 = sphi 0, %s77
    %s99 = sphi 0, %s101
    %s102 = sphi 0, %s99
    %s103 = sphi 0, %s102
    %s119 = sphi 0, %s103
    %s125 = sphi 0, %s127
    %s128 = sphi 0, %s125
    %s129 = sphi 0, %s128
    %s145 = sphi 0, %s129
    %s151 = sphi 0, %s153
    %s154 = sphi 0, %s151
    %s155 = sphi 0, %s154
    %s171 = sphi 0, %s155
    %s177 = sphi 0, %s179
    %s180 = sphi 0, %s177
    %s181 = sphi 0, %s180
    %s197 = sphi 0, %s181
    %s203 = sphi 0, %s205
    %s206 = sphi 0, %s203
    %s207 = sphi 0, %s206
    %s223 = sphi 0, %s207
    %s229 = sphi 0, %s231
    %s232 = sphi 0, %s229
    %s233 = sphi 0, %s232
    %s249 = sphi 0, %s233
    %s255 = sphi 0, %s257
    %s258 = sphi 0, %s255
    %s259 = sphi 0, %s258
    %s275 = sphi 0, %s259
    %s281 = sphi 0, %s283
    %s284 = sphi 0, %s281
    %s285 = sphi 0, %s284
    %s301 = sphi 0, %s285
    %s307 = sphi 0, %s309
    %s310 = sphi 0, %s307
    %s311 = sphi 0, %s310
    %s327 = sphi 0, %s311
    %s333 = sphi 0, %s335
    %s336 = sphi 0, %s333
    %s337 = sphi 0, %s336
    %s353 = sphi 0, %s337
    %s359 = sphi 0, %s361
    %s362 = sphi 0, %s359
    %s363 = sphi 0, %s362
    %s379 = sphi 0, %s363
    %s383 = sphi 0, %s383
    %s385 = sphi 0, %s383
    %s386 = sphi 0, %s385
    %s400 = sphi 0, %s386
    %s404 = sphi 0, %s404
    %s406 = sphi 0, %s404
    %s407 = sphi 0, %s406
    %s421 = sphi 0, %s407
    %s425 = sphi 0, %s425
    %s427 = sphi 0, %s425
    %s428 = sphi 0, %s427
    %s442 = sphi 0, %s428
    %s446 = sphi 0, %s446
    %s448 = sphi 0, %s446
    %s449 = sphi 0, %s448
    %s463 = sphi 0, %s449
    %s467 = sphi 0, %s467
    %s469 = sphi 0, %s467
    %s470 = sphi 0, %s469
    %s484 = sphi 0, %s470
    %s488 = sphi 0, %s488
    %s490 = sphi 0, %s488
    %s491 = sphi 0, %s490
    %s505 = sphi 0, %s491
    %s511 = sphi 0, %s513
    %s514 = sphi 0, %s511
    %s515 = sphi 0, %s514
    %s531 = sphi 0, %s515
  $region4: #{hivemind_swarm_forward.1} parent=0 // loop_header_branch
    %28 = sbr.rel (%p26) target = $region8
  $region5: #{hivemind_swarm_forward.1} parent=0 // loop_body
    %s30 = ssub.s32 %s25, 1
    %s31 = ssub.s32 %s25, 2
    %s38 = sadd.s32 1, %s33
    %p39 = scmp.ge.s32.totalorder %s38, 2
    %s40 = scalar_select %p39, 0, %s38
    %s41 = sadd.s32 1, %s32
    %s42 = scalar_select %p39, %s41, %s32
    %p43 = scmp.ge.s32.totalorder %s42, 1
    %s44 = scalar_select %p43, 0, %s42
    %s45 = ssub.s32 %s32, %s44
    %p46 = scmp.eq.s32.totalorder %s45, 0
    %s48 = sadd.s32 %s47, 1
    %s49 = scalar_select %p46, %s47, %s48
    %p52 = pneg %p46
    %p53 = scmp.eq.s32.totalorder %s25, 1
    %p54 = por %p52, %p53
    %p55 = scmp.ne.s32.totalorder %s47, %s50
    %p56 = scmp.eq.s32.totalorder %s25, 0
    %p57 = por %p55, %p56
    %p58 = scmp.ne.s32.totalorder %s47, %s50
    %p59 = scmp.eq.s32.totalorder %s30, 1
    %p60 = por %p58, %p59
    %p61 = scmp.ne.s32.totalorder %s50, %s51
    %p62 = scmp.eq.s32.totalorder %s30, 0
    %p63 = por %p61, %p62
    %p64 = scmp.ne.s32.totalorder %s50, %s51
    %p65 = scmp.eq.s32.totalorder %s31, 1
    %p66 = por %p64, %p65
    %p68 = scmp.ne.s32.totalorder %s51, %s67
    %p69 = scmp.eq.s32.totalorder %s31, 0
    %p70 = por %p68, %p69
    %s71 = ssub.s32 %s33, %s40
    %p72 = scmp.eq.s32.totalorder %s71, 0
    %s74 = sadd.s32 %s73, 1
    %s75 = scalar_select %p72, %s73, %s74
    %p78 = pneg %p72
    %p79 = scmp.eq.s32.totalorder %s25, 1
    %p80 = por %p78, %p79
    %p81 = scmp.ne.s32.totalorder %s73, %s76
    %p82 = scmp.eq.s32.totalorder %s25, 0
    %p83 = por %p81, %p82
    %p84 = scmp.ne.s32.totalorder %s73, %s76
    %p85 = scmp.eq.s32.totalorder %s30, 1
    %p86 = por %p84, %p85
    %p87 = scmp.ne.s32.totalorder %s76, %s77
    %p88 = scmp.eq.s32.totalorder %s30, 0
    %p89 = por %p87, %p88
    %p90 = scmp.ne.s32.totalorder %s76, %s77
    %p91 = scmp.eq.s32.totalorder %s31, 1
    %p92 = por %p90, %p91
    %p94 = scmp.ne.s32.totalorder %s77, %s93
    %p95 = scmp.eq.s32.totalorder %s31, 0
    %p96 = por %p94, %p95
    %s97 = ssub.s32 %s33, %s40
    %p98 = scmp.eq.s32.totalorder %s97, 0
    %s100 = sadd.s32 %s99, 1
    %s101 = scalar_select %p98, %s99, %s100
    %p104 = pneg %p98
    %p105 = scmp.eq.s32.totalorder %s25, 1
    %p106 = por %p104, %p105
    %p107 = scmp.ne.s32.totalorder %s99, %s102
    %p108 = scmp.eq.s32.totalorder %s25, 0
    %p109 = por %p107, %p108
    %p110 = scmp.ne.s32.totalorder %s99, %s102
    %p111 = scmp.eq.s32.totalorder %s30, 1
    %p112 = por %p110, %p111
    %p113 = scmp.ne.s32.totalorder %s102, %s103
    %p114 = scmp.eq.s32.totalorder %s30, 0
    %p115 = por %p113, %p114
    %p116 = scmp.ne.s32.totalorder %s102, %s103
    %p117 = scmp.eq.s32.totalorder %s31, 1
    %p118 = por %p116, %p117
    %p120 = scmp.ne.s32.totalorder %s103, %s119
    %p121 = scmp.eq.s32.totalorder %s31, 0
    %p122 = por %p120, %p121
    %s123 = ssub.s32 %s33, %s40
    %p124 = scmp.eq.s32.totalorder %s123, 0
    %s126 = sadd.s32 %s125, 1
    %s127 = scalar_select %p124, %s125, %s126
    %p130 = pneg %p124
    %p131 = scmp.eq.s32.totalorder %s25, 1
    %p132 = por %p130, %p131
    %p133 = scmp.ne.s32.totalorder %s125, %s128
    %p134 = scmp.eq.s32.totalorder %s25, 0
    %p135 = por %p133, %p134
    %p136 = scmp.ne.s32.totalorder %s125, %s128
    %p137 = scmp.eq.s32.totalorder %s30, 1
    %p138 = por %p136, %p137
    %p139 = scmp.ne.s32.totalorder %s128, %s129
    %p140 = scmp.eq.s32.totalorder %s30, 0
    %p141 = por %p139, %p140
    %p142 = scmp.ne.s32.totalorder %s128, %s129
    %p143 = scmp.eq.s32.totalorder %s31, 1
    %p144 = por %p142, %p143
    %p146 = scmp.ne.s32.totalorder %s129, %s145
    %p147 = scmp.eq.s32.totalorder %s31, 0
    %p148 = por %p146, %p147
    %s149 = ssub.s32 %s33, %s40
    %p150 = scmp.eq.s32.totalorder %s149, 0
    %s152 = sadd.s32 %s151, 1
    %s153 = scalar_select %p150, %s151, %s152
    %p156 = pneg %p150
    %p157 = scmp.eq.s32.totalorder %s25, 1
    %p158 = por %p156, %p157
    %p159 = scmp.ne.s32.totalorder %s151, %s154
    %p160 = scmp.eq.s32.totalorder %s25, 0
    %p161 = por %p159, %p160
    %p162 = scmp.ne.s32.totalorder %s151, %s154
    %p163 = scmp.eq.s32.totalorder %s30, 1
    %p164 = por %p162, %p163
    %p165 = scmp.ne.s32.totalorder %s154, %s155
    %p166 = scmp.eq.s32.totalorder %s30, 0
    %p167 = por %p165, %p166
    %p168 = scmp.ne.s32.totalorder %s154, %s155
    %p169 = scmp.eq.s32.totalorder %s31, 1
    %p170 = por %p168, %p169
    %p172 = scmp.ne.s32.totalorder %s155, %s171
    %p173 = scmp.eq.s32.totalorder %s31, 0
    %p174 = por %p172, %p173
    %s175 = ssub.s32 %s33, %s40
    %p176 = scmp.eq.s32.totalorder %s175, 0
    %s178 = sadd.s32 %s177, 1
    %s179 = scalar_select %p176, %s177, %s178
    %p182 = pneg %p176
    %p183 = scmp.eq.s32.totalorder %s25, 1
    %p184 = por %p182, %p183
    %p185 = scmp.ne.s32.totalorder %s177, %s180
    %p186 = scmp.eq.s32.totalorder %s25, 0
    %p187 = por %p185, %p186
    %p188 = scmp.ne.s32.totalorder %s177, %s180
    %p189 = scmp.eq.s32.totalorder %s30, 1
    %p190 = por %p188, %p189
    %p191 = scmp.ne.s32.totalorder %s180, %s181
    %p192 = scmp.eq.s32.totalorder %s30, 0
    %p193 = por %p191, %p192
    %p194 = scmp.ne.s32.totalorder %s180, %s181
    %p195 = scmp.eq.s32.totalorder %s31, 1
    %p196 = por %p194, %p195
    %p198 = scmp.ne.s32.totalorder %s181, %s197
    %p199 = scmp.eq.s32.totalorder %s31, 0
    %p200 = por %p198, %p199
    %s201 = ssub.s32 %s33, %s40
    %p202 = scmp.eq.s32.totalorder %s201, 0
    %s204 = sadd.s32 %s203, 1
    %s205 = scalar_select %p202, %s203, %s204
    %p208 = pneg %p202
    %p209 = scmp.eq.s32.totalorder %s25, 1
    %p210 = por %p208, %p209
    %p211 = scmp.ne.s32.totalorder %s203, %s206
    %p212 = scmp.eq.s32.totalorder %s25, 0
    %p213 = por %p211, %p212
    %p214 = scmp.ne.s32.totalorder %s203, %s206
    %p215 = scmp.eq.s32.totalorder %s30, 1
    %p216 = por %p214, %p215
    %p217 = scmp.ne.s32.totalorder %s206, %s207
    %p218 = scmp.eq.s32.totalorder %s30, 0
    %p219 = por %p217, %p218
    %p220 = scmp.ne.s32.totalorder %s206, %s207
    %p221 = scmp.eq.s32.totalorder %s31, 1
    %p222 = por %p220, %p221
    %p224 = scmp.ne.s32.totalorder %s207, %s223
    %p225 = scmp.eq.s32.totalorder %s31, 0
    %p226 = por %p224, %p225
    %s227 = ssub.s32 %s33, %s40
    %p228 = scmp.eq.s32.totalorder %s227, 0
    %s230 = sadd.s32 %s229, 1
    %s231 = scalar_select %p228, %s229, %s230
    %p234 = pneg %p228
    %p235 = scmp.eq.s32.totalorder %s25, 1
    %p236 = por %p234, %p235
    %p237 = scmp.ne.s32.totalorder %s229, %s232
    %p238 = scmp.eq.s32.totalorder %s25, 0
    %p239 = por %p237, %p238
    %p240 = scmp.ne.s32.totalorder %s229, %s232
    %p241 = scmp.eq.s32.totalorder %s30, 1
    %p242 = por %p240, %p241
    %p243 = scmp.ne.s32.totalorder %s232, %s233
    %p244 = scmp.eq.s32.totalorder %s30, 0
    %p245 = por %p243, %p244
    %p246 = scmp.ne.s32.totalorder %s232, %s233
    %p247 = scmp.eq.s32.totalorder %s31, 1
    %p248 = por %p246, %p247
    %p250 = scmp.ne.s32.totalorder %s233, %s249
    %p251 = scmp.eq.s32.totalorder %s31, 0
    %p252 = por %p250, %p251
    %s253 = ssub.s32 %s33, %s40
    %p254 = scmp.eq.s32.totalorder %s253, 0
    %s256 = sadd.s32 %s255, 1
    %s257 = scalar_select %p254, %s255, %s256
    %p260 = pneg %p254
    %p261 = scmp.eq.s32.totalorder %s25, 1
    %p262 = por %p260, %p261
    %p263 = scmp.ne.s32.totalorder %s255, %s258
    %p264 = scmp.eq.s32.totalorder %s25, 0
    %p265 = por %p263, %p264
    %p266 = scmp.ne.s32.totalorder %s255, %s258
    %p267 = scmp.eq.s32.totalorder %s30, 1
    %p268 = por %p266, %p267
    %p269 = scmp.ne.s32.totalorder %s258, %s259
    %p270 = scmp.eq.s32.totalorder %s30, 0
    %p271 = por %p269, %p270
    %p272 = scmp.ne.s32.totalorder %s258, %s259
    %p273 = scmp.eq.s32.totalorder %s31, 1
    %p274 = por %p272, %p273
    %p276 = scmp.ne.s32.totalorder %s259, %s275
    %p277 = scmp.eq.s32.totalorder %s31, 0
    %p278 = por %p276, %p277
    %s279 = ssub.s32 %s33, %s40
    %p280 = scmp.eq.s32.totalorder %s279, 0
    %s282 = sadd.s32 %s281, 1
    %s283 = scalar_select %p280, %s281, %s282
    %p286 = pneg %p280
    %p287 = scmp.eq.s32.totalorder %s25, 1
    %p288 = por %p286, %p287
    %p289 = scmp.ne.s32.totalorder %s281, %s284
    %p290 = scmp.eq.s32.totalorder %s25, 0
    %p291 = por %p289, %p290
    %p292 = scmp.ne.s32.totalorder %s281, %s284
    %p293 = scmp.eq.s32.totalorder %s30, 1
    %p294 = por %p292, %p293
    %p295 = scmp.ne.s32.totalorder %s284, %s285
    %p296 = scmp.eq.s32.totalorder %s30, 0
    %p297 = por %p295, %p296
    %p298 = scmp.ne.s32.totalorder %s284, %s285
    %p299 = scmp.eq.s32.totalorder %s31, 1
    %p300 = por %p298, %p299
    %p302 = scmp.ne.s32.totalorder %s285, %s301
    %p303 = scmp.eq.s32.totalorder %s31, 0
    %p304 = por %p302, %p303
    %s305 = ssub.s32 %s33, %s40
    %p306 = scmp.eq.s32.totalorder %s305, 0
    %s308 = sadd.s32 %s307, 1
    %s309 = scalar_select %p306, %s307, %s308
    %p312 = pneg %p306
    %p313 = scmp.eq.s32.totalorder %s25, 1
    %p314 = por %p312, %p313
    %p315 = scmp.ne.s32.totalorder %s307, %s310
    %p316 = scmp.eq.s32.totalorder %s25, 0
    %p317 = por %p315, %p316
    %p318 = scmp.ne.s32.totalorder %s307, %s310
    %p319 = scmp.eq.s32.totalorder %s30, 1
    %p320 = por %p318, %p319
    %p321 = scmp.ne.s32.totalorder %s310, %s311
    %p322 = scmp.eq.s32.totalorder %s30, 0
    %p323 = por %p321, %p322
    %p324 = scmp.ne.s32.totalorder %s310, %s311
    %p325 = scmp.eq.s32.totalorder %s31, 1
    %p326 = por %p324, %p325
    %p328 = scmp.ne.s32.totalorder %s311, %s327
    %p329 = scmp.eq.s32.totalorder %s31, 0
    %p330 = por %p328, %p329
    %s331 = ssub.s32 %s33, %s40
    %p332 = scmp.eq.s32.totalorder %s331, 0
    %s334 = sadd.s32 %s333, 1
    %s335 = scalar_select %p332, %s333, %s334
    %p338 = pneg %p332
    %p339 = scmp.eq.s32.totalorder %s25, 1
    %p340 = por %p338, %p339
    %p341 = scmp.ne.s32.totalorder %s333, %s336
    %p342 = scmp.eq.s32.totalorder %s25, 0
    %p343 = por %p341, %p342
    %p344 = scmp.ne.s32.totalorder %s333, %s336
    %p345 = scmp.eq.s32.totalorder %s30, 1
    %p346 = por %p344, %p345
    %p347 = scmp.ne.s32.totalorder %s336, %s337
    %p348 = scmp.eq.s32.totalorder %s30, 0
    %p349 = por %p347, %p348
    %p350 = scmp.ne.s32.totalorder %s336, %s337
    %p351 = scmp.eq.s32.totalorder %s31, 1
    %p352 = por %p350, %p351
    %p354 = scmp.ne.s32.totalorder %s337, %s353
    %p355 = scmp.eq.s32.totalorder %s31, 0
    %p356 = por %p354, %p355
    %s357 = ssub.s32 %s33, %s40
    %p358 = scmp.eq.s32.totalorder %s357, 0
    %s360 = sadd.s32 %s359, 1
    %s361 = scalar_select %p358, %s359, %s360
    %p364 = pneg %p358
    %p365 = scmp.eq.s32.totalorder %s25, 1
    %p366 = por %p364, %p365
    %p367 = scmp.ne.s32.totalorder %s359, %s362
    %p368 = scmp.eq.s32.totalorder %s25, 0
    %p369 = por %p367, %p368
    %p370 = scmp.ne.s32.totalorder %s359, %s362
    %p371 = scmp.eq.s32.totalorder %s30, 1
    %p372 = por %p370, %p371
    %p373 = scmp.ne.s32.totalorder %s362, %s363
    %p374 = scmp.eq.s32.totalorder %s30, 0
    %p375 = por %p373, %p374
    %p376 = scmp.ne.s32.totalorder %s362, %s363
    %p377 = scmp.eq.s32.totalorder %s31, 1
    %p378 = por %p376, %p377
    %p380 = scmp.ne.s32.totalorder %s363, %s379
    %p381 = scmp.eq.s32.totalorder %s31, 0
    %p382 = por %p380, %p381
    %s384 = sadd.s32 %s383, 1
    %p387 = scmp.eq.s32.totalorder %s25, 1
    %p388 = scmp.ne.s32.totalorder %s383, %s385
    %p389 = scmp.eq.s32.totalorder %s25, 0
    %p390 = por %p388, %p389
    %p391 = scmp.ne.s32.totalorder %s383, %s385
    %p392 = scmp.eq.s32.totalorder %s30, 1
    %p393 = por %p391, %p392
    %p394 = scmp.ne.s32.totalorder %s385, %s386
    %p395 = scmp.eq.s32.totalorder %s30, 0
    %p396 = por %p394, %p395
    %p397 = scmp.ne.s32.totalorder %s385, %s386
    %p398 = scmp.eq.s32.totalorder %s31, 1
    %p399 = por %p397, %p398
    %p401 = scmp.ne.s32.totalorder %s386, %s400
    %p402 = scmp.eq.s32.totalorder %s31, 0
    %p403 = por %p401, %p402
    %s405 = sadd.s32 %s404, 1
    %p408 = scmp.eq.s32.totalorder %s25, 1
    %p409 = scmp.ne.s32.totalorder %s404, %s406
    %p410 = scmp.eq.s32.totalorder %s25, 0
    %p411 = por %p409, %p410
    %p412 = scmp.ne.s32.totalorder %s404, %s406
    %p413 = scmp.eq.s32.totalorder %s30, 1
    %p414 = por %p412, %p413
    %p415 = scmp.ne.s32.totalorder %s406, %s407
    %p416 = scmp.eq.s32.totalorder %s30, 0
    %p417 = por %p415, %p416
    %p418 = scmp.ne.s32.totalorder %s406, %s407
    %p419 = scmp.eq.s32.totalorder %s31, 1
    %p420 = por %p418, %p419
    %p422 = scmp.ne.s32.totalorder %s407, %s421
    %p423 = scmp.eq.s32.totalorder %s31, 0
    %p424 = por %p422, %p423
    %s426 = sadd.s32 %s425, 1
    %p429 = scmp.eq.s32.totalorder %s25, 1
    %p430 = scmp.ne.s32.totalorder %s425, %s427
    %p431 = scmp.eq.s32.totalorder %s25, 0
    %p432 = por %p430, %p431
    %p433 = scmp.ne.s32.totalorder %s425, %s427
    %p434 = scmp.eq.s32.totalorder %s30, 1
    %p435 = por %p433, %p434
    %p436 = scmp.ne.s32.totalorder %s427, %s428
    %p437 = scmp.eq.s32.totalorder %s30, 0
    %p438 = por %p436, %p437
    %p439 = scmp.ne.s32.totalorder %s427, %s428
    %p440 = scmp.eq.s32.totalorder %s31, 1
    %p441 = por %p439, %p440
    %p443 = scmp.ne.s32.totalorder %s428, %s442
    %p444 = scmp.eq.s32.totalorder %s31, 0
    %p445 = por %p443, %p444
    %s447 = sadd.s32 %s446, 1
    %p450 = scmp.eq.s32.totalorder %s25, 1
    %p451 = scmp.ne.s32.totalorder %s446, %s448
    %p452 = scmp.eq.s32.totalorder %s25, 0
    %p453 = por %p451, %p452
    %p454 = scmp.ne.s32.totalorder %s446, %s448
    %p455 = scmp.eq.s32.totalorder %s30, 1
    %p456 = por %p454, %p455
    %p457 = scmp.ne.s32.totalorder %s448, %s449
    %p458 = scmp.eq.s32.totalorder %s30, 0
    %p459 = por %p457, %p458
    %p460 = scmp.ne.s32.totalorder %s448, %s449
    %p461 = scmp.eq.s32.totalorder %s31, 1
    %p462 = por %p460, %p461
    %p464 = scmp.ne.s32.totalorder %s449, %s463
    %p465 = scmp.eq.s32.totalorder %s31, 0
    %p466 = por %p464, %p465
    %s468 = sadd.s32 %s467, 1
    %p471 = scmp.eq.s32.totalorder %s25, 1
    %p472 = scmp.ne.s32.totalorder %s467, %s469
    %p473 = scmp.eq.s32.totalorder %s25, 0
    %p474 = por %p472, %p473
    %p475 = scmp.ne.s32.totalorder %s467, %s469
    %p476 = scmp.eq.s32.totalorder %s30, 1
    %p477 = por %p475, %p476
    %p478 = scmp.ne.s32.totalorder %s469, %s470
    %p479 = scmp.eq.s32.totalorder %s30, 0
    %p480 = por %p478, %p479
    %p481 = scmp.ne.s32.totalorder %s469, %s470
    %p482 = scmp.eq.s32.totalorder %s31, 1
    %p483 = por %p481, %p482
    %p485 = scmp.ne.s32.totalorder %s470, %s484
    %p486 = scmp.eq.s32.totalorder %s31, 0
    %p487 = por %p485, %p486
    %s489 = sadd.s32 %s488, 1
    %p492 = scmp.eq.s32.totalorder %s25, 1
    %p493 = scmp.ne.s32.totalorder %s488, %s490
    %p494 = scmp.eq.s32.totalorder %s25, 0
    %p495 = por %p493, %p494
    %p496 = scmp.ne.s32.totalorder %s488, %s490
    %p497 = scmp.eq.s32.totalorder %s30, 1
    %p498 = por %p496, %p497
    %p499 = scmp.ne.s32.totalorder %s490, %s491
    %p500 = scmp.eq.s32.totalorder %s30, 0
    %p501 = por %p499, %p500
    %p502 = scmp.ne.s32.totalorder %s490, %s491
    %p503 = scmp.eq.s32.totalorder %s31, 1
    %p504 = por %p502, %p503
    %p506 = scmp.ne.s32.totalorder %s491, %s505
    %p507 = scmp.eq.s32.totalorder %s31, 0
    %p508 = por %p506, %p507
    %s509 = ssub.s32 %s32, %s44
    %p510 = scmp.eq.s32.totalorder %s509, 0
    %s512 = sadd.s32 %s511, 1
    %s513 = scalar_select %p510, %s511, %s512
    %p516 = pneg %p510
    %p517 = scmp.eq.s32.totalorder %s25, 1
    %p518 = por %p516, %p517
    %p519 = scmp.ne.s32.totalorder %s511, %s514
    %p520 = scmp.eq.s32.totalorder %s25, 0
    %p521 = por %p519, %p520
    %p522 = scmp.ne.s32.totalorder %s511, %s514
    %p523 = scmp.eq.s32.totalorder %s30, 1
    %p524 = por %p522, %p523
    %p525 = scmp.ne.s32.totalorder %s514, %s515
    %p526 = scmp.eq.s32.totalorder %s30, 0
    %p527 = por %p525, %p526
    %p528 = scmp.ne.s32.totalorder %s514, %s515
    %p529 = scmp.eq.s32.totalorder %s31, 1
    %p530 = por %p528, %p529
    %p532 = scmp.ne.s32.totalorder %s515, %s531
    %p533 = scmp.eq.s32.totalorder %s31, 0
    %p534 = por %p532, %p533
    %p535 = scmp.le.s32.totalorder 1, %s25
    %p536 = scmp.lt.s32.totalorder %s25, 3
    %p537 = pnand %p535, %p536
    %p538 = pneg %p537
    // Predicated region
    $region9: #{hivemind_swarm_forward.1} parent=5 // pred_check
      _
    $region10: #{hivemind_swarm_forward.1} parent=5 // pred_check_branch
      %540 = sbr.rel (%p537) target = $region12
    $region11: #{hivemind_swarm_forward.1} parent=5 // pred_region
      %s541 = ssub.s32 %s25, 1
      // Predicated region
      $region13: #{hivemind_swarm_forward.1} parent=11 // pred_check
        %p542 = pneg %p63
      $region14: #{hivemind_swarm_forward.1} parent=11 // pred_check_branch
        %544 = sbr.rel (%p542) target = $region16
      $region15: #{hivemind_swarm_forward.1} parent=11 // pred_region
        %p545 = scmp.lt.s32.totalorder %s34, 0
        %s546 = scalar_select %p545, %s34, 0
        %s547 = smul.addr %s546, 4
        %s548 = scalar_lea.vmem %s0, %s547
      $region16: #{hivemind_swarm_forward.1} parent=11 // pred_fallthru
        _
      // Predicated region
      $region17: #{hivemind_swarm_forward.1} parent=11 // pred_check
        %p549 = pneg %p396
      $region18: #{hivemind_swarm_forward.1} parent=11 // pred_check_branch
        %551 = sbr.rel (%p549) target = $region20
      $region19: #{hivemind_swarm_forward.1} parent=11 // pred_region
        _
      $region20: #{hivemind_swarm_forward.1} parent=11 // pred_fallthru
        _
      // Predicated region
      $region21: #{hivemind_swarm_forward.1} parent=11 // pred_check
        %p552 = pneg %p417
      $region22: #{hivemind_swarm_forward.1} parent=11 // pred_check_branch
        %554 = sbr.rel (%p552) target = $region24
      $region23: #{hivemind_swarm_forward.1} parent=11 // pred_region
        _
      $region24: #{hivemind_swarm_forward.1} parent=11 // pred_fallthru
        _
      // Predicated region
      $region25: #{hivemind_swarm_forward.1} parent=11 // pred_check
        %p555 = pneg %p438
      $region26: #{hivemind_swarm_forward.1} parent=11 // pred_check_branch
        %557 = sbr.rel (%p555) target = $region28
      $region27: #{hivemind_swarm_forward.1} parent=11 // pred_region
        _
      $region28: #{hivemind_swarm_forward.1} parent=11 // pred_fallthru
        _
      // Predicated region
      $region29: #{hivemind_swarm_forward.1} parent=11 // pred_check
        %p558 = pneg %p459
      $region30: #{hivemind_swarm_forward.1} parent=11 // pred_check_branch
        %560 = sbr.rel (%p558) target = $region32
      $region31: #{hivemind_swarm_forward.1} parent=11 // pred_region
        _
      $region32: #{hivemind_swarm_forward.1} parent=11 // pred_fallthru
        _
      // Predicated region
      $region33: #{hivemind_swarm_forward.1} parent=11 // pred_check
        %p561 = pneg %p480
      $region34: #{hivemind_swarm_forward.1} parent=11 // pred_check_branch
        %563 = sbr.rel (%p561) target = $region36
      $region35: #{hivemind_swarm_forward.1} parent=11 // pred_region
        _
      $region36: #{hivemind_swarm_forward.1} parent=11 // pred_fallthru
        _
      // Predicated region
      $region37: #{hivemind_swarm_forward.1} parent=11 // pred_check
        %p564 = pneg %p501
      $region38: #{hivemind_swarm_forward.1} parent=11 // pred_check_branch
        %566 = sbr.rel (%p564) target = $region40
      $region39: #{hivemind_swarm_forward.1} parent=11 // pred_region
        _
      $region40: #{hivemind_swarm_forward.1} parent=11 // pred_fallthru
        _
    $region12: #{hivemind_swarm_forward.1} parent=5 // pred_fallthru
      _
    %p567 = scmp.lt.s32.totalorder %s25, 2
    // Predicated region
    $region41: #{hivemind_swarm_forward.1} parent=5 // pred_check
      %p568 = pneg %p567
    $region42: #{hivemind_swarm_forward.1} parent=5 // pred_check_branch
      %570 = sbr.rel (%p568) target = $region44
    $region43: #{hivemind_swarm_forward.1} parent=5 // pred_region
      // Predicated region
      $region45: #{hivemind_swarm_forward.1} parent=43 // pred_check
        %p571 = pneg %p83
      $region46: #{hivemind_swarm_forward.1} parent=43 // pred_check_branch
        %573 = sbr.rel (%p571) target = $region48
      $region47: #{hivemind_swarm_forward.1} parent=43 // pred_region
        %p574 = scmp.lt.s32.totalorder %s33, 1
        %s575 = scalar_select %p574, %s33, 1
        %s576 = scalar_lea.vmem %s1, %s575
      $region48: #{hivemind_swarm_forward.1} parent=43 // pred_fallthru
        _
      // Predicated region
      $region49: #{hivemind_swarm_forward.1} parent=43 // pred_check
        %p577 = pneg %p109
      $region50: #{hivemind_swarm_forward.1} parent=43 // pred_check_branch
        %579 = sbr.rel (%p577) target = $region52
      $region51: #{hivemind_swarm_forward.1} parent=43 // pred_region
        %p580 = scmp.lt.s32.totalorder %s33, 1
        %s581 = scalar_select %p580, %s33, 1
        %s582 = scalar_lea.vmem %s2, %s581
      $region52: #{hivemind_swarm_forward.1} parent=43 // pred_fallthru
        _
      // Predicated region
      $region53: #{hivemind_swarm_forward.1} parent=43 // pred_check
        %p583 = pneg %p135
      $region54: #{hivemind_swarm_forward.1} parent=43 // pred_check_branch
        %585 = sbr.rel (%p583) target = $region56
      $region55: #{hivemind_swarm_forward.1} parent=43 // pred_region
        %p586 = scmp.lt.s32.totalorder %s33, 1
        %s587 = scalar_select %p586, %s33, 1
        %s588 = smul.addr %s587, 4
        %s589 = smul.addr %s588, 4
        %s590 = scalar_lea.vmem %s3, %s589
      $region56: #{hivemind_swarm_forward.1} parent=43 // pred_fallthru
        _
      // Predicated region
      $region57: #{hivemind_swarm_forward.1} parent=43 // pred_check
        %p591 = pneg %p161
      $region58: #{hivemind_swarm_forward.1} parent=43 // pred_check_branch
        %593 = sbr.rel (%p591) target = $region60
      $region59: #{hivemind_swarm_forward.1} parent=43 // pred_region
        %p594 = scmp.lt.s32.totalorder %s33, 1
        %s595 = scalar_select %p594, %s33, 1
        %s596 = smul.addr %s595, 4
        %s597 = smul.addr %s596, 4
        %s598 = scalar_lea.vmem %s4, %s597
      $region60: #{hivemind_swarm_forward.1} parent=43 // pred_fallthru
        _
      // Predicated region
      $region61: #{hivemind_swarm_forward.1} parent=43 // pred_check
        %p599 = pneg %p187
      $region62: #{hivemind_swarm_forward.1} parent=43 // pred_check_branch
        %601 = sbr.rel (%p599) target = $region64
      $region63: #{hivemind_swarm_forward.1} parent=43 // pred_region
        %p602 = scmp.lt.s32.totalorder %s33, 1
        %s603 = scalar_select %p602, %s33, 1
        %s604 = smul.addr %s603, 4
        %s605 = smul.addr %s604, 4
        %s606 = scalar_lea.vmem %s5, %s605
      $region64: #{hivemind_swarm_forward.1} parent=43 // pred_fallthru
        _
      // Predicated region
      $region65: #{hivemind_swarm_forward.1} parent=43 // pred_check
        %p607 = pneg %p213
      $region66: #{hivemind_swarm_forward.1} parent=43 // pred_check_branch
        %609 = sbr.rel (%p607) target = $region68
      $region67: #{hivemind_swarm_forward.1} parent=43 // pred_region
        %p610 = scmp.lt.s32.totalorder %s33, 1
        %s611 = scalar_select %p610, %s33, 1
        %s612 = smul.addr %s611, 4
        %s613 = smul.addr %s612, 4
        %s614 = scalar_lea.vmem %s6, %s613
      $region68: #{hivemind_swarm_forward.1} parent=43 // pred_fallthru
        _
      // Predicated region
      $region69: #{hivemind_swarm_forward.1} parent=43 // pred_check
        %p615 = pneg %p239
      $region70: #{hivemind_swarm_forward.1} parent=43 // pred_check_branch
        %617 = sbr.rel (%p615) target = $region72
      $region71: #{hivemind_swarm_forward.1} parent=43 // pred_region
        %p618 = scmp.lt.s32.totalorder %s33, 1
        %s619 = scalar_select %p618, %s33, 1
        %s620 = scalar_lea.vmem %s7, %s619
      $region72: #{hivemind_swarm_forward.1} parent=43 // pred_fallthru
        _
      // Predicated region
      $region73: #{hivemind_swarm_forward.1} parent=43 // pred_check
        %p621 = pneg %p265
      $region74: #{hivemind_swarm_forward.1} parent=43 // pred_check_branch
        %623 = sbr.rel (%p621) target = $region76
      $region75: #{hivemind_swarm_forward.1} parent=43 // pred_region
        %p624 = scmp.lt.s32.totalorder %s33, 1
        %s625 = scalar_select %p624, %s33, 1
        %s626 = scalar_lea.vmem %s8, %s625
      $region76: #{hivemind_swarm_forward.1} parent=43 // pred_fallthru
        _
      // Predicated region
      $region77: #{hivemind_swarm_forward.1} parent=43 // pred_check
        %p627 = pneg %p291
      $region78: #{hivemind_swarm_forward.1} parent=43 // pred_check_branch
        %629 = sbr.rel (%p627) target = $region80
      $region79: #{hivemind_swarm_forward.1} parent=43 // pred_region
        %p630 = scmp.lt.s32.totalorder %s33, 1
        %s631 = scalar_select %p630, %s33, 1
        %s632 = smul.addr %s631, 4
        %s633 = smul.addr %s632, 4
        %s634 = scalar_lea.vmem %s9, %s633
      $region80: #{hivemind_swarm_forward.1} parent=43 // pred_fallthru
        _
      // Predicated region
      $region81: #{hivemind_swarm_forward.1} parent=43 // pred_check
        %p635 = pneg %p317
      $region82: #{hivemind_swarm_forward.1} parent=43 // pred_check_branch
        %637 = sbr.rel (%p635) target = $region84
      $region83: #{hivemind_swarm_forward.1} parent=43 // pred_region
        %p638 = scmp.lt.s32.totalorder %s33, 1
        %s639 = scalar_select %p638, %s33, 1
        %s640 = scalar_lea.vmem %s10, %s639
      $region84: #{hivemind_swarm_forward.1} parent=43 // pred_fallthru
        _
      // Predicated region
      $region85: #{hivemind_swarm_forward.1} parent=43 // pred_check
        %p641 = pneg %p343
      $region86: #{hivemind_swarm_forward.1} parent=43 // pred_check_branch
        %643 = sbr.rel (%p641) target = $region88
      $region87: #{hivemind_swarm_forward.1} parent=43 // pred_region
        %p644 = scmp.lt.s32.totalorder %s33, 1
        %s645 = scalar_select %p644, %s33, 1
        %s646 = smul.addr %s645, 16
        %s647 = smul.addr %s646, 4
        %s648 = scalar_lea.vmem %s11, %s647
      $region88: #{hivemind_swarm_forward.1} parent=43 // pred_fallthru
        _
      // Predicated region
      $region89: #{hivemind_swarm_forward.1} parent=43 // pred_check
        %p649 = pneg %p369
      $region90: #{hivemind_swarm_forward.1} parent=43 // pred_check_branch
        %651 = sbr.rel (%p649) target = $region92
      $region91: #{hivemind_swarm_forward.1} parent=43 // pred_region
        %p652 = scmp.lt.s32.totalorder %s33, 1
        %s653 = scalar_select %p652, %s33, 1
        %s654 = scalar_lea.vmem %s12, %s653
      $region92: #{hivemind_swarm_forward.1} parent=43 // pred_fallthru
        _
    $region44: #{hivemind_swarm_forward.1} parent=5 // pred_fallthru
      _
    %p655 = scmp.le.s32.totalorder 1, %s25
    %p656 = scmp.lt.s32.totalorder %s25, 3
    %p657 = pnand %p655, %p656
    %p658 = pneg %p657
    // Predicated region
    $region93: #{hivemind_swarm_forward.1} parent=5 // pred_check
      _
    $region94: #{hivemind_swarm_forward.1} parent=5 // pred_check_branch
      %660 = sbr.rel (%p657) target = $region96
    $region95: #{hivemind_swarm_forward.1} parent=5 // pred_region
      %s661 = ssub.s32 %s25, 1
      %p662 = scmp.lt.s32.totalorder %s34, 0
      %s663 = scalar_select %p662, %s34, 0
      %s664 = smul.addr %s663, 4
      %s665 = scalar_lea.vmem %s0, %s664
      %p666 = pneg %p63
      %p667 = pneg %p60
      %p668 = scmp.lt.s32.totalorder %s35, 1
      %s669 = scalar_select %p668, %s35, 1
      %s670 = scalar_lea.vmem %s1, %s669
      %p671 = pneg %p89
      %p672 = pneg %p86
      %p673 = scmp.lt.s32.totalorder %s35, 1
      %s674 = scalar_select %p673, %s35, 1
      %s675 = scalar_lea.vmem %s2, %s674
      %p676 = pneg %p115
      %p677 = pneg %p112
      %p678 = scmp.lt.s32.totalorder %s35, 1
      %s679 = scalar_select %p678, %s35, 1
      %s680 = smul.addr %s679, 4
      %s681 = smul.addr %s680, 4
      %s682 = scalar_lea.vmem %s3, %s681
      %p683 = pneg %p141
      %p684 = pneg %p138
      %p685 = scmp.lt.s32.totalorder %s35, 1
      %s686 = scalar_select %p685, %s35, 1
      %s687 = smul.addr %s686, 4
      %s688 = smul.addr %s687, 4
      %s689 = scalar_lea.vmem %s4, %s688
      %p690 = pneg %p167
      %p691 = pneg %p164
      %p692 = scmp.lt.s32.totalorder %s35, 1
      %s693 = scalar_select %p692, %s35, 1
      %s694 = smul.addr %s693, 4
      %s695 = smul.addr %s694, 4
      %s696 = scalar_lea.vmem %s5, %s695
      %p697 = pneg %p193
      %p698 = pneg %p190
      %p699 = scmp.lt.s32.totalorder %s35, 1
      %s700 = scalar_select %p699, %s35, 1
      %s701 = smul.addr %s700, 4
      %s702 = smul.addr %s701, 4
      %s703 = scalar_lea.vmem %s6, %s702
      %p704 = pneg %p219
      %p705 = pneg %p216
      %p706 = scmp.lt.s32.totalorder %s35, 1
      %s707 = scalar_select %p706, %s35, 1
      %s708 = scalar_lea.vmem %s7, %s707
      %p709 = pneg %p245
      %p710 = pneg %p242
      %p711 = scmp.lt.s32.totalorder %s35, 1
      %s712 = scalar_select %p711, %s35, 1
      %s713 = scalar_lea.vmem %s8, %s712
      %p714 = pneg %p271
      %p715 = pneg %p268
      %p716 = scmp.lt.s32.totalorder %s35, 1
      %s717 = scalar_select %p716, %s35, 1
      %s718 = smul.addr %s717, 4
      %s719 = smul.addr %s718, 4
      %s720 = scalar_lea.vmem %s9, %s719
      %p721 = pneg %p297
      %p722 = pneg %p294
      %p723 = scmp.lt.s32.totalorder %s35, 1
      %s724 = scalar_select %p723, %s35, 1
      %s725 = scalar_lea.vmem %s10, %s724
      %p726 = pneg %p323
      %p727 = pneg %p320
      %p728 = scmp.lt.s32.totalorder %s35, 1
      %s729 = scalar_select %p728, %s35, 1
      %s730 = smul.addr %s729, 16
      %s731 = smul.addr %s730, 4
      %s732 = scalar_lea.vmem %s11, %s731
      %p733 = pneg %p349
      %p734 = pneg %p346
      %p735 = scmp.lt.s32.totalorder %s35, 1
      %s736 = scalar_select %p735, %s35, 1
      %s737 = scalar_lea.vmem %s12, %s736
      %p738 = pneg %p375
      %p739 = pneg %p372
      %p740 = pneg %p396
      %p741 = pneg %p393
      %p742 = pneg %p417
      %p743 = pneg %p414
      %p744 = pneg %p438
      %p745 = pneg %p435
      %p746 = pneg %p459
      %p747 = pneg %p456
      %p748 = pneg %p480
      %p749 = pneg %p477
      %p750 = pneg %p501
      %p751 = pneg %p498
      %p752 = pneg %p527
      %p753 = pneg %p524
      %p754 = scmp.lt.s32.totalorder %s34, 0
      %s755 = scalar_select %p754, %s34, 0
      %s756 = smul.addr %s755, 4
      %s757 = scalar_lea.vmem %s19, %s756
      %p758 = scmp.lt.s32.totalorder %s34, 0
      %s759 = scalar_select %p758, %s34, 0
      %s760 = smul.addr %s759, 4
      %s761 = scalar_lea.vmem %s0, %s760
      %p762 = scmp.lt.s32.totalorder %s35, 1
      %s763 = scalar_select %p762, %s35, 1
      %s764 = scalar_lea.vmem %s1, %s763
      %p765 = scmp.lt.s32.totalorder %s35, 1
      %s766 = scalar_select %p765, %s35, 1
      %s767 = scalar_lea.vmem %s2, %s766
      %p768 = scmp.lt.s32.totalorder %s35, 1
      %s769 = scalar_select %p768, %s35, 1
      %s770 = smul.addr %s769, 4
      %s771 = smul.addr %s770, 4
      %s772 = scalar_lea.vmem %s3, %s771
      %p773 = scmp.lt.s32.totalorder %s35, 1
      %s774 = scalar_select %p773, %s35, 1
      %s775 = smul.addr %s774, 4
      %s776 = smul.addr %s775, 4
      %s777 = scalar_lea.vmem %s4, %s776
      %p778 = scmp.lt.s32.totalorder %s35, 1
      %s779 = scalar_select %p778, %s35, 1
      %s780 = smul.addr %s779, 4
      %s781 = smul.addr %s780, 4
      %s782 = scalar_lea.vmem %s5, %s781
      %p783 = scmp.lt.s32.totalorder %s35, 1
      %s784 = scalar_select %p783, %s35, 1
      %s785 = smul.addr %s784, 4
      %s786 = smul.addr %s785, 4
      %s787 = scalar_lea.vmem %s6, %s786
      %p788 = scmp.lt.s32.totalorder %s35, 1
      %s789 = scalar_select %p788, %s35, 1
      %s790 = scalar_lea.vmem %s7, %s789
      %p791 = scmp.lt.s32.totalorder %s35, 1
      %s792 = scalar_select %p791, %s35, 1
      %s793 = scalar_lea.vmem %s8, %s792
      %p794 = scmp.lt.s32.totalorder %s35, 1
      %s795 = scalar_select %p794, %s35, 1
      %s796 = smul.addr %s795, 4
      %s797 = smul.addr %s796, 4
      %s798 = scalar_lea.vmem %s9, %s797
      %p799 = scmp.lt.s32.totalorder %s35, 1
      %s800 = scalar_select %p799, %s35, 1
      %s801 = scalar_lea.vmem %s10, %s800
      %p802 = scmp.lt.s32.totalorder %s35, 1
      %s803 = scalar_select %p802, %s35, 1
      %s804 = smul.addr %s803, 16
      %s805 = smul.addr %s804, 4
      %s806 = scalar_lea.vmem %s11, %s805
      %p807 = scmp.lt.s32.totalorder %s35, 1
      %s808 = scalar_select %p807, %s35, 1
      %s809 = scalar_lea.vmem %s12, %s808
      %p810 = scmp.lt.s32.totalorder %s34, 0
      %s811 = scalar_select %p810, %s34, 0
      %s812 = smul.addr %s811, 4
      %s813 = scalar_lea.vmem %s19, %s812
      %p815 = scmp.eq.s32.totalorder %s35, 0
      // Predicated region
      $region97: #{hivemind_swarm_forward.1} parent=95 // pred_check
        %p816 = pneg %p815
      $region98: #{hivemind_swarm_forward.1} parent=95 // pred_check_branch
        %818 = sbr.rel (%p816) target = $region100
      $region99: #{hivemind_swarm_forward.1} parent=95 // pred_region
        %v819 = vld [vmem:[%s761] sm:$0xf]
        %vm820 = vcmask 257024
        %821 = vst.msk [vmem:[#allocation2] sm:$0xf] %vm820, %v819
      $region100: #{hivemind_swarm_forward.1} parent=95 // pred_fallthru
        _
      %v822 = vld [vmem:[#allocation2] sm:$0xf]
      %v823 = vlaneseq
      %v824 = vshrl.u32 %v823, 7
      %v825 = vlaneseq
      %v826 = vand.u32 %v825, 127
      %vm827 = vcmp.ge.s32.totalorder %v824, %v826
      %v828 = vsel %vm827, 0.0, -1e+30
      %v829 = vld [vmem:[%s764] sm:$0x1]
      %v830 = vld [vmem:[%s767] sm:$0x1]
      %vm831 = vcmask 257024
      %v832 = vsel %vm831, %v822, 0.0
      %833 = vadd.xlane.f32.xlu0 %v832
      %v834 = vpop.xlane.xlu0 %833
      %v835 = vrcp.pop 32.0
      %v836 = vmul.f32 %v834, %v835
      %v837 = vsub.f32 %v822, %v836
      %v838 = vmul.f32 %v837, %v837
      %v839 = vsel %vm831, %v838, 0.0
      %840 = vadd.xlane.f32.xlu0 %v839
      %v841 = vpop.xlane.xlu0 %840
      %v842 = vmul.f32 %v841, %v835
      %v843 = vadd.f32 %v842, 1e-05
      %v844 = vrsqrt.pop %v843
      %v845 = vmul.f32 %v837, %v844
      %v847 = vlaneseq
      %v848 = vshrl.u32 %v847, 7
      %v849 = vsub.s32 0, %v848
      %v850 = vrot.slane %v829, %v849
      %v852 = vmul.f32 %v845, %v850
      %v854 = vlaneseq
      %v855 = vshrl.u32 %v854, 7
      %v856 = vsub.s32 0, %v855
      %v857 = vrot.slane %v830, %v856
      %v859 = vadd.f32 %v852, %v857
      %v860 = vpack.c.bf16 %v859, %v859
      %v861 = vld [vmem:[%s772] sm:$0xf]
      %v862 = vld [vmem:[%s772 + $0x4] sm:$0xf]
      %v863 = vld [vmem:[%s772 + $0x8] sm:$0xf]
      %v864 = vld [vmem:[%s772 + $0xc] sm:$0xf]
      %v869 = vunpack.c.l.b16 %v861
      %v870 = vunpack.c.l.b16 %v862
      %v871 = vunpack.c.l.b16 %v863
      %v872 = vunpack.c.l.b16 %v864
      %v873 = vpack.c.b16 %v870, %v869
      %v874 = vpack.c.b16 %v872, %v871
      %vm877 = vcmask 261120
      %v879 = vsel %vm877, %v860, 0
      %881 = vmatprep.subr.bf16.mxu0 0
      %882 = vmatpush1.bf16.msra.mxu0 %v873
      %883 = vmatprep.subr.bf16.mxu0 0
      %884 = vmatpush1.bf16.msra.mxu0 %v874
      %885 = vmatprep.subr.bf16.mxu0 0
      %886 = vmatpush1.bf16.msra.mxu0 0
      %887 = vmatprep.subr.bf16.mxu0 0
      %888 = vmatpush1.bf16.msra.mxu0 0
      %889 = vmatprep.subr.bf16.mxu0 0
      %890 = vmatpush1.bf16.msra.mxu0 0
      %891 = vmatprep.subr.bf16.mxu0 0
      %892 = vmatpush1.bf16.msra.mxu0 0
      %893 = vmatprep.subr.bf16.mxu0 0
      %894 = vmatpush1.bf16.msra.mxu0 0
      %895 = vmatprep.subr.bf16.mxu0 0
      %896 = vmatpush1.bf16.msra.mxu0 0
      %897 = vmatprep.subr.bf16.mxu0 0
      %898 = vmatpush1.bf16.msra.mxu0 0
      %899 = vmatprep.subr.bf16.mxu0 0
      %900 = vmatpush1.bf16.msra.mxu0 0
      %901 = vmatprep.subr.bf16.mxu0 0
      %902 = vmatpush1.bf16.msra.mxu0 0
      %903 = vmatprep.subr.bf16.mxu0 0
      %904 = vmatpush1.bf16.msra.mxu0 0
      %905 = vmatprep.subr.bf16.mxu0 0
      %906 = vmatpush1.bf16.msra.mxu0 0
      %907 = vmatprep.subr.bf16.mxu0 0
      %908 = vmatpush1.bf16.msra.mxu0 0
      %909 = vmatprep.subr.bf16.mxu0 0
      %910 = vmatpush1.bf16.msra.mxu0 0
      %911 = vmatprep.subr.bf16.mxu0 0
      %912 = vmatpush1.bf16.msra.mxu0 0
      %913 = vmatprep.mubr.bf16.mxu0 0
      %914 = vmatmul.mubr.bf16.gmra.mrb[0].mxu0 %v879
      %v915 = vpop.f32.mrb[0].mxu0
      %v916 = vadd.f32 0.0, %v915
      %v917 = vpop.f32.mrb[0].mxu0
      %v918 = vpop.f32.mrb[0].mxu0
      %v919 = vpop.f32.mrb[0].mxu0
      %920 = vdwg.mxu0
      %v921 = vmul.f32 %v916, 0.25
      %v922 = vld [vmem:[%s777] sm:$0xf]
      %v923 = vld [vmem:[%s777 + $0x4] sm:$0xf]
      %v924 = vld [vmem:[%s777 + $0x8] sm:$0xf]
      %v925 = vld [vmem:[%s777 + $0xc] sm:$0xf]
      %v930 = vunpack.c.l.b16 %v922
      %v931 = vunpack.c.l.b16 %v923
      %v932 = vunpack.c.l.b16 %v924
      %v933 = vunpack.c.l.b16 %v925
      %v934 = vpack.c.b16 %v931, %v930
      %v935 = vpack.c.b16 %v933, %v932
      %938 = vmatprep.subr.bf16.mxu0 0
      %939 = vmatpush1.bf16.msra.mxu0 %v934
      %940 = vmatprep.subr.bf16.mxu0 0
      %941 = vmatpush1.bf16.msra.mxu0 %v935
      %942 = vmatprep.subr.bf16.mxu0 0
      %943 = vmatpush1.bf16.msra.mxu0 0
      %944 = vmatprep.subr.bf16.mxu0 0
      %945 = vmatpush1.bf16.msra.mxu0 0
      %946 = vmatprep.subr.bf16.mxu0 0
      %947 = vmatpush1.bf16.msra.mxu0 0
      %948 = vmatprep.subr.bf16.mxu0 0
      %949 = vmatpush1.bf16.msra.mxu0 0
      %950 = vmatprep.subr.bf16.mxu0 0
      %951 = vmatpush1.bf16.msra.mxu0 0
      %952 = vmatprep.subr.bf16.mxu0 0
      %953 = vmatpush1.bf16.msra.mxu0 0
      %954 = vmatprep.subr.bf16.mxu0 0
      %955 = vmatpush1.bf16.msra.mxu0 0
      %956 = vmatprep.subr.bf16.mxu0 0
      %957 = vmatpush1.bf16.msra.mxu0 0
      %958 = vmatprep.subr.bf16.mxu0 0
      %959 = vmatpush1.bf16.msra.mxu0 0
      %960 = vmatprep.subr.bf16.mxu0 0
      %961 = vmatpush1.bf16.msra.mxu0 0
      %962 = vmatprep.subr.bf16.mxu0 0
      %963 = vmatpush1.bf16.msra.mxu0 0
      %964 = vmatprep.subr.bf16.mxu0 0
      %965 = vmatpush1.bf16.msra.mxu0 0
      %966 = vmatprep.subr.bf16.mxu0 0
      %967 = vmatpush1.bf16.msra.mxu0 0
      %968 = vmatprep.subr.bf16.mxu0 0
      %969 = vmatpush1.bf16.msra.mxu0 0
      %970 = vmatprep.mubr.bf16.mxu0 0
      %971 = vmatmul.mubr.bf16.gmra.mrb[0].mxu0 %v879
      %v972 = vpop.f32.mrb[0].mxu0
      %v973 = vadd.f32 0.0, %v972
      %v974 = vpop.f32.mrb[0].mxu0
      %v975 = vpop.f32.mrb[0].mxu0
      %v976 = vpop.f32.mrb[0].mxu0
      %977 = vdwg.mxu0
      %v978 = vld [vmem:[%s782] sm:$0xf]
      %v979 = vld [vmem:[%s782 + $0x4] sm:$0xf]
      %v980 = vld [vmem:[%s782 + $0x8] sm:$0xf]
      %v981 = vld [vmem:[%s782 + $0xc] sm:$0xf]
      %v986 = vunpack.c.l.b16 %v978
      %v987 = vunpack.c.l.b16 %v979
      %v988 = vunpack.c.l.b16 %v980
      %v989 = vunpack.c.l.b16 %v981
      %v990 = vpack.c.b16 %v987, %v986
      %v991 = vpack.c.b16 %v989, %v988
      %994 = vmatprep.subr.bf16.mxu0 0
      %995 = vmatpush1.bf16.msra.mxu0 %v990
      %996 = vmatprep.subr.bf16.mxu0 0
      %997 = vmatpush1.bf16.msra.mxu0 %v991
      %998 = vmatprep.subr.bf16.mxu0 0
      %999 = vmatpush1.bf16.msra.mxu0 0
      %1000 = vmatprep.subr.bf16.mxu0 0
      %1001 = vmatpush1.bf16.msra.mxu0 0
      %1002 = vmatprep.subr.bf16.mxu0 0
      %1003 = vmatpush1.bf16.msra.mxu0 0
      %1004 = vmatprep.subr.bf16.mxu0 0
      %1005 = vmatpush1.bf16.msra.mxu0 0
      %1006 = vmatprep.subr.bf16.mxu0 0
      %1007 = vmatpush1.bf16.msra.mxu0 0
      %1008 = vmatprep.subr.bf16.mxu0 0
      %1009 = vmatpush1.bf16.msra.mxu0 0
      %1010 = vmatprep.subr.bf16.mxu0 0
      %1011 = vmatpush1.bf16.msra.mxu0 0
      %1012 = vmatprep.subr.bf16.mxu0 0
      %1013 = vmatpush1.bf16.msra.mxu0 0
      %1014 = vmatprep.subr.bf16.mxu0 0
      %1015 = vmatpush1.bf16.msra.mxu0 0
      %1016 = vmatprep.subr.bf16.mxu0 0
      %1017 = vmatpush1.bf16.msra.mxu0 0
      %1018 = vmatprep.subr.bf16.mxu0 0
      %1019 = vmatpush1.bf16.msra.mxu0 0
      %1020 = vmatprep.subr.bf16.mxu0 0
      %1021 = vmatpush1.bf16.msra.mxu0 0
      %1022 = vmatprep.subr.bf16.mxu0 0
      %1023 = vmatpush1.bf16.msra.mxu0 0
      %1024 = vmatprep.subr.bf16.mxu0 0
      %1025 = vmatpush1.bf16.msra.mxu0 0
      %1026 = vmatprep.mubr.bf16.mxu0 0
      %1027 = vmatmul.mubr.bf16.gmra.mrb[0].mxu0 %v879
      %v1028 = vpop.f32.mrb[0].mxu0
      %v1029 = vadd.f32 0.0, %v1028
      %v1030 = vpop.f32.mrb[0].mxu0
      %v1031 = vpop.f32.mrb[0].mxu0
      %v1032 = vpop.f32.mrb[0].mxu0
      %1033 = vdwg.mxu0
      %1035 = vrot.lane.b32.xlu0 %v921, 112
      %v1036 = vpop.permute.xlu0 %1035
      %v1038 = vunpack.c.l.s4 1983009808
      %v1039 = vunpack.c.0.s8 %v1038
      %v1040 = vlaneseq
      %v1041 = vshrl.u32 %v1040, 7
      %v1042 = vsub.s32 %v1039, %v1041
      %v1043 = vrot.slane %v921, %v1042
      %v1046 = vunpack.c.l.s4 1983009808
      %v1047 = vunpack.c.0.s8 %v1046
      %v1048 = vlaneseq
      %v1049 = vshrl.u32 %v1048, 7
      %v1050 = vsub.s32 %v1047, %v1049
      %v1051 = vrot.slane %v1036, %v1050
      %v1052 = vcombine.low %v1043, %v1051
      %v1053 = vcombine.high %v1043, %v1051
      %v1055 = vunpack.c.l.s4 1934713408
      %v1056 = vunpack.c.0.s8 %v1055
      %v1057 = vlaneseq
      %v1058 = vshrl.u32 %v1057, 7
      %v1059 = vsub.s32 %v1056, %v1058
      %v1060 = vrot.slane %v1052, %v1059
      %v1062 = vunpack.c.l.s4 1934713408
      %v1063 = vunpack.c.0.s8 %v1062
      %v1064 = vlaneseq
      %v1065 = vshrl.u32 %v1064, 7
      %v1066 = vsub.s32 %v1063, %v1065
      %v1067 = vrot.slane %v1053, %v1066
      %v1068 = vcombine.high %v1060, 0.0
      %v1069 = vcombine.high %v1067, 0.0
      %1071 = vrot.lane.b32.xlu0 %v973, 112
      %v1072 = vpop.permute.xlu0 %1071
      %v1074 = vunpack.c.l.s4 1983009808
      %v1075 = vunpack.c.0.s8 %v1074
      %v1076 = vlaneseq
      %v1077 = vshrl.u32 %v1076, 7
      %v1078 = vsub.s32 %v1075, %v1077
      %v1079 = vrot.slane %v973, %v1078
      %v1082 = vunpack.c.l.s4 1983009808
      %v1083 = vunpack.c.0.s8 %v1082
      %v1084 = vlaneseq
      %v1085 = vshrl.u32 %v1084, 7
      %v1086 = vsub.s32 %v1083, %v1085
      %v1087 = vrot.slane %v1072, %v1086
      %v1088 = vcombine.low %v1079, %v1087
      %v1089 = vcombine.high %v1079, %v1087
      %v1091 = vunpack.c.l.s4 1934713408
      %v1092 = vunpack.c.0.s8 %v1091
      %v1093 = vlaneseq
      %v1094 = vshrl.u32 %v1093, 7
      %v1095 = vsub.s32 %v1092, %v1094
      %v1096 = vrot.slane %v1088, %v1095
      %v1098 = vunpack.c.l.s4 1934713408
      %v1099 = vunpack.c.0.s8 %v1098
      %v1100 = vlaneseq
      %v1101 = vshrl.u32 %v1100, 7
      %v1102 = vsub.s32 %v1099, %v1101
      %v1103 = vrot.slane %v1089, %v1102
      %v1104 = vcombine.high %v1096, 0.0
      %v1105 = vcombine.high %v1103, 0.0
      %v1106 = vpack.c.bf16 %v1096, %v1096
      %v1107 = vpack.c.bf16 %v1104, %v1104
      %v1108 = vpack.c.bf16 %v1103, %v1103
      %v1109 = vpack.c.bf16 %v1105, %v1105
      %1111 = vrot.lane.b32.xlu0 %v1029, 112
      %v1112 = vpop.permute.xlu0 %1111
      %v1114 = vunpack.c.l.s4 1983009808
      %v1115 = vunpack.c.0.s8 %v1114
      %v1116 = vlaneseq
      %v1117 = vshrl.u32 %v1116, 7
      %v1118 = vsub.s32 %v1115, %v1117
      %v1119 = vrot.slane %v1029, %v1118
      %v1122 = vunpack.c.l.s4 1983009808
      %v1123 = vunpack.c.0.s8 %v1122
      %v1124 = vlaneseq
      %v1125 = vshrl.u32 %v1124, 7
      %v1126 = vsub.s32 %v1123, %v1125
      %v1127 = vrot.slane %v1112, %v1126
      %v1128 = vcombine.low %v1119, %v1127
      %v1129 = vcombine.high %v1119, %v1127
      %v1131 = vunpack.c.l.s4 1934713408
      %v1132 = vunpack.c.0.s8 %v1131
      %v1133 = vlaneseq
      %v1134 = vshrl.u32 %v1133, 7
      %v1135 = vsub.s32 %v1132, %v1134
      %v1136 = vrot.slane %v1128, %v1135
      %v1138 = vunpack.c.l.s4 1934713408
      %v1139 = vunpack.c.0.s8 %v1138
      %v1140 = vlaneseq
      %v1141 = vshrl.u32 %v1140, 7
      %v1142 = vsub.s32 %v1139, %v1141
      %v1143 = vrot.slane %v1129, %v1142
      %v1144 = vcombine.high %v1136, 0.0
      %v1145 = vcombine.high %v1143, 0.0
      %v1146 = vpack.c.bf16 %v1136, %v1136
      %v1147 = vpack.c.bf16 %v1144, %v1144
      %v1148 = vpack.c.bf16 %v1143, %v1143
      %v1149 = vpack.c.bf16 %v1145, %v1145
      %v1150 = vpack.c.bf16 %v1060, %v1060
      %v1151 = vpack.c.bf16 %v1067, %v1067
      %v1152 = vcombine.low %v1150, %v1151
      %v1154 = vunpack.c.l.s4 1934713408
      %v1155 = vunpack.c.0.s8 %v1154
      %v1156 = vlaneseq
      %v1157 = vshrl.u32 %v1156, 7
      %v1158 = vsub.s32 %v1155, %v1157
      %v1159 = vrot.slane %v1152, %v1158
      %v1160 = vpack.c.bf16 %v1068, %v1068
      %v1161 = vpack.c.bf16 %v1069, %v1069
      %v1162 = vcombine.low %v1160, %v1161
      %v1164 = vunpack.c.l.s4 1934713408
      %v1165 = vunpack.c.0.s8 %v1164
      %v1166 = vlaneseq
      %v1167 = vshrl.u32 %v1166, 7
      %v1168 = vsub.s32 %v1165, %v1167
      %v1169 = vrot.slane %v1162, %v1168
      %v1172 = vpack.i.b16 %v1169, %v1159
      %v1173 = vshrl.u32 %v1159, 16
      %v1174 = vshrl.u32 %v1169, 16
      %v1175 = vpack.i.b16 %v1174, %v1173
      %1176 = vxpose.xlu0.c.b16.start [1/8] %v1106, 128
      %1177 = vxpose.xlu0.c.b16.cont [2/8] 0, 128
      %1178 = vxpose.xlu0.c.b16.cont [3/8] 0, 128
      %1179 = vxpose.xlu0.c.b16.cont [4/8] 0, 128
      %1180 = vxpose.xlu0.c.b16.cont [5/8] 0, 128
      %1181 = vxpose.xlu0.c.b16.cont [6/8] 0, 128
      %1182 = vxpose.xlu0.c.b16.cont [7/8] 0, 128
      %1183 = vxpose.xlu0.c.b16.end [8/8] 0, 128
      %v1184 = vpop.trf.xlu0
      %v1185 = vpop.trf.xlu0
      %v1186 = vpop.trf.xlu0
      %v1187 = vpop.trf.xlu0
      %v1188 = vpop.trf.xlu0
      %v1189 = vpop.trf.xlu0
      %v1190 = vpop.trf.xlu0
      %v1191 = vpop.trf.xlu0
      %1192 = vxpose.xlu0.c.b16.start [1/8] %v1107, 128
      %1193 = vxpose.xlu0.c.b16.cont [2/8] 0, 128
      %1194 = vxpose.xlu0.c.b16.cont [3/8] 0, 128
      %1195 = vxpose.xlu0.c.b16.cont [4/8] 0, 128
      %1196 = vxpose.xlu0.c.b16.cont [5/8] 0, 128
      %1197 = vxpose.xlu0.c.b16.cont [6/8] 0, 128
      %1198 = vxpose.xlu0.c.b16.cont [7/8] 0, 128
      %1199 = vxpose.xlu0.c.b16.end [8/8] 0, 128
      %v1200 = vpop.trf.xlu0
      %v1201 = vpop.trf.xlu0
      %v1202 = vpop.trf.xlu0
      %v1203 = vpop.trf.xlu0
      %v1204 = vpop.trf.xlu0
      %v1205 = vpop.trf.xlu0
      %v1206 = vpop.trf.xlu0
      %v1207 = vpop.trf.xlu0
      %1208 = vxpose.xlu0.c.b16.start [1/8] %v1108, 128
      %1209 = vxpose.xlu0.c.b16.cont [2/8] 0, 128
      %1210 = vxpose.xlu0.c.b16.cont [3/8] 0, 128
      %1211 = vxpose.xlu0.c.b16.cont [4/8] 0, 128
      %1212 = vxpose.xlu0.c.b16.cont [5/8] 0, 128
      %1213 = vxpose.xlu0.c.b16.cont [6/8] 0, 128
      %1214 = vxpose.xlu0.c.b16.cont [7/8] 0, 128
      %1215 = vxpose.xlu0.c.b16.end [8/8] 0, 128
      %v1216 = vpop.trf.xlu0
      %v1217 = vpop.trf.xlu0
      %v1218 = vpop.trf.xlu0
      %v1219 = vpop.trf.xlu0
      %v1220 = vpop.trf.xlu0
      %v1221 = vpop.trf.xlu0
      %v1222 = vpop.trf.xlu0
      %v1223 = vpop.trf.xlu0
      %1224 = vxpose.xlu0.c.b16.start [1/8] %v1109, 128
      %1225 = vxpose.xlu0.c.b16.cont [2/8] 0, 128
      %1226 = vxpose.xlu0.c.b16.cont [3/8] 0, 128
      %1227 = vxpose.xlu0.c.b16.cont [4/8] 0, 128
      %1228 = vxpose.xlu0.c.b16.cont [5/8] 0, 128
      %1229 = vxpose.xlu0.c.b16.cont [6/8] 0, 128
      %1230 = vxpose.xlu0.c.b16.cont [7/8] 0, 128
      %1231 = vxpose.xlu0.c.b16.end [8/8] 0, 128
      %v1232 = vpop.trf.xlu0
      %v1233 = vpop.trf.xlu0
      %v1234 = vpop.trf.xlu0
      %v1235 = vpop.trf.xlu0
      %v1236 = vpop.trf.xlu0
      %v1237 = vpop.trf.xlu0
      %v1238 = vpop.trf.xlu0
      %v1239 = vpop.trf.xlu0
      %v1242 = vpack.i.b16 %v1200, %v1184
      %v1244 = vshrl.u32 %v1184, 16
      %v1245 = vshrl.u32 %v1200, 16
      %v1246 = vpack.i.b16 %v1245, %v1244
      %v1250 = vpack.i.b16 %v1232, %v1216
      %v1252 = vshrl.u32 %v1216, 16
      %v1253 = vshrl.u32 %v1232, 16
      %v1254 = vpack.i.b16 %v1253, %v1252
      %v1257 = vpack.i.b16 0, 0
      %v1259 = vshrl.u32 0, 16
      %v1260 = vpack.i.b16 %v1259, %v1259
      %v1262 = vcombine.high %v1242, %v1257
      %v1264 = vunpack.c.l.s4 1983009808
      %v1265 = vunpack.c.0.s8 %v1264
      %v1266 = vlaneseq
      %v1267 = vshrl.u32 %v1266, 7
      %v1268 = vsub.s32 %v1265, %v1267
      %v1269 = vrot.slane %v1242, %v1268
      %v1271 = vunpack.c.l.s4 1983009808
      %v1272 = vunpack.c.0.s8 %v1271
      %v1273 = vlaneseq
      %v1274 = vshrl.u32 %v1273, 7
      %v1275 = vsub.s32 %v1272, %v1274
      %v1276 = vrot.slane %v1262, %v1275
      %v1277 = vcombine.high %v1250, %v1257
      %v1279 = vunpack.c.l.s4 1983009808
      %v1280 = vunpack.c.0.s8 %v1279
      %v1281 = vlaneseq
      %v1282 = vshrl.u32 %v1281, 7
      %v1283 = vsub.s32 %v1280, %v1282
      %v1284 = vrot.slane %v1250, %v1283
      %v1286 = vunpack.c.l.s4 1983009808
      %v1287 = vunpack.c.0.s8 %v1286
      %v1288 = vlaneseq
      %v1289 = vshrl.u32 %v1288, 7
      %v1290 = vsub.s32 %v1287, %v1289
      %v1291 = vrot.slane %v1277, %v1290
      %v1292 = vcombine.low %v1269, %v1284
      %v1293 = vcombine.high %v1269, %v1284
      %v1295 = vunpack.c.l.s4 1934713408
      %v1296 = vunpack.c.0.s8 %v1295
      %v1297 = vlaneseq
      %v1298 = vshrl.u32 %v1297, 7
      %v1299 = vsub.s32 %v1296, %v1298
      %v1300 = vrot.slane %v1292, %v1299
      %v1302 = vunpack.c.l.s4 1934713408
      %v1303 = vunpack.c.0.s8 %v1302
      %v1304 = vlaneseq
      %v1305 = vshrl.u32 %v1304, 7
      %v1306 = vsub.s32 %v1303, %v1305
      %v1307 = vrot.slane %v1293, %v1306
      %v1308 = vcombine.low %v1276, %v1291
      %v1309 = vcombine.high %v1276, %v1291
      %v1311 = vunpack.c.l.s4 1934713408
      %v1312 = vunpack.c.0.s8 %v1311
      %v1313 = vlaneseq
      %v1314 = vshrl.u32 %v1313, 7
      %v1315 = vsub.s32 %v1312, %v1314
      %v1316 = vrot.slane %v1308, %v1315
      %v1318 = vunpack.c.l.s4 1934713408
      %v1319 = vunpack.c.0.s8 %v1318
      %v1320 = vlaneseq
      %v1321 = vshrl.u32 %v1320, 7
      %v1322 = vsub.s32 %v1319, %v1321
      %v1323 = vrot.slane %v1309, %v1322
      %v1324 = vcombine.high %v1300, 0
      %v1325 = vcombine.high %v1307, 0
      %v1326 = vcombine.high %v1316, 0
      %v1327 = vcombine.high %v1323, 0
      %v1328 = vcombine.high %v1246, %v1260
      %v1330 = vunpack.c.l.s4 1983009808
      %v1331 = vunpack.c.0.s8 %v1330
      %v1332 = vlaneseq
      %v1333 = vshrl.u32 %v1332, 7
      %v1334 = vsub.s32 %v1331, %v1333
      %v1335 = vrot.slane %v1246, %v1334
      %v1337 = vunpack.c.l.s4 1983009808
      %v1338 = vunpack.c.0.s8 %v1337
      %v1339 = vlaneseq
      %v1340 = vshrl.u32 %v1339, 7
      %v1341 = vsub.s32 %v1338, %v1340
      %v1342 = vrot.slane %v1328, %v1341
      %v1343 = vcombine.high %v1254, %v1260
      %v1345 = vunpack.c.l.s4 1983009808
      %v1346 = vunpack.c.0.s8 %v1345
      %v1347 = vlaneseq
      %v1348 = vshrl.u32 %v1347, 7
      %v1349 = vsub.s32 %v1346, %v1348
      %v1350 = vrot.slane %v1254, %v1349
      %v1352 = vunpack.c.l.s4 1983009808
      %v1353 = vunpack.c.0.s8 %v1352
      %v1354 = vlaneseq
      %v1355 = vshrl.u32 %v1354, 7
      %v1356 = vsub.s32 %v1353, %v1355
      %v1357 = vrot.slane %v1343, %v1356
      %v1358 = vcombine.low %v1335, %v1350
      %v1359 = vcombine.high %v1335, %v1350
      %v1361 = vunpack.c.l.s4 1934713408
      %v1362 = vunpack.c.0.s8 %v1361
      %v1363 = vlaneseq
      %v1364 = vshrl.u32 %v1363, 7
      %v1365 = vsub.s32 %v1362, %v1364
      %v1366 = vrot.slane %v1358, %v1365
      %v1368 = vunpack.c.l.s4 1934713408
      %v1369 = vunpack.c.0.s8 %v1368
      %v1370 = vlaneseq
      %v1371 = vshrl.u32 %v1370, 7
      %v1372 = vsub.s32 %v1369, %v1371
      %v1373 = vrot.slane %v1359, %v1372
      %v1374 = vcombine.low %v1342, %v1357
      %v1375 = vcombine.high %v1342, %v1357
      %v1377 = vunpack.c.l.s4 1934713408
      %v1378 = vunpack.c.0.s8 %v1377
      %v1379 = vlaneseq
      %v1380 = vshrl.u32 %v1379, 7
      %v1381 = vsub.s32 %v1378, %v1380
      %v1382 = vrot.slane %v1374, %v1381
      %v1384 = vunpack.c.l.s4 1934713408
      %v1385 = vunpack.c.0.s8 %v1384
      %v1386 = vlaneseq
      %v1387 = vshrl.u32 %v1386, 7
      %v1388 = vsub.s32 %v1385, %v1387
      %v1389 = vrot.slane %v1375, %v1388
      %v1390 = vcombine.high %v1366, 0
      %v1391 = vcombine.high %v1373, 0
      %v1392 = vcombine.high %v1382, 0
      %v1393 = vcombine.high %v1389, 0
      %1394 = vxpose.xlu0.c.b16.start [1/8] %v1300, 128
      %1395 = vxpose.xlu0.c.b16.cont [2/8] 0, 128
      %1396 = vxpose.xlu0.c.b16.cont [3/8] 0, 128
      %1397 = vxpose.xlu0.c.b16.cont [4/8] 0, 128
      %1398 = vxpose.xlu0.c.b16.cont [5/8] 0, 128
      %1399 = vxpose.xlu0.c.b16.cont [6/8] 0, 128
      %1400 = vxpose.xlu0.c.b16.cont [7/8] 0, 128
      %1401 = vxpose.xlu0.c.b16.end [8/8] 0, 128
      %v1402 = vpop.trf.xlu0
      %v1403 = vpop.trf.xlu0
      %v1404 = vpop.trf.xlu0
      %v1405 = vpop.trf.xlu0
      %v1406 = vpop.trf.xlu0
      %v1407 = vpop.trf.xlu0
      %v1408 = vpop.trf.xlu0
      %v1409 = vpop.trf.xlu0
      %1410 = vxpose.xlu0.c.b16.start [1/8] %v1366, 128
      %1411 = vxpose.xlu0.c.b16.cont [2/8] 0, 128
      %1412 = vxpose.xlu0.c.b16.cont [3/8] 0, 128
      %1413 = vxpose.xlu0.c.b16.cont [4/8] 0, 128
      %1414 = vxpose.xlu0.c.b16.cont [5/8] 0, 128
      %1415 = vxpose.xlu0.c.b16.cont [6/8] 0, 128
      %1416 = vxpose.xlu0.c.b16.cont [7/8] 0, 128
      %1417 = vxpose.xlu0.c.b16.end [8/8] 0, 128
      %v1418 = vpop.trf.xlu0
      %v1419 = vpop.trf.xlu0
      %v1420 = vpop.trf.xlu0
      %v1421 = vpop.trf.xlu0
      %v1422 = vpop.trf.xlu0
      %v1423 = vpop.trf.xlu0
      %v1424 = vpop.trf.xlu0
      %v1425 = vpop.trf.xlu0
      %1426 = vxpose.xlu0.c.b16.start [1/8] %v1324, 128
      %1427 = vxpose.xlu0.c.b16.cont [2/8] 0, 128
      %1428 = vxpose.xlu0.c.b16.cont [3/8] 0, 128
      %1429 = vxpose.xlu0.c.b16.cont [4/8] 0, 128
      %1430 = vxpose.xlu0.c.b16.cont [5/8] 0, 128
      %1431 = vxpose.xlu0.c.b16.cont [6/8] 0, 128
      %1432 = vxpose.xlu0.c.b16.cont [7/8] 0, 128
      %1433 = vxpose.xlu0.c.b16.end [8/8] 0, 128
      %v1434 = vpop.trf.xlu0
      %v1435 = vpop.trf.xlu0
      %v1436 = vpop.trf.xlu0
      %v1437 = vpop.trf.xlu0
      %v1438 = vpop.trf.xlu0
      %v1439 = vpop.trf.xlu0
      %v1440 = vpop.trf.xlu0
      %v1441 = vpop.trf.xlu0
      %1442 = vxpose.xlu0.c.b16.start [1/8] %v1390, 128
      %1443 = vxpose.xlu0.c.b16.cont [2/8] 0, 128
      %1444 = vxpose.xlu0.c.b16.cont [3/8] 0, 128
      %1445 = vxpose.xlu0.c.b16.cont [4/8] 0, 128
      %1446 = vxpose.xlu0.c.b16.cont [5/8] 0, 128
      %1447 = vxpose.xlu0.c.b16.cont [6/8] 0, 128
      %1448 = vxpose.xlu0.c.b16.cont [7/8] 0, 128
      %1449 = vxpose.xlu0.c.b16.end [8/8] 0, 128
      %v1450 = vpop.trf.xlu0
      %v1451 = vpop.trf.xlu0
      %v1452 = vpop.trf.xlu0
      %v1453 = vpop.trf.xlu0
      %v1454 = vpop.trf.xlu0
      %v1455 = vpop.trf.xlu0
      %v1456 = vpop.trf.xlu0
      %v1457 = vpop.trf.xlu0
      %1458 = vxpose.xlu0.c.b16.start [1/8] %v1307, 128
      %1459 = vxpose.xlu0.c.b16.cont [2/8] 0, 128
      %1460 = vxpose.xlu0.c.b16.cont [3/8] 0, 128
      %1461 = vxpose.xlu0.c.b16.cont [4/8] 0, 128
      %1462 = vxpose.xlu0.c.b16.cont [5/8] 0, 128
      %1463 = vxpose.xlu0.c.b16.cont [6/8] 0, 128
      %1464 = vxpose.xlu0.c.b16.cont [7/8] 0, 128
      %1465 = vxpose.xlu0.c.b16.end [8/8] 0, 128
      %v1466 = vpop.trf.xlu0
      %v1467 = vpop.trf.xlu0
      %v1468 = vpop.trf.xlu0
      %v1469 = vpop.trf.xlu0
      %v1470 = vpop.trf.xlu0
      %v1471 = vpop.trf.xlu0
      %v1472 = vpop.trf.xlu0
      %v1473 = vpop.trf.xlu0
      %1474 = vxpose.xlu0.c.b16.start [1/8] %v1373, 128
      %1475 = vxpose.xlu0.c.b16.cont [2/8] 0, 128
      %1476 = vxpose.xlu0.c.b16.cont [3/8] 0, 128
      %1477 = vxpose.xlu0.c.b16.cont [4/8] 0, 128
      %1478 = vxpose.xlu0.c.b16.cont [5/8] 0, 128
      %1479 = vxpose.xlu0.c.b16.cont [6/8] 0, 128
      %1480 = vxpose.xlu0.c.b16.cont [7/8] 0, 128
      %1481 = vxpose.xlu0.c.b16.end [8/8] 0, 128
      %v1482 = vpop.trf.xlu0
      %v1483 = vpop.trf.xlu0
      %v1484 = vpop.trf.xlu0
      %v1485 = vpop.trf.xlu0
      %v1486 = vpop.trf.xlu0
      %v1487 = vpop.trf.xlu0
      %v1488 = vpop.trf.xlu0
      %v1489 = vpop.trf.xlu0
      %1490 = vxpose.xlu0.c.b16.start [1/8] %v1325, 128
      %1491 = vxpose.xlu0.c.b16.cont [2/8] 0, 128
      %1492 = vxpose.xlu0.c.b16.cont [3/8] 0, 128
      %1493 = vxpose.xlu0.c.b16.cont [4/8] 0, 128
      %1494 = vxpose.xlu0.c.b16.cont [5/8] 0, 128
      %1495 = vxpose.xlu0.c.b16.cont [6/8] 0, 128
      %1496 = vxpose.xlu0.c.b16.cont [7/8] 0, 128
      %1497 = vxpose.xlu0.c.b16.end [8/8] 0, 128
      %v1498 = vpop.trf.xlu0
      %v1499 = vpop.trf.xlu0
      %v1500 = vpop.trf.xlu0
      %v1501 = vpop.trf.xlu0
      %v1502 = vpop.trf.xlu0
      %v1503 = vpop.trf.xlu0
      %v1504 = vpop.trf.xlu0
      %v1505 = vpop.trf.xlu0
      %1506 = vxpose.xlu0.c.b16.start [1/8] %v1391, 128
      %1507 = vxpose.xlu0.c.b16.cont [2/8] 0, 128
      %1508 = vxpose.xlu0.c.b16.cont [3/8] 0, 128
      %1509 = vxpose.xlu0.c.b16.cont [4/8] 0, 128
      %1510 = vxpose.xlu0.c.b16.cont [5/8] 0, 128
      %1511 = vxpose.xlu0.c.b16.cont [6/8] 0, 128
      %1512 = vxpose.xlu0.c.b16.cont [7/8] 0, 128
      %1513 = vxpose.xlu0.c.b16.end [8/8] 0, 128
      %v1514 = vpop.trf.xlu0
      %v1515 = vpop.trf.xlu0
      %v1516 = vpop.trf.xlu0
      %v1517 = vpop.trf.xlu0
      %v1518 = vpop.trf.xlu0
      %v1519 = vpop.trf.xlu0
      %v1520 = vpop.trf.xlu0
      %v1521 = vpop.trf.xlu0
      %1522 = vxpose.xlu0.c.b16.start [1/8] %v1316, 128
      %1523 = vxpose.xlu0.c.b16.cont [2/8] 0, 128
      %1524 = vxpose.xlu0.c.b16.cont [3/8] 0, 128
      %1525 = vxpose.xlu0.c.b16.cont [4/8] 0, 128
      %1526 = vxpose.xlu0.c.b16.cont [5/8] 0, 128
      %1527 = vxpose.xlu0.c.b16.cont [6/8] 0, 128
      %1528 = vxpose.xlu0.c.b16.cont [7/8] 0, 128
      %1529 = vxpose.xlu0.c.b16.end [8/8] 0, 128
      %v1530 = vpop.trf.xlu0
      %v1531 = vpop.trf.xlu0
      %v1532 = vpop.trf.xlu0
      %v1533 = vpop.trf.xlu0
      %v1534 = vpop.trf.xlu0
      %v1535 = vpop.trf.xlu0
      %v1536 = vpop.trf.xlu0
      %v1537 = vpop.trf.xlu0
      %1538 = vxpose.xlu0.c.b16.start [1/8] %v1382, 128
      %1539 = vxpose.xlu0.c.b16.cont [2/8] 0, 128
      %1540 = vxpose.xlu0.c.b16.cont [3/8] 0, 128
      %1541 = vxpose.xlu0.c.b16.cont [4/8] 0, 128
      %1542 = vxpose.xlu0.c.b16.cont [5/8] 0, 128
      %1543 = vxpose.xlu0.c.b16.cont [6/8] 0, 128
      %1544 = vxpose.xlu0.c.b16.cont [7/8] 0, 128
      %1545 = vxpose.xlu0.c.b16.end [8/8] 0, 128
      %v1546 = vpop.trf.xlu0
      %v1547 = vpop.trf.xlu0
      %v1548 = vpop.trf.xlu0
      %v1549 = vpop.trf.xlu0
      %v1550 = vpop.trf.xlu0
      %v1551 = vpop.trf.xlu0
      %v1552 = vpop.trf.xlu0
      %v1553 = vpop.trf.xlu0
      %1554 = vxpose.xlu0.c.b16.start [1/8] %v1326, 128
      %1555 = vxpose.xlu0.c.b16.cont [2/8] 0, 128
      %1556 = vxpose.xlu0.c.b16.cont [3/8] 0, 128
      %1557 = vxpose.xlu0.c.b16.cont [4/8] 0, 128
      %1558 = vxpose.xlu0.c.b16.cont [5/8] 0, 128
      %1559 = vxpose.xlu0.c.b16.cont [6/8] 0, 128
      %1560 = vxpose.xlu0.c.b16.cont [7/8] 0, 128
      %1561 = vxpose.xlu0.c.b16.end [8/8] 0, 128
      %v1562 = vpop.trf.xlu0
      %v1563 = vpop.trf.xlu0
      %v1564 = vpop.trf.xlu0
      %v1565 = vpop.trf.xlu0
      %v1566 = vpop.trf.xlu0
      %v1567 = vpop.trf.xlu0
      %v1568 = vpop.trf.xlu0
      %v1569 = vpop.trf.xlu0
      %1570 = vxpose.xlu0.c.b16.start [1/8] %v1392, 128
      %1571 = vxpose.xlu0.c.b16.cont [2/8] 0, 128
      %1572 = vxpose.xlu0.c.b16.cont [3/8] 0, 128
      %1573 = vxpose.xlu0.c.b16.cont [4/8] 0, 128
      %1574 = vxpose.xlu0.c.b16.cont [5/8] 0, 128
      %1575 = vxpose.xlu0.c.b16.cont [6/8] 0, 128
      %1576 = vxpose.xlu0.c.b16.cont [7/8] 0, 128
      %1577 = vxpose.xlu0.c.b16.end [8/8] 0, 128
      %v1578 = vpop.trf.xlu0
      %v1579 = vpop.trf.xlu0
      %v1580 = vpop.trf.xlu0
      %v1581 = vpop.trf.xlu0
      %v1582 = vpop.trf.xlu0
      %v1583 = vpop.trf.xlu0
      %v1584 = vpop.trf.xlu0
      %v1585 = vpop.trf.xlu0
      %1586 = vxpose.xlu0.c.b16.start [1/8] %v1323, 128
      %1587 = vxpose.xlu0.c.b16.cont [2/8] 0, 128
      %1588 = vxpose.xlu0.c.b16.cont [3/8] 0, 128
      %1589 = vxpose.xlu0.c.b16.cont [4/8] 0, 128
      %1590 = vxpose.xlu0.c.b16.cont [5/8] 0, 128
      %1591 = vxpose.xlu0.c.b16.cont [6/8] 0, 128
      %1592 = vxpose.xlu0.c.b16.cont [7/8] 0, 128
      %1593 = vxpose.xlu0.c.b16.end [8/8] 0, 128
      %v1594 = vpop.trf.xlu0
      %v1595 = vpop.trf.xlu0
      %v1596 = vpop.trf.xlu0
      %v1597 = vpop.trf.xlu0
      %v1598 = vpop.trf.xlu0
      %v1599 = vpop.trf.xlu0
      %v1600 = vpop.trf.xlu0
      %v1601 = vpop.trf.xlu0
      %1602 = vxpose.xlu0.c.b16.start [1/8] %v1389, 128
      %1603 = vxpose.xlu0.c.b16.cont [2/8] 0, 128
      %1604 = vxpose.xlu0.c.b16.cont [3/8] 0, 128
      %1605 = vxpose.xlu0.c.b16.cont [4/8] 0, 128
      %1606 = vxpose.xlu0.c.b16.cont [5/8] 0, 128
      %1607 = vxpose.xlu0.c.b16.cont [6/8] 0, 128
      %1608 = vxpose.xlu0.c.b16.cont [7/8] 0, 128
      %1609 = vxpose.xlu0.c.b16.end [8/8] 0, 128
      %v1610 = vpop.trf.xlu0
      %v1611 = vpop.trf.xlu0
      %v1612 = vpop.trf.xlu0
      %v1613 = vpop.trf.xlu0
      %v1614 = vpop.trf.xlu0
      %v1615 = vpop.trf.xlu0
      %v1616 = vpop.trf.xlu0
      %v1617 = vpop.trf.xlu0
      %1618 = vxpose.xlu0.c.b16.start [1/8] %v1327, 128
      %1619 = vxpose.xlu0.c.b16.cont [2/8] 0, 128
      %1620 = vxpose.xlu0.c.b16.cont [3/8] 0, 128
      %1621 = vxpose.xlu0.c.b16.cont [4/8] 0, 128
      %1622 = vxpose.xlu0.c.b16.cont [5/8] 0, 128
      %1623 = vxpose.xlu0.c.b16.cont [6/8] 0, 128
      %1624 = vxpose.xlu0.c.b16.cont [7/8] 0, 128
      %1625 = vxpose.xlu0.c.b16.end [8/8] 0, 128
      %v1626 = vpop.trf.xlu0
      %v1627 = vpop.trf.xlu0
      %v1628 = vpop.trf.xlu0
      %v1629 = vpop.trf.xlu0
      %v1630 = vpop.trf.xlu0
      %v1631 = vpop.trf.xlu0
      %v1632 = vpop.trf.xlu0
      %v1633 = vpop.trf.xlu0
      %1634 = vxpose.xlu0.c.b16.start [1/8] %v1393, 128
      %1635 = vxpose.xlu0.c.b16.cont [2/8] 0, 128
      %1636 = vxpose.xlu0.c.b16.cont [3/8] 0, 128
      %1637 = vxpose.xlu0.c.b16.cont [4/8] 0, 128
      %1638 = vxpose.xlu0.c.b16.cont [5/8] 0, 128
      %1639 = vxpose.xlu0.c.b16.cont [6/8] 0, 128
      %1640 = vxpose.xlu0.c.b16.cont [7/8] 0, 128
      %1641 = vxpose.xlu0.c.b16.end [8/8] 0, 128
      %v1642 = vpop.trf.xlu0
      %v1643 = vpop.trf.xlu0
      %v1644 = vpop.trf.xlu0
      %v1645 = vpop.trf.xlu0
      %v1646 = vpop.trf.xlu0
      %v1647 = vpop.trf.xlu0
      %v1648 = vpop.trf.xlu0
      %v1649 = vpop.trf.xlu0
      %v1650 = vcombine.low %v1402, %v1466
      %v1652 = vunpack.c.l.s4 1983009808
      %v1653 = vunpack.c.0.s8 %v1652
      %v1654 = vlaneseq
      %v1655 = vshrl.u32 %v1654, 7
      %v1656 = vsub.s32 %v1653, %v1655
      %v1657 = vrot.slane %v1650, %v1656
      %v1658 = vcombine.low %v1434, %v1498
      %v1660 = vunpack.c.l.s4 1983009808
      %v1661 = vunpack.c.0.s8 %v1660
      %v1662 = vlaneseq
      %v1663 = vshrl.u32 %v1662, 7
      %v1664 = vsub.s32 %v1661, %v1663
      %v1665 = vrot.slane %v1658, %v1664
      %v1666 = vcombine.low %v1530, %v1594
      %v1668 = vunpack.c.l.s4 1983009808
      %v1669 = vunpack.c.0.s8 %v1668
      %v1670 = vlaneseq
      %v1671 = vshrl.u32 %v1670, 7
      %v1672 = vsub.s32 %v1669, %v1671
      %v1673 = vrot.slane %v1666, %v1672
      %v1674 = vcombine.low %v1562, %v1626
      %v1676 = vunpack.c.l.s4 1983009808
      %v1677 = vunpack.c.0.s8 %v1676
      %v1678 = vlaneseq
      %v1679 = vshrl.u32 %v1678, 7
      %v1680 = vsub.s32 %v1677, %v1679
      %v1681 = vrot.slane %v1674, %v1680
      %v1682 = vcombine.low %v1657, %v1665
      %v1684 = vunpack.c.l.s4 1934713408
      %v1685 = vunpack.c.0.s8 %v1684
      %v1686 = vlaneseq
      %v1687 = vshrl.u32 %v1686, 7
      %v1688 = vsub.s32 %v1685, %v1687
      %v1689 = vrot.slane %v1682, %v1688
      %v1690 = vcombine.low %v1673, %v1681
      %v1692 = vunpack.c.l.s4 1934713408
      %v1693 = vunpack.c.0.s8 %v1692
      %v1694 = vlaneseq
      %v1695 = vshrl.u32 %v1694, 7
      %v1696 = vsub.s32 %v1693, %v1695
      %v1697 = vrot.slane %v1690, %v1696
      %v1698 = vcombine.low %v1689, %v1697
      %v1699 = vcombine.low %v1418, %v1482
      %v1701 = vunpack.c.l.s4 1983009808
      %v1702 = vunpack.c.0.s8 %v1701
      %v1703 = vlaneseq
      %v1704 = vshrl.u32 %v1703, 7
      %v1705 = vsub.s32 %v1702, %v1704
      %v1706 = vrot.slane %v1699, %v1705
      %v1707 = vcombine.low %v1450, %v1514
      %v1709 = vunpack.c.l.s4 1983009808
      %v1710 = vunpack.c.0.s8 %v1709
      %v1711 = vlaneseq
      %v1712 = vshrl.u32 %v1711, 7
      %v1713 = vsub.s32 %v1710, %v1712
      %v1714 = vrot.slane %v1707, %v1713
      %v1715 = vcombine.low %v1546, %v1610
      %v1717 = vunpack.c.l.s4 1983009808
      %v1718 = vunpack.c.0.s8 %v1717
      %v1719 = vlaneseq
      %v1720 = vshrl.u32 %v1719, 7
      %v1721 = vsub.s32 %v1718, %v1720
      %v1722 = vrot.slane %v1715, %v1721
      %v1723 = vcombine.low %v1578, %v1642
      %v1725 = vunpack.c.l.s4 1983009808
      %v1726 = vunpack.c.0.s8 %v1725
      %v1727 = vlaneseq
      %v1728 = vshrl.u32 %v1727, 7
      %v1729 = vsub.s32 %v1726, %v1728
      %v1730 = vrot.slane %v1723, %v1729
      %v1731 = vcombine.low %v1706, %v1714
      %v1733 = vunpack.c.l.s4 1934713408
      %v1734 = vunpack.c.0.s8 %v1733
      %v1735 = vlaneseq
      %v1736 = vshrl.u32 %v1735, 7
      %v1737 = vsub.s32 %v1734, %v1736
      %v1738 = vrot.slane %v1731, %v1737
      %v1739 = vcombine.low %v1722, %v1730
      %v1741 = vunpack.c.l.s4 1934713408
      %v1742 = vunpack.c.0.s8 %v1741
      %v1743 = vlaneseq
      %v1744 = vshrl.u32 %v1743, 7
      %v1745 = vsub.s32 %v1742, %v1744
      %v1746 = vrot.slane %v1739, %v1745
      %v1747 = vcombine.low %v1738, %v1746
      %v1750 = vpack.i.b16 %v1747, %v1698
      %v1752 = vshrl.u32 %v1698, 16
      %v1753 = vshrl.u32 %v1747, 16
      %v1754 = vpack.i.b16 %v1753, %v1752
      %vm1756 = vcmask 130048
      %v1758 = vsel %vm1756, %v1172, 0
      %1760 = vmatprep.subr.bf16.mxu0 0
      %1761 = vmatpush1.bf16.msra.mxu0 %v1750
      %1762 = vmatprep.subr.bf16.mxu0 0
      %1763 = vmatpush1.bf16.msra.mxu0 0
      %1764 = vmatprep.subr.bf16.mxu0 0
      %1765 = vmatpush1.bf16.msra.mxu0 0
      %1766 = vmatprep.subr.bf16.mxu0 0
      %1767 = vmatpush1.bf16.msra.mxu0 0
      %1768 = vmatprep.subr.bf16.mxu0 0
      %1769 = vmatpush1.bf16.msra.mxu0 0
      %1770 = vmatprep.subr.bf16.mxu0 0
      %1771 = vmatpush1.bf16.msra.mxu0 0
      %1772 = vmatprep.subr.bf16.mxu0 0
      %1773 = vmatpush1.bf16.msra.mxu0 0
      %1774 = vmatprep.subr.bf16.mxu0 0
      %1775 = vmatpush1.bf16.msra.mxu0 0
      %1776 = vmatprep.subr.bf16.mxu0 0
      %1777 = vmatpush1.bf16.msra.mxu0 0
      %1778 = vmatprep.subr.bf16.mxu0 0
      %1779 = vmatpush1.bf16.msra.mxu0 0
      %1780 = vmatprep.subr.bf16.mxu0 0
      %1781 = vmatpush1.bf16.msra.mxu0 0
      %1782 = vmatprep.subr.bf16.mxu0 0
      %1783 = vmatpush1.bf16.msra.mxu0 0
      %1784 = vmatprep.subr.bf16.mxu0 0
      %1785 = vmatpush1.bf16.msra.mxu0 0
      %1786 = vmatprep.subr.bf16.mxu0 0
      %1787 = vmatpush1.bf16.msra.mxu0 0
      %1788 = vmatprep.subr.bf16.mxu0 0
      %1789 = vmatpush1.bf16.msra.mxu0 0
      %1790 = vmatprep.subr.bf16.mxu0 0
      %1791 = vmatpush1.bf16.msra.mxu0 0
      %1792 = vmatprep.mubr.bf16.mxu0 0
      %1793 = vmatmul.mubr.bf16.gmra.mrb[0].mxu0 %v1758
      %v1794 = vpop.f32.mrb[0].mxu0
      %v1795 = vadd.f32 %v828, %v1794
      %v1796 = vpop.f32.mrb[0].mxu0
      %v1797 = vpop.f32.mrb[0].mxu0
      %v1798 = vpop.f32.mrb[0].mxu0
      %1799 = vdwg.mxu0
      %v1801 = vsel %vm1756, %v1175, 0
      %1803 = vmatprep.subr.bf16.mxu0 0
      %1804 = vmatpush1.bf16.msra.mxu0 %v1754
      %1805 = vmatprep.subr.bf16.mxu0 0
      %1806 = vmatpush1.bf16.msra.mxu0 0
      %1807 = vmatprep.subr.bf16.mxu0 0
      %1808 = vmatpush1.bf16.msra.mxu0 0
      %1809 = vmatprep.subr.bf16.mxu0 0
      %1810 = vmatpush1.bf16.msra.mxu0 0
      %1811 = vmatprep.subr.bf16.mxu0 0
      %1812 = vmatpush1.bf16.msra.mxu0 0
      %1813 = vmatprep.subr.bf16.mxu0 0
      %1814 = vmatpush1.bf16.msra.mxu0 0
      %1815 = vmatprep.subr.bf16.mxu0 0
      %1816 = vmatpush1.bf16.msra.mxu0 0
      %1817 = vmatprep.subr.bf16.mxu0 0
      %1818 = vmatpush1.bf16.msra.mxu0 0
      %1819 = vmatprep.subr.bf16.mxu0 0
      %1820 = vmatpush1.bf16.msra.mxu0 0
      %1821 = vmatprep.subr.bf16.mxu0 0
      %1822 = vmatpush1.bf16.msra.mxu0 0
      %1823 = vmatprep.subr.bf16.mxu0 0
      %1824 = vmatpush1.bf16.msra.mxu0 0
      %1825 = vmatprep.subr.bf16.mxu0 0
      %1826 = vmatpush1.bf16.msra.mxu0 0
      %1827 = vmatprep.subr.bf16.mxu0 0
      %1828 = vmatpush1.bf16.msra.mxu0 0
      %1829 = vmatprep.subr.bf16.mxu0 0
      %1830 = vmatpush1.bf16.msra.mxu0 0
      %1831 = vmatprep.subr.bf16.mxu0 0
      %1832 = vmatpush1.bf16.msra.mxu0 0
      %1833 = vmatprep.subr.bf16.mxu0 0
      %1834 = vmatpush1.bf16.msra.mxu0 0
      %1835 = vmatprep.mubr.bf16.mxu0 0
      %1836 = vmatmul.mubr.bf16.gmra.mrb[0].mxu0 %v1801
      %v1837 = vpop.f32.mrb[0].mxu0
      %v1838 = vadd.f32 %v828, %v1837
      %v1839 = vpop.f32.mrb[0].mxu0
      %v1840 = vpop.f32.mrb[0].mxu0
      %v1841 = vpop.f32.mrb[0].mxu0
      %1842 = vdwg.mxu0
      %vm1843 = vcmask 27648
      %v1844 = vsel %vm1843, %v1795, -inf
      %1845 = vmax.xlane.f32.xlu0 %v1844
      %v1846 = vpop.xlane.xlu0 %1845
      %v1847 = vsel %vm1843, %v1838, -inf
      %1848 = vmax.xlane.f32.xlu0 %v1847
      %v1849 = vpop.xlane.xlu0 %1848
      %v1850 = vsub.f32 %v1795, %v1846
      %v1851 = vsub.f32 %v1838, %v1849
      %v1852 = vmul.f32 %v1850, 1.442695
      %v1853 = vpow.pop %v1852
      %v1854 = vmul.f32 %v1851, 1.442695
      %v1855 = vpow.pop %v1854
      %v1856 = vsel %vm1843, %v1853, 0.0
      %1857 = vadd.xlane.f32.xlu0 %v1856
      %v1858 = vpop.xlane.xlu0 %1857
      %v1859 = vsel %vm1843, %v1855, 0.0
      %1860 = vadd.xlane.f32.xlu0 %v1859
      %v1861 = vpop.xlane.xlu0 %1860
      %v1862 = vrcp.pop %v1858
      %v1863 = vrcp.pop %v1861
      %v1864 = vmul.f32 %v1853, %v1862
      %v1865 = vmul.f32 %v1855, %v1863
      %v1866 = vpack.c.bf16 %v1864, %v1864
      %v1867 = vpack.c.bf16 %v1865, %v1865
      %1868 = vxpose.xlu0.c.b16.start [1/8] %v1146, 128
      %1869 = vxpose.xlu0.c.b16.cont [2/8] 0, 128
      %1870 = vxpose.xlu0.c.b16.cont [3/8] 0, 128
      %1871 = vxpose.xlu0.c.b16.cont [4/8] 0, 128
      %1872 = vxpose.xlu0.c.b16.cont [5/8] 0, 128
      %1873 = vxpose.xlu0.c.b16.cont [6/8] 0, 128
      %1874 = vxpose.xlu0.c.b16.cont [7/8] 0, 128
      %1875 = vxpose.xlu0.c.b16.end [8/8] 0, 128
      %v1876 = vpop.trf.xlu0
      %v1877 = vpop.trf.xlu0
      %v1878 = vpop.trf.xlu0
      %v1879 = vpop.trf.xlu0
      %v1880 = vpop.trf.xlu0
      %v1881 = vpop.trf.xlu0
      %v1882 = vpop.trf.xlu0
      %v1883 = vpop.trf.xlu0
      %1884 = vxpose.xlu0.c.b16.start [1/8] %v1147, 128
      %1885 = vxpose.xlu0.c.b16.cont [2/8] 0, 128
      %1886 = vxpose.xlu0.c.b16.cont [3/8] 0, 128
      %1887 = vxpose.xlu0.c.b16.cont [4/8] 0, 128
      %1888 = vxpose.xlu0.c.b16.cont [5/8] 0, 128
      %1889 = vxpose.xlu0.c.b16.cont [6/8] 0, 128
      %1890 = vxpose.xlu0.c.b16.cont [7/8] 0, 128
      %1891 = vxpose.xlu0.c.b16.end [8/8] 0, 128
      %v1892 = vpop.trf.xlu0
      %v1893 = vpop.trf.xlu0
      %v1894 = vpop.trf.xlu0
      %v1895 = vpop.trf.xlu0
      %v1896 = vpop.trf.xlu0
      %v1897 = vpop.trf.xlu0
      %v1898 = vpop.trf.xlu0
      %v1899 = vpop.trf.xlu0
      %1900 = vxpose.xlu0.c.b16.start [1/8] %v1148, 128
      %1901 = vxpose.xlu0.c.b16.cont [2/8] 0, 128
      %1902 = vxpose.xlu0.c.b16.cont [3/8] 0, 128
      %1903 = vxpose.xlu0.c.b16.cont [4/8] 0, 128
      %1904 = vxpose.xlu0.c.b16.cont [5/8] 0, 128
      %1905 = vxpose.xlu0.c.b16.cont [6/8] 0, 128
      %1906 = vxpose.xlu0.c.b16.cont [7/8] 0, 128
      %1907 = vxpose.xlu0.c.b16.end [8/8] 0, 128
      %v1908 = vpop.trf.xlu0
      %v1909 = vpop.trf.xlu0
      %v1910 = vpop.trf.xlu0
      %v1911 = vpop.trf.xlu0
      %v1912 = vpop.trf.xlu0
      %v1913 = vpop.trf.xlu0
      %v1914 = vpop.trf.xlu0
      %v1915 = vpop.trf.xlu0
      %1916 = vxpose.xlu0.c.b16.start [1/8] %v1149, 128
      %1917 = vxpose.xlu0.c.b16.cont [2/8] 0, 128
      %1918 = vxpose.xlu0.c.b16.cont [3/8] 0, 128
      %1919 = vxpose.xlu0.c.b16.cont [4/8] 0, 128
      %1920 = vxpose.xlu0.c.b16.cont [5/8] 0, 128
      %1921 = vxpose.xlu0.c.b16.cont [6/8] 0, 128
      %1922 = vxpose.xlu0.c.b16.cont [7/8] 0, 128
      %1923 = vxpose.xlu0.c.b16.end [8/8] 0, 128
      %v1924 = vpop.trf.xlu0
      %v1925 = vpop.trf.xlu0
      %v1926 = vpop.trf.xlu0
      %v1927 = vpop.trf.xlu0
      %v1928 = vpop.trf.xlu0
      %v1929 = vpop.trf.xlu0
      %v1930 = vpop.trf.xlu0
      %v1931 = vpop.trf.xlu0
      %v1934 = vpack.i.b16 %v1892, %v1876
      %v1936 = vshrl.u32 %v1876, 16
      %v1937 = vshrl.u32 %v1892, 16
      %v1938 = vpack.i.b16 %v1937, %v1936
      %v1942 = vpack.i.b16 %v1924, %v1908
      %v1944 = vshrl.u32 %v1908, 16
      %v1945 = vshrl.u32 %v1924, 16
      %v1946 = vpack.i.b16 %v1945, %v1944
      %v1948 = vcombine.high %v1934, %v1257
      %v1950 = vunpack.c.l.s4 1983009808
      %v1951 = vunpack.c.0.s8 %v1950
      %v1952 = vlaneseq
      %v1953 = vshrl.u32 %v1952, 7
      %v1954 = vsub.s32 %v1951, %v1953
      %v1955 = vrot.slane %v1934, %v1954
      %v1957 = vunpack.c.l.s4 1983009808
      %v1958 = vunpack.c.0.s8 %v1957
      %v1959 = vlaneseq
      %v1960 = vshrl.u32 %v1959, 7
      %v1961 = vsub.s32 %v1958, %v1960
      %v1962 = vrot.slane %v1948, %v1961
      %v1963 = vcombine.high %v1942, %v1257
      %v1965 = vunpack.c.l.s4 1983009808
      %v1966 = vunpack.c.0.s8 %v1965
      %v1967 = vlaneseq
      %v1968 = vshrl.u32 %v1967, 7
      %v1969 = vsub.s32 %v1966, %v1968
      %v1970 = vrot.slane %v1942, %v1969
      %v1972 = vunpack.c.l.s4 1983009808
      %v1973 = vunpack.c.0.s8 %v1972
      %v1974 = vlaneseq
      %v1975 = vshrl.u32 %v1974, 7
      %v1976 = vsub.s32 %v1973, %v1975
      %v1977 = vrot.slane %v1963, %v1976
      %v1978 = vcombine.low %v1955, %v1970
      %v1979 = vcombine.high %v1955, %v1970
      %v1981 = vunpack.c.l.s4 1934713408
      %v1982 = vunpack.c.0.s8 %v1981
      %v1983 = vlaneseq
      %v1984 = vshrl.u32 %v1983, 7
      %v1985 = vsub.s32 %v1982, %v1984
      %v1986 = vrot.slane %v1978, %v1985
      %v1988 = vunpack.c.l.s4 1934713408
      %v1989 = vunpack.c.0.s8 %v1988
      %v1990 = vlaneseq
      %v1991 = vshrl.u32 %v1990, 7
      %v1992 = vsub.s32 %v1989, %v1991
      %v1993 = vrot.slane %v1979, %v1992
      %v1994 = vcombine.low %v1962, %v1977
      %v1995 = vcombine.high %v1962, %v1977
      %v1997 = vunpack.c.l.s4 1934713408
      %v1998 = vunpack.c.0.s8 %v1997
      %v1999 = vlaneseq
      %v2000 = vshrl.u32 %v1999, 7
      %v2001 = vsub.s32 %v1998, %v2000
      %v2002 = vrot.slane %v1994, %v2001
      %v2004 = vunpack.c.l.s4 1934713408
      %v2005 = vunpack.c.0.s8 %v2004
      %v2006 = vlaneseq
      %v2007 = vshrl.u32 %v2006, 7
      %v2008 = vsub.s32 %v2005, %v2007
      %v2009 = vrot.slane %v1995, %v2008
      %v2010 = vcombine.high %v1986, 0
      %v2011 = vcombine.high %v1993, 0
      %v2012 = vcombine.high %v2002, 0
      %v2013 = vcombine.high %v2009, 0
      %v2014 = vcombine.high %v1938, %v1260
      %v2016 = vunpack.c.l.s4 1983009808
      %v2017 = vunpack.c.0.s8 %v2016
      %v2018 = vlaneseq
      %v2019 = vshrl.u32 %v2018, 7
      %v2020 = vsub.s32 %v2017, %v2019
      %v2021 = vrot.slane %v1938, %v2020
      %v2023 = vunpack.c.l.s4 1983009808
      %v2024 = vunpack.c.0.s8 %v2023
      %v2025 = vlaneseq
      %v2026 = vshrl.u32 %v2025, 7
      %v2027 = vsub.s32 %v2024, %v2026
      %v2028 = vrot.slane %v2014, %v2027
      %v2029 = vcombine.high %v1946, %v1260
      %v2031 = vunpack.c.l.s4 1983009808
      %v2032 = vunpack.c.0.s8 %v2031
      %v2033 = vlaneseq
      %v2034 = vshrl.u32 %v2033, 7
      %v2035 = vsub.s32 %v2032, %v2034
      %v2036 = vrot.slane %v1946, %v2035
      %v2038 = vunpack.c.l.s4 1983009808
      %v2039 = vunpack.c.0.s8 %v2038
      %v2040 = vlaneseq
      %v2041 = vshrl.u32 %v2040, 7
      %v2042 = vsub.s32 %v2039, %v2041
      %v2043 = vrot.slane %v2029, %v2042
      %v2044 = vcombine.low %v2021, %v2036
      %v2045 = vcombine.high %v2021, %v2036
      %v2047 = vunpack.c.l.s4 1934713408
      %v2048 = vunpack.c.0.s8 %v2047
      %v2049 = vlaneseq
      %v2050 = vshrl.u32 %v2049, 7
      %v2051 = vsub.s32 %v2048, %v2050
      %v2052 = vrot.slane %v2044, %v2051
      %v2054 = vunpack.c.l.s4 1934713408
      %v2055 = vunpack.c.0.s8 %v2054
      %v2056 = vlaneseq
      %v2057 = vshrl.u32 %v2056, 7
      %v2058 = vsub.s32 %v2055, %v2057
      %v2059 = vrot.slane %v2045, %v2058
      %v2060 = vcombine.low %v2028, %v2043
      %v2061 = vcombine.high %v2028, %v2043
      %v2063 = vunpack.c.l.s4 1934713408
      %v2064 = vunpack.c.0.s8 %v2063
      %v2065 = vlaneseq
      %v2066 = vshrl.u32 %v2065, 7
      %v2067 = vsub.s32 %v2064, %v2066
      %v2068 = vrot.slane %v2060, %v2067
      %v2070 = vunpack.c.l.s4 1934713408
      %v2071 = vunpack.c.0.s8 %v2070
      %v2072 = vlaneseq
      %v2073 = vshrl.u32 %v2072, 7
      %v2074 = vsub.s32 %v2071, %v2073
      %v2075 = vrot.slane %v2061, %v2074
      %v2076 = vcombine.high %v2052, 0
      %v2077 = vcombine.high %v2059, 0
      %v2078 = vcombine.high %v2068, 0
      %v2079 = vcombine.high %v2075, 0
      %2080 = vxpose.xlu0.c.b16.start [1/8] %v1986, 128
      %2081 = vxpose.xlu0.c.b16.cont [2/8] 0, 128
      %2082 = vxpose.xlu0.c.b16.cont [3/8] 0, 128
      %2083 = vxpose.xlu0.c.b16.cont [4/8] 0, 128
      %2084 = vxpose.xlu0.c.b16.cont [5/8] 0, 128
      %2085 = vxpose.xlu0.c.b16.cont [6/8] 0, 128
      %2086 = vxpose.xlu0.c.b16.cont [7/8] 0, 128
      %2087 = vxpose.xlu0.c.b16.end [8/8] 0, 128
      %v2088 = vpop.trf.xlu0
      %v2089 = vpop.trf.xlu0
      %v2090 = vpop.trf.xlu0
      %v2091 = vpop.trf.xlu0
      %v2092 = vpop.trf.xlu0
      %v2093 = vpop.trf.xlu0
      %v2094 = vpop.trf.xlu0
      %v2095 = vpop.trf.xlu0
      %2096 = vxpose.xlu0.c.b16.start [1/8] %v2052, 128
      %2097 = vxpose.xlu0.c.b16.cont [2/8] 0, 128
      %2098 = vxpose.xlu0.c.b16.cont [3/8] 0, 128
      %2099 = vxpose.xlu0.c.b16.cont [4/8] 0, 128
      %2100 = vxpose.xlu0.c.b16.cont [5/8] 0, 128
      %2101 = vxpose.xlu0.c.b16.cont [6/8] 0, 128
      %2102 = vxpose.xlu0.c.b16.cont [7/8] 0, 128
      %2103 = vxpose.xlu0.c.b16.end [8/8] 0, 128
      %v2104 = vpop.trf.xlu0
      %v2105 = vpop.trf.xlu0
      %v2106 = vpop.trf.xlu0
      %v2107 = vpop.trf.xlu0
      %v2108 = vpop.trf.xlu0
      %v2109 = vpop.trf.xlu0
      %v2110 = vpop.trf.xlu0
      %v2111 = vpop.trf.xlu0
      %2112 = vxpose.xlu0.c.b16.start [1/8] %v2010, 128
      %2113 = vxpose.xlu0.c.b16.cont [2/8] 0, 128
      %2114 = vxpose.xlu0.c.b16.cont [3/8] 0, 128
      %2115 = vxpose.xlu0.c.b16.cont [4/8] 0, 128
      %2116 = vxpose.xlu0.c.b16.cont [5/8] 0, 128
      %2117 = vxpose.xlu0.c.b16.cont [6/8] 0, 128
      %2118 = vxpose.xlu0.c.b16.cont [7/8] 0, 128
      %2119 = vxpose.xlu0.c.b16.end [8/8] 0, 128
      %v2120 = vpop.trf.xlu0
      %v2121 = vpop.trf.xlu0
      %v2122 = vpop.trf.xlu0
      %v2123 = vpop.trf.xlu0
      %v2124 = vpop.trf.xlu0
      %v2125 = vpop.trf.xlu0
      %v2126 = vpop.trf.xlu0
      %v2127 = vpop.trf.xlu0
      %2128 = vxpose.xlu0.c.b16.start [1/8] %v2076, 128
      %2129 = vxpose.xlu0.c.b16.cont [2/8] 0, 128
      %2130 = vxpose.xlu0.c.b16.cont [3/8] 0, 128
      %2131 = vxpose.xlu0.c.b16.cont [4/8] 0, 128
      %2132 = vxpose.xlu0.c.b16.cont [5/8] 0, 128
      %2133 = vxpose.xlu0.c.b16.cont [6/8] 0, 128
      %2134 = vxpose.xlu0.c.b16.cont [7/8] 0, 128
      %2135 = vxpose.xlu0.c.b16.end [8/8] 0, 128
      %v2136 = vpop.trf.xlu0
      %v2137 = vpop.trf.xlu0
      %v2138 = vpop.trf.xlu0
      %v2139 = vpop.trf.xlu0
      %v2140 = vpop.trf.xlu0
      %v2141 = vpop.trf.xlu0
      %v2142 = vpop.trf.xlu0
      %v2143 = vpop.trf.xlu0
      %2144 = vxpose.xlu0.c.b16.start [1/8] %v1993, 128
      %2145 = vxpose.xlu0.c.b16.cont [2/8] 0, 128
      %2146 = vxpose.xlu0.c.b16.cont [3/8] 0, 128
      %2147 = vxpose.xlu0.c.b16.cont [4/8] 0, 128
      %2148 = vxpose.xlu0.c.b16.cont [5/8] 0, 128
      %2149 = vxpose.xlu0.c.b16.cont [6/8] 0, 128
      %2150 = vxpose.xlu0.c.b16.cont [7/8] 0, 128
      %2151 = vxpose.xlu0.c.b16.end [8/8] 0, 128
      %v2152 = vpop.trf.xlu0
      %v2153 = vpop.trf.xlu0
      %v2154 = vpop.trf.xlu0
      %v2155 = vpop.trf.xlu0
      %v2156 = vpop.trf.xlu0
      %v2157 = vpop.trf.xlu0
      %v2158 = vpop.trf.xlu0
      %v2159 = vpop.trf.xlu0
      %2160 = vxpose.xlu0.c.b16.start [1/8] %v2059, 128
      %2161 = vxpose.xlu0.c.b16.cont [2/8] 0, 128
      %2162 = vxpose.xlu0.c.b16.cont [3/8] 0, 128
      %2163 = vxpose.xlu0.c.b16.cont [4/8] 0, 128
      %2164 = vxpose.xlu0.c.b16.cont [5/8] 0, 128
      %2165 = vxpose.xlu0.c.b16.cont [6/8] 0, 128
      %2166 = vxpose.xlu0.c.b16.cont [7/8] 0, 128
      %2167 = vxpose.xlu0.c.b16.end [8/8] 0, 128
      %v2168 = vpop.trf.xlu0
      %v2169 = vpop.trf.xlu0
      %v2170 = vpop.trf.xlu0
      %v2171 = vpop.trf.xlu0
      %v2172 = vpop.trf.xlu0
      %v2173 = vpop.trf.xlu0
      %v2174 = vpop.trf.xlu0
      %v2175 = vpop.trf.xlu0
      %2176 = vxpose.xlu0.c.b16.start [1/8] %v2011, 128
      %2177 = vxpose.xlu0.c.b16.cont [2/8] 0, 128
      %2178 = vxpose.xlu0.c.b16.cont [3/8] 0, 128
      %2179 = vxpose.xlu0.c.b16.cont [4/8] 0, 128
      %2180 = vxpose.xlu0.c.b16.cont [5/8] 0, 128
      %2181 = vxpose.xlu0.c.b16.cont [6/8] 0, 128
      %2182 = vxpose.xlu0.c.b16.cont [7/8] 0, 128
      %2183 = vxpose.xlu0.c.b16.end [8/8] 0, 128
      %v2184 = vpop.trf.xlu0
      %v2185 = vpop.trf.xlu0
      %v2186 = vpop.trf.xlu0
      %v2187 = vpop.trf.xlu0
      %v2188 = vpop.trf.xlu0
      %v2189 = vpop.trf.xlu0
      %v2190 = vpop.trf.xlu0
      %v2191 = vpop.trf.xlu0
      %2192 = vxpose.xlu0.c.b16.start [1/8] %v2077, 128
      %2193 = vxpose.xlu0.c.b16.cont [2/8] 0, 128
      %2194 = vxpose.xlu0.c.b16.cont [3/8] 0, 128
      %2195 = vxpose.xlu0.c.b16.cont [4/8] 0, 128
      %2196 = vxpose.xlu0.c.b16.cont [5/8] 0, 128
      %2197 = vxpose.xlu0.c.b16.cont [6/8] 0, 128
      %2198 = vxpose.xlu0.c.b16.cont [7/8] 0, 128
      %2199 = vxpose.xlu0.c.b16.end [8/8] 0, 128
      %v2200 = vpop.trf.xlu0
      %v2201 = vpop.trf.xlu0
      %v2202 = vpop.trf.xlu0
      %v2203 = vpop.trf.xlu0
      %v2204 = vpop.trf.xlu0
      %v2205 = vpop.trf.xlu0
      %v2206 = vpop.trf.xlu0
      %v2207 = vpop.trf.xlu0
      %2208 = vxpose.xlu0.c.b16.start [1/8] %v2002, 128
      %2209 = vxpose.xlu0.c.b16.cont [2/8] 0, 128
      %2210 = vxpose.xlu0.c.b16.cont [3/8] 0, 128
      %2211 = vxpose.xlu0.c.b16.cont [4/8] 0, 128
      %2212 = vxpose.xlu0.c.b16.cont [5/8] 0, 128
      %2213 = vxpose.xlu0.c.b16.cont [6/8] 0, 128
      %2214 = vxpose.xlu0.c.b16.cont [7/8] 0, 128
      %2215 = vxpose.xlu0.c.b16.end [8/8] 0, 128
      %v2216 = vpop.trf.xlu0
      %v2217 = vpop.trf.xlu0
      %v2218 = vpop.trf.xlu0
      %v2219 = vpop.trf.xlu0
      %v2220 = vpop.trf.xlu0
      %v2221 = vpop.trf.xlu0
      %v2222 = vpop.trf.xlu0
      %v2223 = vpop.trf.xlu0
      %2224 = vxpose.xlu0.c.b16.start [1/8] %v2068, 128
      %2225 = vxpose.xlu0.c.b16.cont [2/8] 0, 128
      %2226 = vxpose.xlu0.c.b16.cont [3/8] 0, 128
      %2227 = vxpose.xlu0.c.b16.cont [4/8] 0, 128
      %2228 = vxpose.xlu0.c.b16.cont [5/8] 0, 128
      %2229 = vxpose.xlu0.c.b16.cont [6/8] 0, 128
      %2230 = vxpose.xlu0.c.b16.cont [7/8] 0, 128
      %2231 = vxpose.xlu0.c.b16.end [8/8] 0, 128
      %v2232 = vpop.trf.xlu0
      %v2233 = vpop.trf.xlu0
      %v2234 = vpop.trf.xlu0
      %v2235 = vpop.trf.xlu0
      %v2236 = vpop.trf.xlu0
      %v2237 = vpop.trf.xlu0
      %v2238 = vpop.trf.xlu0
      %v2239 = vpop.trf.xlu0
      %2240 = vxpose.xlu0.c.b16.start [1/8] %v2012, 128
      %2241 = vxpose.xlu0.c.b16.cont [2/8] 0, 128
      %2242 = vxpose.xlu0.c.b16.cont [3/8] 0, 128
      %2243 = vxpose.xlu0.c.b16.cont [4/8] 0, 128
      %2244 = vxpose.xlu0.c.b16.cont [5/8] 0, 128
      %2245 = vxpose.xlu0.c.b16.cont [6/8] 0, 128
      %2246 = vxpose.xlu0.c.b16.cont [7/8] 0, 128
      %2247 = vxpose.xlu0.c.b16.end [8/8] 0, 128
      %v2248 = vpop.trf.xlu0
      %v2249 = vpop.trf.xlu0
      %v2250 = vpop.trf.xlu0
      %v2251 = vpop.trf.xlu0
      %v2252 = vpop.trf.xlu0
      %v2253 = vpop.trf.xlu0
      %v2254 = vpop.trf.xlu0
      %v2255 = vpop.trf.xlu0
      %2256 = vxpose.xlu0.c.b16.start [1/8] %v2078, 128
      %2257 = vxpose.xlu0.c.b16.cont [2/8] 0, 128
      %2258 = vxpose.xlu0.c.b16.cont [3/8] 0, 128
      %2259 = vxpose.xlu0.c.b16.cont [4/8] 0, 128
      %2260 = vxpose.xlu0.c.b16.cont [5/8] 0, 128
      %2261 = vxpose.xlu0.c.b16.cont [6/8] 0, 128
      %2262 = vxpose.xlu0.c.b16.cont [7/8] 0, 128
      %2263 = vxpose.xlu0.c.b16.end [8/8] 0, 128
      %v2264 = vpop.trf.xlu0
      %v2265 = vpop.trf.xlu0
      %v2266 = vpop.trf.xlu0
      %v2267 = vpop.trf.xlu0
      %v2268 = vpop.trf.xlu0
      %v2269 = vpop.trf.xlu0
      %v2270 = vpop.trf.xlu0
      %v2271 = vpop.trf.xlu0
      %2272 = vxpose.xlu0.c.b16.start [1/8] %v2009, 128
      %2273 = vxpose.xlu0.c.b16.cont [2/8] 0, 128
      %2274 = vxpose.xlu0.c.b16.cont [3/8] 0, 128
      %2275 = vxpose.xlu0.c.b16.cont [4/8] 0, 128
      %2276 = vxpose.xlu0.c.b16.cont [5/8] 0, 128
      %2277 = vxpose.xlu0.c.b16.cont [6/8] 0, 128
      %2278 = vxpose.xlu0.c.b16.cont [7/8] 0, 128
      %2279 = vxpose.xlu0.c.b16.end [8/8] 0, 128
      %v2280 = vpop.trf.xlu0
      %v2281 = vpop.trf.xlu0
      %v2282 = vpop.trf.xlu0
      %v2283 = vpop.trf.xlu0
      %v2284 = vpop.trf.xlu0
      %v2285 = vpop.trf.xlu0
      %v2286 = vpop.trf.xlu0
      %v2287 = vpop.trf.xlu0
      %2288 = vxpose.xlu0.c.b16.start [1/8] %v2075, 128
      %2289 = vxpose.xlu0.c.b16.cont [2/8] 0, 128
      %2290 = vxpose.xlu0.c.b16.cont [3/8] 0, 128
      %2291 = vxpose.xlu0.c.b16.cont [4/8] 0, 128
      %2292 = vxpose.xlu0.c.b16.cont [5/8] 0, 128
      %2293 = vxpose.xlu0.c.b16.cont [6/8] 0, 128
      %2294 = vxpose.xlu0.c.b16.cont [7/8] 0, 128
      %2295 = vxpose.xlu0.c.b16.end [8/8] 0, 128
      %v2296 = vpop.trf.xlu0
      %v2297 = vpop.trf.xlu0
      %v2298 = vpop.trf.xlu0
      %v2299 = vpop.trf.xlu0
      %v2300 = vpop.trf.xlu0
      %v2301 = vpop.trf.xlu0
      %v2302 = vpop.trf.xlu0
      %v2303 = vpop.trf.xlu0
      %2304 = vxpose.xlu0.c.b16.start [1/8] %v2013, 128
      %2305 = vxpose.xlu0.c.b16.cont [2/8] 0, 128
      %2306 = vxpose.xlu0.c.b16.cont [3/8] 0, 128
      %2307 = vxpose.xlu0.c.b16.cont [4/8] 0, 128
      %2308 = vxpose.xlu0.c.b16.cont [5/8] 0, 128
      %2309 = vxpose.xlu0.c.b16.cont [6/8] 0, 128
      %2310 = vxpose.xlu0.c.b16.cont [7/8] 0, 128
      %2311 = vxpose.xlu0.c.b16.end [8/8] 0, 128
      %v2312 = vpop.trf.xlu0
      %v2313 = vpop.trf.xlu0
      %v2314 = vpop.trf.xlu0
      %v2315 = vpop.trf.xlu0
      %v2316 = vpop.trf.xlu0
      %v2317 = vpop.trf.xlu0
      %v2318 = vpop.trf.xlu0
      %v2319 = vpop.trf.xlu0
      %2320 = vxpose.xlu0.c.b16.start [1/8] %v2079, 128
      %2321 = vxpose.xlu0.c.b16.cont [2/8] 0, 128
      %2322 = vxpose.xlu0.c.b16.cont [3/8] 0, 128
      %2323 = vxpose.xlu0.c.b16.cont [4/8] 0, 128
      %2324 = vxpose.xlu0.c.b16.cont [5/8] 0, 128
      %2325 = vxpose.xlu0.c.b16.cont [6/8] 0, 128
      %2326 = vxpose.xlu0.c.b16.cont [7/8] 0, 128
      %2327 = vxpose.xlu0.c.b16.end [8/8] 0, 128
      %v2328 = vpop.trf.xlu0
      %v2329 = vpop.trf.xlu0
      %v2330 = vpop.trf.xlu0
      %v2331 = vpop.trf.xlu0
      %v2332 = vpop.trf.xlu0
      %v2333 = vpop.trf.xlu0
      %v2334 = vpop.trf.xlu0
      %v2335 = vpop.trf.xlu0
      %v2336 = vcombine.low %v2088, %v2152
      %v2338 = vunpack.c.l.s4 1983009808
      %v2339 = vunpack.c.0.s8 %v2338
      %v2340 = vlaneseq
      %v2341 = vshrl.u32 %v2340, 7
      %v2342 = vsub.s32 %v2339, %v2341
      %v2343 = vrot.slane %v2336, %v2342
      %v2344 = vcombine.low %v2120, %v2184
      %v2346 = vunpack.c.l.s4 1983009808
      %v2347 = vunpack.c.0.s8 %v2346
      %v2348 = vlaneseq
      %v2349 = vshrl.u32 %v2348, 7
      %v2350 = vsub.s32 %v2347, %v2349
      %v2351 = vrot.slane %v2344, %v2350
      %v2352 = vcombine.low %v2216, %v2280
      %v2354 = vunpack.c.l.s4 1983009808
      %v2355 = vunpack.c.0.s8 %v2354
      %v2356 = vlaneseq
      %v2357 = vshrl.u32 %v2356, 7
      %v2358 = vsub.s32 %v2355, %v2357
      %v2359 = vrot.slane %v2352, %v2358
      %v2360 = vcombine.low %v2248, %v2312
      %v2362 = vunpack.c.l.s4 1983009808
      %v2363 = vunpack.c.0.s8 %v2362
      %v2364 = vlaneseq
      %v2365 = vshrl.u32 %v2364, 7
      %v2366 = vsub.s32 %v2363, %v2365
      %v2367 = vrot.slane %v2360, %v2366
      %v2368 = vcombine.low %v2343, %v2351
      %v2370 = vunpack.c.l.s4 1934713408
      %v2371 = vunpack.c.0.s8 %v2370
      %v2372 = vlaneseq
      %v2373 = vshrl.u32 %v2372, 7
      %v2374 = vsub.s32 %v2371, %v2373
      %v2375 = vrot.slane %v2368, %v2374
      %v2376 = vcombine.low %v2359, %v2367
      %v2378 = vunpack.c.l.s4 1934713408
      %v2379 = vunpack.c.0.s8 %v2378
      %v2380 = vlaneseq
      %v2381 = vshrl.u32 %v2380, 7
      %v2382 = vsub.s32 %v2379, %v2381
      %v2383 = vrot.slane %v2376, %v2382
      %v2384 = vcombine.low %v2375, %v2383
      %v2385 = vcombine.low %v2104, %v2168
      %v2387 = vunpack.c.l.s4 1983009808
      %v2388 = vunpack.c.0.s8 %v2387
      %v2389 = vlaneseq
      %v2390 = vshrl.u32 %v2389, 7
      %v2391 = vsub.s32 %v2388, %v2390
      %v2392 = vrot.slane %v2385, %v2391
      %v2393 = vcombine.low %v2136, %v2200
      %v2395 = vunpack.c.l.s4 1983009808
      %v2396 = vunpack.c.0.s8 %v2395
      %v2397 = vlaneseq
      %v2398 = vshrl.u32 %v2397, 7
      %v2399 = vsub.s32 %v2396, %v2398
      %v2400 = vrot.slane %v2393, %v2399
      %v2401 = vcombine.low %v2232, %v2296
      %v2403 = vunpack.c.l.s4 1983009808
      %v2404 = vunpack.c.0.s8 %v2403
      %v2405 = vlaneseq
      %v2406 = vshrl.u32 %v2405, 7
      %v2407 = vsub.s32 %v2404, %v2406
      %v2408 = vrot.slane %v2401, %v2407
      %v2409 = vcombine.low %v2264, %v2328
      %v2411 = vunpack.c.l.s4 1983009808
      %v2412 = vunpack.c.0.s8 %v2411
      %v2413 = vlaneseq
      %v2414 = vshrl.u32 %v2413, 7
      %v2415 = vsub.s32 %v2412, %v2414
      %v2416 = vrot.slane %v2409, %v2415
      %v2417 = vcombine.low %v2392, %v2400
      %v2419 = vunpack.c.l.s4 1934713408
      %v2420 = vunpack.c.0.s8 %v2419
      %v2421 = vlaneseq
      %v2422 = vshrl.u32 %v2421, 7
      %v2423 = vsub.s32 %v2420, %v2422
      %v2424 = vrot.slane %v2417, %v2423
      %v2425 = vcombine.low %v2408, %v2416
      %v2427 = vunpack.c.l.s4 1934713408
      %v2428 = vunpack.c.0.s8 %v2427
      %v2429 = vlaneseq
      %v2430 = vshrl.u32 %v2429, 7
      %v2431 = vsub.s32 %v2428, %v2430
      %v2432 = vrot.slane %v2425, %v2431
      %v2433 = vcombine.low %v2424, %v2432
      %v2436 = vpack.i.b16 %v2433, %v2384
      %v2437 = vshrl.u32 %v2384, 16
      %v2438 = vshrl.u32 %v2433, 16
      %v2439 = vpack.i.b16 %v2438, %v2437
      %vm2440 = vcmask 31744
      %v2442 = vsel %vm2440, %v2436, 0
      %v2445 = vsel %vm2440, %v1866, 0
      %2447 = vmatprep.subr.bf16.mxu0 0
      %2448 = vmatpush1.bf16.xpose.msra.mxu0 %v2445
      %2449 = vmatprep.subr.bf16.mxu0 0
      %2450 = vmatpush1.bf16.xpose.msra.mxu0 0
      %2451 = vmatprep.subr.bf16.mxu0 0
      %2452 = vmatpush1.bf16.xpose.msra.mxu0 0
      %2453 = vmatprep.subr.bf16.mxu0 0
      %2454 = vmatpush1.bf16.xpose.msra.mxu0 0
      %2455 = vmatprep.subr.bf16.mxu0 0
      %2456 = vmatpush1.bf16.xpose.msra.mxu0 0
      %2457 = vmatprep.subr.bf16.mxu0 0
      %2458 = vmatpush1.bf16.xpose.msra.mxu0 0
      %2459 = vmatprep.subr.bf16.mxu0 0
      %2460 = vmatpush1.bf16.xpose.msra.mxu0 0
      %2461 = vmatprep.subr.bf16.mxu0 0
      %2462 = vmatpush1.bf16.xpose.msra.mxu0 0
      %2463 = vmatprep.subr.bf16.mxu0 0
      %2464 = vmatpush1.bf16.xpose.msra.mxu0 0
      %2465 = vmatprep.subr.bf16.mxu0 0
      %2466 = vmatpush1.bf16.xpose.msra.mxu0 0
      %2467 = vmatprep.subr.bf16.mxu0 0
      %2468 = vmatpush1.bf16.xpose.msra.mxu0 0
      %2469 = vmatprep.subr.bf16.mxu0 0
      %2470 = vmatpush1.bf16.xpose.msra.mxu0 0
      %2471 = vmatprep.subr.bf16.mxu0 0
      %2472 = vmatpush1.bf16.xpose.msra.mxu0 0
      %2473 = vmatprep.subr.bf16.mxu0 0
      %2474 = vmatpush1.bf16.xpose.msra.mxu0 0
      %2475 = vmatprep.subr.bf16.mxu0 0
      %2476 = vmatpush1.bf16.xpose.msra.mxu0 0
      %2477 = vmatprep.subr.bf16.mxu0 0
      %2478 = vmatpush1.bf16.xpose.msra.mxu0 0
      %2479 = vmatprep.mubr.bf16.mxu0 0
      %2480 = vmatmul.mubr.bf16.gmra.mrb[0].mxu0 %v2442
      %v2481 = vpop.f32.mrb[0].mxu0
      %v2482 = vadd.f32 0.0, %v2481
      %v2483 = vpop.f32.mrb[0].mxu0
      %v2484 = vpop.f32.mrb[0].mxu0
      %v2485 = vadd.f32 0.0, %v2484
      %v2486 = vpop.f32.mrb[0].mxu0
      %2487 = vdwg.mxu0
      %v2489 = vsel %vm2440, %v2439, 0
      %v2492 = vsel %vm2440, %v1867, 0
      %2494 = vmatprep.subr.bf16.mxu0 0
      %2495 = vmatpush1.bf16.xpose.msra.mxu0 %v2492
      %2496 = vmatprep.subr.bf16.mxu0 0
      %2497 = vmatpush1.bf16.xpose.msra.mxu0 0
      %2498 = vmatprep.subr.bf16.mxu0 0
      %2499 = vmatpush1.bf16.xpose.msra.mxu0 0
      %2500 = vmatprep.subr.bf16.mxu0 0
      %2501 = vmatpush1.bf16.xpose.msra.mxu0 0
      %2502 = vmatprep.subr.bf16.mxu0 0
      %2503 = vmatpush1.bf16.xpose.msra.mxu0 0
      %2504 = vmatprep.subr.bf16.mxu0 0
      %2505 = vmatpush1.bf16.xpose.msra.mxu0 0
      %2506 = vmatprep.subr.bf16.mxu0 0
      %2507 = vmatpush1.bf16.xpose.msra.mxu0 0
      %2508 = vmatprep.subr.bf16.mxu0 0
      %2509 = vmatpush1.bf16.xpose.msra.mxu0 0
      %2510 = vmatprep.subr.bf16.mxu0 0
      %2511 = vmatpush1.bf16.xpose.msra.mxu0 0
      %2512 = vmatprep.subr.bf16.mxu0 0
      %2513 = vmatpush1.bf16.xpose.msra.mxu0 0
      %2514 = vmatprep.subr.bf16.mxu0 0
      %2515 = vmatpush1.bf16.xpose.msra.mxu0 0
      %2516 = vmatprep.subr.bf16.mxu0 0
      %2517 = vmatpush1.bf16.xpose.msra.mxu0 0
      %2518 = vmatprep.subr.bf16.mxu0 0
      %2519 = vmatpush1.bf16.xpose.msra.mxu0 0
      %2520 = vmatprep.subr.bf16.mxu0 0
      %2521 = vmatpush1.bf16.xpose.msra.mxu0 0
      %2522 = vmatprep.subr.bf16.mxu0 0
      %2523 = vmatpush1.bf16.xpose.msra.mxu0 0
      %2524 = vmatprep.subr.bf16.mxu0 0
      %2525 = vmatpush1.bf16.xpose.msra.mxu0 0
      %2526 = vmatprep.mubr.bf16.mxu0 0
      %2527 = vmatmul.mubr.bf16.gmra.mrb[0].mxu0 %v2489
      %v2528 = vpop.f32.mrb[0].mxu0
      %v2529 = vadd.f32 0.0, %v2528
      %v2530 = vpop.f32.mrb[0].mxu0
      %v2531 = vpop.f32.mrb[0].mxu0
      %v2532 = vadd.f32 0.0, %v2531
      %v2533 = vpop.f32.mrb[0].mxu0
      %2534 = vdwg.mxu0
      %2535 = vxpose.xlu0.b32.start [1/16] %v2482, 128
      %2536 = vxpose.xlu0.b32.cont [2/16] %v2485, 128
      %2537 = vxpose.xlu0.b32.cont [3/16] 0.0, 128
      %2538 = vxpose.xlu0.b32.cont [4/16] 0.0, 128
      %2539 = vxpose.xlu0.b32.cont [5/16] 0.0, 128
      %2540 = vxpose.xlu0.b32.cont [6/16] 0.0, 128
      %2541 = vxpose.xlu0.b32.cont [7/16] 0.0, 128
      %2542 = vxpose.xlu0.b32.cont [8/16] 0.0, 128
      %2543 = vxpose.xlu0.b32.cont [9/16] 0.0, 128
      %2544 = vxpose.xlu0.b32.cont [10/16] 0.0, 128
      %2545 = vxpose.xlu0.b32.cont [11/16] 0.0, 128
      %2546 = vxpose.xlu0.b32.cont [12/16] 0.0, 128
      %2547 = vxpose.xlu0.b32.cont [13/16] 0.0, 128
      %2548 = vxpose.xlu0.b32.cont [14/16] 0.0, 128
      %2549 = vxpose.xlu0.b32.cont [15/16] 0.0, 128
      %2550 = vxpose.xlu0.b32.end [16/16] 0.0, 128
      %v2551 = vpop.trf.xlu0
      %v2552 = vpop.trf.xlu0
      %v2553 = vpop.trf.xlu0
      %v2554 = vpop.trf.xlu0
      %v2555 = vpop.trf.xlu0
      %v2556 = vpop.trf.xlu0
      %v2557 = vpop.trf.xlu0
      %v2558 = vpop.trf.xlu0
      %v2559 = vpop.trf.xlu0
      %v2560 = vpop.trf.xlu0
      %v2561 = vpop.trf.xlu0
      %v2562 = vpop.trf.xlu0
      %v2563 = vpop.trf.xlu0
      %v2564 = vpop.trf.xlu0
      %v2565 = vpop.trf.xlu0
      %v2566 = vpop.trf.xlu0
      %2567 = vxpose.xlu0.b32.start [1/16] %v2529, 128
      %2568 = vxpose.xlu0.b32.cont [2/16] %v2532, 128
      %2569 = vxpose.xlu0.b32.cont [3/16] 0.0, 128
      %2570 = vxpose.xlu0.b32.cont [4/16] 0.0, 128
      %2571 = vxpose.xlu0.b32.cont [5/16] 0.0, 128
      %2572 = vxpose.xlu0.b32.cont [6/16] 0.0, 128
      %2573 = vxpose.xlu0.b32.cont [7/16] 0.0, 128
      %2574 = vxpose.xlu0.b32.cont [8/16] 0.0, 128
      %2575 = vxpose.xlu0.b32.cont [9/16] 0.0, 128
      %2576 = vxpose.xlu0.b32.cont [10/16] 0.0, 128
      %2577 = vxpose.xlu0.b32.cont [11/16] 0.0, 128
      %2578 = vxpose.xlu0.b32.cont [12/16] 0.0, 128
      %2579 = vxpose.xlu0.b32.cont [13/16] 0.0, 128
      %2580 = vxpose.xlu0.b32.cont [14/16] 0.0, 128
      %2581 = vxpose.xlu0.b32.cont [15/16] 0.0, 128
      %2582 = vxpose.xlu0.b32.end [16/16] 0.0, 128
      %v2583 = vpop.trf.xlu0
      %v2584 = vpop.trf.xlu0
      %v2585 = vpop.trf.xlu0
      %v2586 = vpop.trf.xlu0
      %v2587 = vpop.trf.xlu0
      %v2588 = vpop.trf.xlu0
      %v2589 = vpop.trf.xlu0
      %v2590 = vpop.trf.xlu0
      %v2591 = vpop.trf.xlu0
      %v2592 = vpop.trf.xlu0
      %v2593 = vpop.trf.xlu0
      %v2594 = vpop.trf.xlu0
      %v2595 = vpop.trf.xlu0
      %v2596 = vpop.trf.xlu0
      %v2597 = vpop.trf.xlu0
      %v2598 = vpop.trf.xlu0
      %v2600 = vunpack.c.l.s4 1983009808
      %v2601 = vunpack.c.0.s8 %v2600
      %v2602 = vlaneseq
      %v2603 = vshrl.u32 %v2602, 7
      %v2604 = vsub.s32 %v2601, %v2603
      %v2605 = vrot.slane %v2551, %v2604
      %v2607 = vunpack.c.l.s4 1983009808
      %v2608 = vunpack.c.0.s8 %v2607
      %v2609 = vlaneseq
      %v2610 = vshrl.u32 %v2609, 7
      %v2611 = vsub.s32 %v2608, %v2610
      %v2612 = vrot.slane %v2583, %v2611
      %v2613 = vcombine.low %v2605, %v2612
      %v2614 = vcombine.high %v2605, %v2612
      %v2616 = vunpack.c.l.s4 1934713408
      %v2617 = vunpack.c.0.s8 %v2616
      %v2618 = vlaneseq
      %v2619 = vshrl.u32 %v2618, 7
      %v2620 = vsub.s32 %v2617, %v2619
      %v2621 = vrot.slane %v2613, %v2620
      %v2623 = vunpack.c.l.s4 1934713408
      %v2624 = vunpack.c.0.s8 %v2623
      %v2625 = vlaneseq
      %v2626 = vshrl.u32 %v2625, 7
      %v2627 = vsub.s32 %v2624, %v2626
      %v2628 = vrot.slane %v2614, %v2627
      %v2629 = vcombine.high %v2621, 0.0
      %v2630 = vcombine.high %v2628, 0.0
      %v2631 = vcombine.low %v2621, %v2628
      %v2633 = vunpack.c.l.s4 1983009808
      %v2634 = vunpack.c.0.s8 %v2633
      %v2635 = vlaneseq
      %v2636 = vshrl.u32 %v2635, 7
      %v2637 = vsub.s32 %v2634, %v2636
      %v2638 = vrot.slane %v2631, %v2637
      %v2639 = vcombine.low %v2629, %v2630
      %v2641 = vunpack.c.l.s4 1983009808
      %v2642 = vunpack.c.0.s8 %v2641
      %v2643 = vlaneseq
      %v2644 = vshrl.u32 %v2643, 7
      %v2645 = vsub.s32 %v2642, %v2644
      %v2646 = vrot.slane %v2639, %v2645
      %v2647 = vcombine.low %v2638, %v2646
      %v2649 = vunpack.c.l.s4 1934713408
      %v2650 = vunpack.c.0.s8 %v2649
      %v2651 = vlaneseq
      %v2652 = vshrl.u32 %v2651, 7
      %v2653 = vsub.s32 %v2650, %v2652
      %v2654 = vrot.slane %v2647, %v2653
      %v2655 = vcombine.high %v2654, 0.0
      %2657 = vrot.lane.b32.xlu0 %v2655, 16
      %v2658 = vpop.permute.xlu0 %2657
      %v2660 = vsel %vm1756, %v2654, %v2658
      %v2661 = vpack.c.bf16 %v2660, %v2660
      %v2662 = vld [vmem:[%s787] sm:$0xf]
      %v2663 = vld [vmem:[%s787 + $0x4] sm:$0xf]
      %v2664 = vld [vmem:[%s787 + $0x8] sm:$0xf]
      %v2665 = vld [vmem:[%s787 + $0xc] sm:$0xf]
      %v2670 = vunpack.c.l.b16 %v2662
      %v2671 = vunpack.c.l.b16 %v2663
      %v2672 = vunpack.c.l.b16 %v2664
      %v2673 = vunpack.c.l.b16 %v2665
      %v2674 = vpack.c.b16 %v2671, %v2670
      %v2675 = vpack.c.b16 %v2673, %v2672
      %v2679 = vsel %vm877, %v2661, 0
      %2681 = vmatprep.subr.bf16.mxu0 0
      %2682 = vmatpush1.bf16.msra.mxu0 %v2674
      %2683 = vmatprep.subr.bf16.mxu0 0
      %2684 = vmatpush1.bf16.msra.mxu0 %v2675
      %2685 = vmatprep.subr.bf16.mxu0 0
      %2686 = vmatpush1.bf16.msra.mxu0 0
      %2687 = vmatprep.subr.bf16.mxu0 0
      %2688 = vmatpush1.bf16.msra.mxu0 0
      %2689 = vmatprep.subr.bf16.mxu0 0
      %2690 = vmatpush1.bf16.msra.mxu0 0
      %2691 = vmatprep.subr.bf16.mxu0 0
      %2692 = vmatpush1.bf16.msra.mxu0 0
      %2693 = vmatprep.subr.bf16.mxu0 0
      %2694 = vmatpush1.bf16.msra.mxu0 0
      %2695 = vmatprep.subr.bf16.mxu0 0
      %2696 = vmatpush1.bf16.msra.mxu0 0
      %2697 = vmatprep.subr.bf16.mxu0 0
      %2698 = vmatpush1.bf16.msra.mxu0 0
      %2699 = vmatprep.subr.bf16.mxu0 0
      %2700 = vmatpush1.bf16.msra.mxu0 0
      %2701 = vmatprep.subr.bf16.mxu0 0
      %2702 = vmatpush1.bf16.msra.mxu0 0
      %2703 = vmatprep.subr.bf16.mxu0 0
      %2704 = vmatpush1.bf16.msra.mxu0 0
      %2705 = vmatprep.subr.bf16.mxu0 0
      %2706 = vmatpush1.bf16.msra.mxu0 0
      %2707 = vmatprep.subr.bf16.mxu0 0
      %2708 = vmatpush1.bf16.msra.mxu0 0
      %2709 = vmatprep.subr.bf16.mxu0 0
      %2710 = vmatpush1.bf16.msra.mxu0 0
      %2711 = vmatprep.subr.bf16.mxu0 0
      %2712 = vmatpush1.bf16.msra.mxu0 0
      %2713 = vmatprep.mubr.bf16.mxu0 0
      %2714 = vmatmul.mubr.bf16.gmra.mrb[0].mxu0 %v2679
      %v2715 = vpop.f32.mrb[0].mxu0
      %v2716 = vadd.f32 0.0, %v2715
      %v2717 = vpop.f32.mrb[0].mxu0
      %v2718 = vpop.f32.mrb[0].mxu0
      %v2719 = vpop.f32.mrb[0].mxu0
      %2720 = vdwg.mxu0
      %v2721 = vadd.f32 %v822, %v2716
      %v2722 = vld [vmem:[%s790] sm:$0x1]
      %v2723 = vld [vmem:[%s793] sm:$0x1]
      %v2724 = vsel %vm831, %v2721, 0.0
      %2725 = vadd.xlane.f32.xlu0 %v2724
      %v2726 = vpop.xlane.xlu0 %2725
      %v2727 = vmul.f32 %v2726, %v835
      %v2728 = vsub.f32 %v2721, %v2727
      %v2729 = vmul.f32 %v2728, %v2728
      %v2730 = vsel %vm831, %v2729, 0.0
      %2731 = vadd.xlane.f32.xlu0 %v2730
      %v2732 = vpop.xlane.xlu0 %2731
      %v2733 = vmul.f32 %v2732, %v835
      %v2734 = vadd.f32 %v2733, 1e-05
      %v2735 = vrsqrt.pop %v2734
      %v2736 = vmul.f32 %v2728, %v2735
      %v2738 = vlaneseq
      %v2739 = vshrl.u32 %v2738, 7
      %v2740 = vsub.s32 0, %v2739
      %v2741 = vrot.slane %v2722, %v2740
      %v2743 = vmul.f32 %v2736, %v2741
      %v2745 = vlaneseq
      %v2746 = vshrl.u32 %v2745, 7
      %v2747 = vsub.s32 0, %v2746
      %v2748 = vrot.slane %v2723, %v2747
      %v2750 = vadd.f32 %v2743, %v2748
      %v2751 = vpack.c.bf16 %v2750, %v2750
      %v2752 = vld [vmem:[%s798] sm:$0xf]
      %v2753 = vld [vmem:[%s798 + $0x4] sm:$0xf]
      %v2754 = vld [vmem:[%s798 + $0x8] sm:$0xf]
      %v2755 = vld [vmem:[%s798 + $0xc] sm:$0xf]
      %v2756 = vld [vmem:[%s801] sm:$0x1]
      %v2758 = vlaneseq
      %v2759 = vshrl.u32 %v2758, 7
      %v2760 = vsub.s32 0, %v2759
      %v2761 = vrot.slane %v2756, %v2760
      %v2767 = vunpack.c.l.b16 %v2752
      %v2768 = vunpack.c.l.b16 %v2753
      %v2769 = vunpack.c.l.b16 %v2754
      %v2770 = vunpack.c.l.b16 %v2755
      %v2771 = vpack.c.b16 %v2768, %v2767
      %v2772 = vpack.c.b16 %v2770, %v2769
      %v2776 = vsel %vm877, %v2751, 0
      %2778 = vmatprep.subr.bf16.mxu0 0
      %2779 = vmatpush1.bf16.msra.mxu0 %v2771
      %2780 = vmatprep.subr.bf16.mxu0 0
      %2781 = vmatpush1.bf16.msra.mxu0 %v2772
      %2782 = vmatprep.subr.bf16.mxu0 0
      %2783 = vmatpush1.bf16.msra.mxu0 0
      %2784 = vmatprep.subr.bf16.mxu0 0
      %2785 = vmatpush1.bf16.msra.mxu0 0
      %2786 = vmatprep.subr.bf16.mxu0 0
      %2787 = vmatpush1.bf16.msra.mxu0 0
      %2788 = vmatprep.subr.bf16.mxu0 0
      %2789 = vmatpush1.bf16.msra.mxu0 0
      %2790 = vmatprep.subr.bf16.mxu0 0
      %2791 = vmatpush1.bf16.msra.mxu0 0
      %2792 = vmatprep.subr.bf16.mxu0 0
      %2793 = vmatpush1.bf16.msra.mxu0 0
      %2794 = vmatprep.subr.bf16.mxu0 0
      %2795 = vmatpush1.bf16.msra.mxu0 0
      %2796 = vmatprep.subr.bf16.mxu0 0
      %2797 = vmatpush1.bf16.msra.mxu0 0
      %2798 = vmatprep.subr.bf16.mxu0 0
      %2799 = vmatpush1.bf16.msra.mxu0 0
      %2800 = vmatprep.subr.bf16.mxu0 0
      %2801 = vmatpush1.bf16.msra.mxu0 0
      %2802 = vmatprep.subr.bf16.mxu0 0
      %2803 = vmatpush1.bf16.msra.mxu0 0
      %2804 = vmatprep.subr.bf16.mxu0 0
      %2805 = vmatpush1.bf16.msra.mxu0 0
      %2806 = vmatprep.subr.bf16.mxu0 0
      %2807 = vmatpush1.bf16.msra.mxu0 0
      %2808 = vmatprep.subr.bf16.mxu0 0
      %2809 = vmatpush1.bf16.msra.mxu0 0
      %2810 = vmatprep.mubr.bf16.mxu0 0
      %2811 = vmatmul.mubr.bf16.gmra.mrb[0].mxu0 %v2776
      %v2812 = vpop.f32.mrb[0].mxu0
      %v2813 = vadd.f32 %v2761, %v2812
      %v2814 = vpop.f32.mrb[0].mxu0
      %v2815 = vpop.f32.mrb[0].mxu0
      %v2816 = vpop.f32.mrb[0].mxu0
      %2817 = vdwg.mxu0
      %v2818 = vmul.f32 %v2813, %v2813
      %v2819 = vmul.f32 %v2813, %v2818
      %v2820 = vmul.f32 %v2819, 0.044715
      %v2821 = vadd.f32 %v2813, %v2820
      %v2822 = vmul.f32 %v2821, 0.7978846
      %v2823 = vtanh.pop %v2822
      %v2824 = vadd.f32 %v2823, 1.0
      %v2825 = vmul.f32 %v2824, 0.5
      %v2826 = vmul.f32 %v2813, %v2825
      %v2827 = vpack.c.bf16 %v2826, %v2826
      %v2828 = vld [vmem:[%s806] sm:$0xf]
      %v2829 = vld [vmem:[%s806 + $0x4] sm:$0xf]
      %v2830 = vld [vmem:[%s806 + $0x8] sm:$0xf]
      %v2831 = vld [vmem:[%s806 + $0xc] sm:$0xf]
      %v2832 = vld [vmem:[%s806 + $0x10] sm:$0xf]
      %v2833 = vld [vmem:[%s806 + $0x14] sm:$0xf]
      %v2834 = vld [vmem:[%s806 + $0x18] sm:$0xf]
      %v2835 = vld [vmem:[%s806 + $0x1c] sm:$0xf]
      %v2836 = vld [vmem:[%s806 + $0x20] sm:$0xf]
      %v2837 = vld [vmem:[%s806 + $0x24] sm:$0xf]
      %v2838 = vld [vmem:[%s806 + $0x28] sm:$0xf]
      %v2839 = vld [vmem:[%s806 + $0x2c] sm:$0xf]
      %v2840 = vld [vmem:[%s806 + $0x30] sm:$0xf]
      %v2841 = vld [vmem:[%s806 + $0x34] sm:$0xf]
      %v2842 = vld [vmem:[%s806 + $0x38] sm:$0xf]
      %v2843 = vld [vmem:[%s806 + $0x3c] sm:$0xf]
      %v2844 = vld [vmem:[%s809] sm:$0x1]
      %v2846 = vlaneseq
      %v2847 = vshrl.u32 %v2846, 7
      %v2848 = vsub.s32 0, %v2847
      %v2849 = vrot.slane %v2844, %v2848
      %v2867 = vunpack.c.l.b16 %v2828
      %v2868 = vunpack.c.l.b16 %v2829
      %v2869 = vunpack.c.l.b16 %v2830
      %v2870 = vunpack.c.l.b16 %v2831
      %v2871 = vunpack.c.l.b16 %v2832
      %v2872 = vunpack.c.l.b16 %v2833
      %v2873 = vunpack.c.l.b16 %v2834
      %v2874 = vunpack.c.l.b16 %v2835
      %v2875 = vunpack.c.l.b16 %v2836
      %v2876 = vunpack.c.l.b16 %v2837
      %v2877 = vunpack.c.l.b16 %v2838
      %v2878 = vunpack.c.l.b16 %v2839
      %v2879 = vunpack.c.l.b16 %v2840
      %v2880 = vunpack.c.l.b16 %v2841
      %v2881 = vunpack.c.l.b16 %v2842
      %v2882 = vunpack.c.l.b16 %v2843
      %v2883 = vpack.c.b16 %v2868, %v2867
      %v2884 = vpack.c.b16 %v2870, %v2869
      %v2885 = vpack.c.b16 %v2872, %v2871
      %v2886 = vpack.c.b16 %v2874, %v2873
      %v2887 = vpack.c.b16 %v2876, %v2875
      %v2888 = vpack.c.b16 %v2878, %v2877
      %v2889 = vpack.c.b16 %v2880, %v2879
      %v2890 = vpack.c.b16 %v2882, %v2881
      %2899 = vmatprep.subr.bf16.mxu0 0
      %2900 = vmatpush1.bf16.msra.mxu0 %v2883
      %2901 = vmatprep.subr.bf16.mxu0 0
      %2902 = vmatpush1.bf16.msra.mxu0 %v2884
      %2903 = vmatprep.subr.bf16.mxu0 0
      %2904 = vmatpush1.bf16.msra.mxu0 %v2885
      %2905 = vmatprep.subr.bf16.mxu0 0
      %2906 = vmatpush1.bf16.msra.mxu0 %v2886
      %2907 = vmatprep.subr.bf16.mxu0 0
      %2908 = vmatpush1.bf16.msra.mxu0 %v2887
      %2909 = vmatprep.subr.bf16.mxu0 0
      %2910 = vmatpush1.bf16.msra.mxu0 %v2888
      %2911 = vmatprep.subr.bf16.mxu0 0
      %2912 = vmatpush1.bf16.msra.mxu0 %v2889
      %2913 = vmatprep.subr.bf16.mxu0 0
      %2914 = vmatpush1.bf16.msra.mxu0 %v2890
      %2915 = vmatprep.subr.bf16.mxu0 0
      %2916 = vmatpush1.bf16.msra.mxu0 0
      %2917 = vmatprep.subr.bf16.mxu0 0
      %2918 = vmatpush1.bf16.msra.mxu0 0
      %2919 = vmatprep.subr.bf16.mxu0 0
      %2920 = vmatpush1.bf16.msra.mxu0 0
      %2921 = vmatprep.subr.bf16.mxu0 0
      %2922 = vmatpush1.bf16.msra.mxu0 0
      %2923 = vmatprep.subr.bf16.mxu0 0
      %2924 = vmatpush1.bf16.msra.mxu0 0
      %2925 = vmatprep.subr.bf16.mxu0 0
      %2926 = vmatpush1.bf16.msra.mxu0 0
      %2927 = vmatprep.subr.bf16.mxu0 0
      %2928 = vmatpush1.bf16.msra.mxu0 0
      %2929 = vmatprep.subr.bf16.mxu0 0
      %2930 = vmatpush1.bf16.msra.mxu0 0
      %2931 = vmatprep.mubr.bf16.mxu0 0
      %2932 = vmatmul.mubr.bf16.gmra.mrb[0].mxu0 %v2827
      %v2933 = vpop.f32.mrb[0].mxu0
      %v2934 = vadd.f32 %v2849, %v2933
      %v2935 = vpop.f32.mrb[0].mxu0
      %v2936 = vpop.f32.mrb[0].mxu0
      %v2937 = vpop.f32.mrb[0].mxu0
      %2938 = vdwg.mxu0
      %v2939 = vadd.f32 %v2721, %v2934
      %2940 = vst.msk [vmem:[#allocation2] sm:$0xf] %vm831, %v2939
      %p2941 = scmp.eq.s32.totalorder %s35, 1
      // Predicated region
      $region101: #{hivemind_swarm_forward.1} parent=95 // pred_check
        %p2942 = pneg %p2941
      $region102: #{hivemind_swarm_forward.1} parent=95 // pred_check_branch
        %2944 = sbr.rel (%p2942) target = $region104
      $region103: #{hivemind_swarm_forward.1} parent=95 // pred_region
        %v2945 = vld [vmem:[%s13] sm:$0x1]
        %v2946 = vld [vmem:[%s14] sm:$0x1]
        %v2947 = vsel %vm831, %v2939, 0.0
        %2948 = vadd.xlane.f32.xlu0 %v2947
        %v2949 = vpop.xlane.xlu0 %2948
        %v2950 = vmul.f32 %v2949, %v835
        %v2951 = vsub.f32 %v2939, %v2950
        %v2952 = vmul.f32 %v2951, %v2951
        %v2953 = vsel %vm831, %v2952, 0.0
        %2954 = vadd.xlane.f32.xlu0 %v2953
        %v2955 = vpop.xlane.xlu0 %2954
        %v2956 = vmul.f32 %v2955, %v835
        %v2957 = vadd.f32 %v2956, 1e-05
        %v2958 = vrsqrt.pop %v2957
        %v2959 = vmul.f32 %v2951, %v2958
        %v2961 = vlaneseq
        %v2962 = vshrl.u32 %v2961, 7
        %v2963 = vsub.s32 0, %v2962
        %v2964 = vrot.slane %v2945, %v2963
        %v2966 = vmul.f32 %v2959, %v2964
        %v2968 = vlaneseq
        %v2969 = vshrl.u32 %v2968, 7
        %v2970 = vsub.s32 0, %v2969
        %v2971 = vrot.slane %v2946, %v2970
        %v2973 = vadd.f32 %v2966, %v2971
        %v2974 = vpack.c.bf16 %v2973, %v2973
        %v2975 = vld [vmem:[%s15] sm:$0xf]
        %v2976 = vld [vmem:[%s15 + $0x4] sm:$0xf]
        %v2977 = vld [vmem:[%s15 + $0x8] sm:$0xf]
        %v2978 = vld [vmem:[%s15 + $0xc] sm:$0xf]
        %v2983 = vunpack.c.l.b16 %v2975
        %v2984 = vunpack.c.l.b16 %v2976
        %v2985 = vunpack.c.l.b16 %v2977
        %v2986 = vunpack.c.l.b16 %v2978
        %v2987 = vpack.c.b16 %v2984, %v2983
        %v2988 = vpack.c.b16 %v2986, %v2985
        %v2992 = vsel %vm877, %v2974, 0
        %2994 = vmatprep.subr.bf16.mxu0 0
        %2995 = vmatpush1.bf16.msra.mxu0 %v2987
        %2996 = vmatprep.subr.bf16.mxu0 0
        %2997 = vmatpush1.bf16.msra.mxu0 %v2988
        %2998 = vmatprep.subr.bf16.mxu0 0
        %2999 = vmatpush1.bf16.msra.mxu0 0
        %3000 = vmatprep.subr.bf16.mxu0 0
        %3001 = vmatpush1.bf16.msra.mxu0 0
        %3002 = vmatprep.subr.bf16.mxu0 0
        %3003 = vmatpush1.bf16.msra.mxu0 0
        %3004 = vmatprep.subr.bf16.mxu0 0
        %3005 = vmatpush1.bf16.msra.mxu0 0
        %3006 = vmatprep.subr.bf16.mxu0 0
        %3007 = vmatpush1.bf16.msra.mxu0 0
        %3008 = vmatprep.subr.bf16.mxu0 0
        %3009 = vmatpush1.bf16.msra.mxu0 0
        %3010 = vmatprep.subr.bf16.mxu0 0
        %3011 = vmatpush1.bf16.msra.mxu0 0
        %3012 = vmatprep.subr.bf16.mxu0 0
        %3013 = vmatpush1.bf16.msra.mxu0 0
        %3014 = vmatprep.subr.bf16.mxu0 0
        %3015 = vmatpush1.bf16.msra.mxu0 0
        %3016 = vmatprep.subr.bf16.mxu0 0
        %3017 = vmatpush1.bf16.msra.mxu0 0
        %3018 = vmatprep.subr.bf16.mxu0 0
        %3019 = vmatpush1.bf16.msra.mxu0 0
        %3020 = vmatprep.subr.bf16.mxu0 0
        %3021 = vmatpush1.bf16.msra.mxu0 0
        %3022 = vmatprep.subr.bf16.mxu0 0
        %3023 = vmatpush1.bf16.msra.mxu0 0
        %3024 = vmatprep.subr.bf16.mxu0 0
        %3025 = vmatpush1.bf16.msra.mxu0 0
        %3026 = vmatprep.mubr.bf16.mxu0 0
        %3027 = vmatmul.mubr.bf16.gmra.mrb[0].mxu0 %v2992
        %v3028 = vpop.f32.mrb[0].mxu0
        %v3029 = vadd.f32 0.0, %v3028
        %v3030 = vpop.f32.mrb[0].mxu0
        %v3031 = vpop.f32.mrb[0].mxu0
        %v3032 = vpop.f32.mrb[0].mxu0
        %3033 = vdwg.mxu0
        %v3034 = vpack.c.bf16 %v3029, %v3029
        %v3035 = vld [vmem:[%s16] sm:$0x3]
        %v3036 = vld [vmem:[%s17] sm:$0x1]
        %v3038 = vlaneseq
        %v3039 = vshrl.u32 %v3038, 7
        %v3040 = vsub.s32 0, %v3039
        %v3041 = vrot.slane %v3036, %v3040
        %v3044 = vsel %vm2440, %v3034, 0
        %vm3046 = vcmask 1041408
        %v3048 = vsel %vm3046, %v3035, 0
        %3050 = vmatprep.subr.bf16.mxu0 0
        %3051 = vmatpush1.bf16.msra.mxu0 %v3048
        %3052 = vmatprep.subr.bf16.mxu0 0
        %3053 = vmatpush1.bf16.msra.mxu0 0
        %3054 = vmatprep.subr.bf16.mxu0 0
        %3055 = vmatpush1.bf16.msra.mxu0 0
        %3056 = vmatprep.subr.bf16.mxu0 0
        %3057 = vmatpush1.bf16.msra.mxu0 0
        %3058 = vmatprep.subr.bf16.mxu0 0
        %3059 = vmatpush1.bf16.msra.mxu0 0
        %3060 = vmatprep.subr.bf16.mxu0 0
        %3061 = vmatpush1.bf16.msra.mxu0 0
        %3062 = vmatprep.subr.bf16.mxu0 0
        %3063 = vmatpush1.bf16.msra.mxu0 0
        %3064 = vmatprep.subr.bf16.mxu0 0
        %3065 = vmatpush1.bf16.msra.mxu0 0
        %3066 = vmatprep.subr.bf16.mxu0 0
        %3067 = vmatpush1.bf16.msra.mxu0 0
        %3068 = vmatprep.subr.bf16.mxu0 0
        %3069 = vmatpush1.bf16.msra.mxu0 0
        %3070 = vmatprep.subr.bf16.mxu0 0
        %3071 = vmatpush1.bf16.msra.mxu0 0
        %3072 = vmatprep.subr.bf16.mxu0 0
        %3073 = vmatpush1.bf16.msra.mxu0 0
        %3074 = vmatprep.subr.bf16.mxu0 0
        %3075 = vmatpush1.bf16.msra.mxu0 0
        %3076 = vmatprep.subr.bf16.mxu0 0
        %3077 = vmatpush1.bf16.msra.mxu0 0
        %3078 = vmatprep.subr.bf16.mxu0 0
        %3079 = vmatpush1.bf16.msra.mxu0 0
        %3080 = vmatprep.subr.bf16.mxu0 0
        %3081 = vmatpush1.bf16.msra.mxu0 0
        %3082 = vmatprep.mubr.bf16.mxu0 0
        %3083 = vmatmul.mubr.bf16.gmra.mrb[0].mxu0 %v3044
        %v3084 = vpop.f32.mrb[0].mxu0
        %v3085 = vadd.f32 %v3041, %v3084
        %v3086 = vpop.f32.mrb[0].mxu0
        %v3087 = vpop.f32.mrb[0].mxu0
        %v3088 = vpop.f32.mrb[0].mxu0
        %3089 = vdwg.mxu0
        %v3090 = vld [vmem:[%s18] sm:$0x1]
        %v3092 = vlaneseq
        %v3093 = vshrl.u32 %v3092, 7
        %v3094 = vsub.s32 0, %v3093
        %v3095 = vrot.slane %v3090, %v3094
        %v3097 = vadd.f32 %v3085, %v3095
        %v3098 = vsel %vm1843, %v3097, -inf
        %3099 = vmax.xlane.f32.xlu0 %v3098
        %v3100 = vpop.xlane.xlu0 %3099
        %v3101 = vsub.f32 %v3097, %v3100
        %v3102 = vmul.f32 %v3101, 1.442695
        %v3103 = vpow.pop %v3102
        %v3104 = vsel %vm1843, %v3103, 0.0
        %3105 = vadd.xlane.f32.xlu0 %v3104
        %v3106 = vpop.xlane.xlu0 %3105
        %v3107 = vrcp.pop %v3106
        %v3108 = vmul.f32 %v3103, %v3107
        %v3109 = vlaneseq
        %v3110 = vshrl.u32 %v3109, 7
        %v3111 = vsub.s32 0, %v3110
        %v3112 = vrot.slane %v3108, %v3111
        %3114 = vbcast.lane.b32.xlu0 %v3112, 256
        %v3115 = vpop.permute.xlu0 %3114
        %v3116 = vlaneseq
        %v3117 = vshrl.u32 %v3116, 7
        %v3118 = vsub.s32 1, %v3117
        %v3119 = vrot.slane %v3108, %v3118
        %3121 = vbcast.lane.b32.xlu0 %v3119, 256
        %v3122 = vpop.permute.xlu0 %3121
        %v3123 = vlaneseq
        %v3124 = vshrl.u32 %v3123, 7
        %v3125 = vsub.s32 2, %v3124
        %v3126 = vrot.slane %v3108, %v3125
        %3128 = vbcast.lane.b32.xlu0 %v3126, 256
        %v3129 = vpop.permute.xlu0 %3128
        %v3130 = vlaneseq
        %v3131 = vshrl.u32 %v3130, 7
        %v3132 = vsub.s32 3, %v3131
        %v3133 = vrot.slane %v3108, %v3132
        %3135 = vbcast.lane.b32.xlu0 %v3133, 256
        %v3136 = vpop.permute.xlu0 %3135
        %v3137 = vmul.f32 %v3115, %v3029
        %v3138 = vmul.f32 %v3122, %v3029
        %v3139 = vmul.f32 %v3129, %v3029
        %v3140 = vmul.f32 %v3136, %v3029
        %v3141 = vmul.f32 %v3137, 4.0
        %v3142 = vmul.f32 %v3138, 4.0
        %v3143 = vmul.f32 %v3139, 4.0
        %v3144 = vmul.f32 %v3140, 4.0
        %v3145 = vcombine.low %v3141, %v3143
        %v3147 = vunpack.c.l.s4 1983009808
        %v3148 = vunpack.c.0.s8 %v3147
        %v3149 = vlaneseq
        %v3150 = vshrl.u32 %v3149, 7
        %v3151 = vsub.s32 %v3148, %v3150
        %v3152 = vrot.slane %v3145, %v3151
        %v3153 = vcombine.low %v3142, %v3144
        %v3155 = vunpack.c.l.s4 1983009808
        %v3156 = vunpack.c.0.s8 %v3155
        %v3157 = vlaneseq
        %v3158 = vshrl.u32 %v3157, 7
        %v3159 = vsub.s32 %v3156, %v3158
        %v3160 = vrot.slane %v3153, %v3159
        %v3161 = vcombine.low %v3152, %v3160
        %v3162 = vcombine.high %v3152, %v3160
        %v3164 = vunpack.c.l.s4 1934713408
        %v3165 = vunpack.c.0.s8 %v3164
        %v3166 = vlaneseq
        %v3167 = vshrl.u32 %v3166, 7
        %v3168 = vsub.s32 %v3165, %v3167
        %v3169 = vrot.slane %v3161, %v3168
        %v3171 = vunpack.c.l.s4 1934713408
        %v3172 = vunpack.c.0.s8 %v3171
        %v3173 = vlaneseq
        %v3174 = vshrl.u32 %v3173, 7
        %v3175 = vsub.s32 %v3172, %v3174
        %v3176 = vrot.slane %v3162, %v3175
        %v3177 = vcombine.high %v3169, 0.0
        %v3178 = vcombine.high %v3176, 0.0
        %3180 = vrot.lane.b32.xlu0 %v3177, 4
        %v3181 = vpop.permute.xlu0 %3180
        %3184 = vrot.lane.b32.xlu0 %v3176, 8
        %v3185 = vpop.permute.xlu0 %3184
        %3188 = vrot.lane.b32.xlu0 %v3178, 12
        %v3189 = vpop.permute.xlu0 %3188
        %v3191 = vsel %vm2440, %v3169, %v3181
        %vm3192 = vcmask 64512
        %v3193 = vsel %vm3192, %v3191, %v3185
        %vm3194 = vcmask 97280
        %v3195 = vsel %vm3194, %v3193, %v3189
        %vm3196 = vcmask 125952
        %3197 = vst.msk [vmem:[%s813] sm:$0xf] %vm3196, %v3195
      $region104: #{hivemind_swarm_forward.1} parent=95 // pred_fallthru
        _
      %p3198 = scmp.lt.s32.totalorder %s34, 0
      %s3199 = scalar_select %p3198, %s34, 0
      %s3200 = smul.addr %s3199, 4
      %s3201 = scalar_lea.vmem %s19, %s3200
      // Predicated region
      $region105: #{hivemind_swarm_forward.1} parent=95 // pred_check
        %p3202 = pneg %p524
      $region106: #{hivemind_swarm_forward.1} parent=95 // pred_check_branch
        %3204 = sbr.rel (%p3202) target = $region108
      $region107: #{hivemind_swarm_forward.1} parent=95 // pred_region
        _
      $region108: #{hivemind_swarm_forward.1} parent=95 // pred_fallthru
        _
      // Predicated region
      $region109: #{hivemind_swarm_forward.1} parent=95 // pred_check
        %p3205 = pneg %p524
      $region110: #{hivemind_swarm_forward.1} parent=95 // pred_check_branch
        %3207 = sbr.rel (%p3205) target = $region112
      $region111: #{hivemind_swarm_forward.1} parent=95 // pred_region
        %p3208 = scmp.lt.s32.totalorder %s34, 0
        %s3209 = scalar_select %p3208, %s34, 0
        %s3210 = smul.addr %s3209, 4
        %s3211 = scalar_lea.vmem %s19, %s3210
      $region112: #{hivemind_swarm_forward.1} parent=95 // pred_fallthru
        _
    $region96: #{hivemind_swarm_forward.1} parent=5 // pred_fallthru
      _
    %p3212 = scmp.le.s32.totalorder 2, %s25
    // Predicated region
    $region113: #{hivemind_swarm_forward.1} parent=5 // pred_check
      %p3213 = pneg %p3212
    $region114: #{hivemind_swarm_forward.1} parent=5 // pred_check_branch
      %3215 = sbr.rel (%p3213) target = $region116
    $region115: #{hivemind_swarm_forward.1} parent=5 // pred_region
      %s3216 = ssub.s32 %s25, 2
    $region116: #{hivemind_swarm_forward.1} parent=5 // pred_fallthru
      _
  $region6: #{hivemind_swarm_forward.1} parent=0 // loop_footer
    %s29 = sadd.s32 1, %s25
  $region7: #{hivemind_swarm_forward.1} parent=0 // loop_footer_branch
    %24 = sbr.rel target = $region3
  $region8: #{hivemind_swarm_forward.1} parent=0 // loop_exit
    _

</llo_original>
